<compile_context>
chip_gen: v5e
topology: v5e:2x2
jax: 0.10.0
libtpu: 0.0.40
codegen_flags: <defaults>
</compile_context>

<pallas_src>
import jax
import jax.numpy as jnp
from jax import lax
from jax.experimental import pallas as pl
from jax.experimental.pallas import tpu as pltpu

# ----------------------------- config ---------------------------------------
BATCH = 8
Z_DIM = 8
HID_FEATURES = 64
HID_CHANNELS = 32
OUT_CHANNELS = 1
N_STEPS = 16
N_PITCHES = 84
EPS = 1e-5
H0 = HID_FEATURES // HID_CHANNELS  # initial spatial height after Reshape (=2)

# (out_channels, kh, kw) for the four ConvTranspose+BN+ReLU blocks
BLOCK_CFG = [
    (HID_CHANNELS, 2, 1),
    (HID_CHANNELS // 2, 2, 1),
    (HID_CHANNELS // 2, 2, 1),
    (HID_CHANNELS // 2, 1, 7),
]
FINAL_CFG = (OUT_CHANNELS, 1, 12)


# ----------------------------- fused kernel ----------------------------------
def _fused_bar_generator_kernel(
    x_ref, wl_ref, g0_ref, b0_ref,
    w1_ref, g1_ref, b1_ref,
    w2_ref, g2_ref, b2_ref,
    w3_ref, g3_ref, b3_ref,
    w4_ref, g4_ref, b4_ref,
    w5_ref, b5_ref,
    o_ref,
    t1, t2, t3, t4, t5,
):
    f32 = jnp.float32
    n = x_ref.shape[0]

    def bn_relu(x, g, b):
        # Training-mode BatchNorm (batch stats, biased variance, eps=1e-5) + ReLU.
        # One pass over x: var = E[x^2] - mu^2; fused per-column scale/shift.
        inv = 1.0 / x.shape[0]
        mu = jnp.sum(x, axis=0, keepdims=True) * inv
        ex2 = jnp.sum(x * x, axis=0, keepdims=True) * inv
        var = ex2 - mu * mu
        scale = g * lax.rsqrt(var + EPS)          # rsqrt -> EUP (free slot)
        shift = b - mu * scale
        return jnp.maximum(x * scale + shift, 0.0)

    # Linear (bias dropped: cancelled by the following BatchNorm) + BN1d + ReLU.
    # wl columns are pre-permuted host-side to (h2, channel) order.
    h = jnp.dot(x_ref[...], wl_ref[...], preferred_element_type=f32)  # (n, 64)
    h = bn_relu(h, g0_ref[...], b0_ref[...])

    # Reshape([hid_channels, 2, 1]) -> token rows, row order (h2, n), 32 channels.
    t1[pl.ds(0, n), :] = h[:, 0:HID_CHANNELS]
    t1[pl.ds(n, n), :] = h[:, HID_CHANNELS:2 * HID_CHANNELS]
    act = t1[...]

    def convt_bn_relu(act, w_ref, g_ref, b_ref, t_ref, kk, cout):
        # ConvTranspose2d (stride == kernel, pad 0): one matmul whose
        # (kernel-position, cout)-ordered column blocks become new token rows.
        rows = act.shape[0]
        y = jnp.dot(act, w_ref[...], preferred_element_type=f32)  # (rows, kk*cout)
        for k in range(kk):  # static unroll (kk in {2, 7}); 8-aligned row blocks
            t_ref[pl.ds(k * rows, rows), :] = y[:, k * cout:(k + 1) * cout]
        return bn_relu(t_ref[...], g_ref[...], b_ref[...])

    act = convt_bn_relu(act, w1_ref, g1_ref, b1_ref, t2, 2, HID_CHANNELS)       # (4n, 32)
    act = convt_bn_relu(act, w2_ref, g2_ref, b2_ref, t3, 2, HID_CHANNELS // 2)  # (8n, 16)
    act = convt_bn_relu(act, w3_ref, g3_ref, b3_ref, t4, 2, HID_CHANNELS // 2)  # (16n, 16)
    act = convt_bn_relu(act, w4_ref, g4_ref, b4_ref, t5, 7, HID_CHANNELS // 2)  # (112n, 16)

    # Final ConvTranspose2d (1, 12): bias kept (no BatchNorm afterwards).
    o_ref[...] = jnp.dot(act, w5_ref[...], preferred_element_type=f32) + b5_ref[...]


def bar_generator_forward_pallas(x, kp):
    """x: (N, 4*z_dimension) -> (N, 1, 1, n_steps_per_bar, n_pitches)."""
    n = x.shape[0]
    hc, hc2 = HID_CHANNELS, HID_CHANNELS // 2
    out_rows = 112 * n  # token rows in deferred order (w, k3, k2, k1, h2, n)

    args = (x, kp["wl"], kp["g0"], kp["b0"],
            kp["w1"], kp["g1"], kp["b1"],
            kp["w2"], kp["g2"], kp["b2"],
            kp["w3"], kp["g3"], kp["b3"],
            kp["w4"], kp["g4"], kp["b4"],
            kp["w5"], kp["b5"])

    flops = 2 * n * (4 * Z_DIM * HID_FEATURES        # linear
                     + 2 * hc * (2 * hc)             # block 1
                     + 4 * hc * (2 * hc2)            # block 2
                     + 8 * hc2 * (2 * hc2)           # block 3
                     + 16 * hc2 * (7 * hc2)          # block 4
                     + 112 * hc2 * 12)               # final conv
    bytes_accessed = sum(int(a.size) * 4 for a in args) + out_rows * 12 * 4
    transcendentals = HID_FEATURES + hc + 3 * hc2    # one rsqrt per BN column

    vm = pl.BlockSpec(memory_space=pltpu.MemorySpace.VMEM)
    y = pl.pallas_call(
        _fused_bar_generator_kernel,
        out_shape=jax.ShapeDtypeStruct((out_rows, 12), jnp.float32),
        in_specs=[vm] * len(args),
        out_specs=vm,
        scratch_shapes=[
            pltpu.VMEM((2 * n, hc), jnp.float32),     # t1 tokens (h2, n)
            pltpu.VMEM((4 * n, hc), jnp.float32),     # t2 tokens (k1, h2, n)
            pltpu.VMEM((8 * n, hc2), jnp.float32),    # t3 tokens (k2, k1, h2, n)
            pltpu.VMEM((16 * n, hc2), jnp.float32),   # t4 tokens (k3, ..., n)
            pltpu.VMEM((112 * n, hc2), jnp.float32),  # t5 tokens (w, k3, ..., n)
        ],
        cost_estimate=pl.CostEstimate(
            flops=int(flops), transcendentals=int(transcendentals),
            bytes_accessed=int(bytes_accessed)),
    )(*args)

    # Undo the deferred token permutation (one tiny XLA transpose on the output):
    # rows = (w, k3, k2, k1, h2, n), cols = kw;
    # step = 8*h2 + 4*k1 + 2*k2 + k3, pitch = 12*w + kw.
    y = y.reshape(7, 2, 2, 2, 2, n, 12)
    y = y.transpose(5, 4, 3, 2, 1, 0, 6)
    return y.reshape(n, 1, 1, N_STEPS, N_PITCHES)


# ----------------------------- parameters ------------------------------------
def init_params(key):
    """Canonical (PyTorch-layout) parameters."""
    params = {}
    keys = jax.random.split(key, 24)
    ki = iter(range(24))

    def nrm(k_, shape, scale=0.1):
        return scale * jax.random.normal(k_, shape, dtype=jnp.float32)

    params["lin_w"] = nrm(keys[next(ki)], (4 * Z_DIM, HID_FEATURES))  # (in, out)
    params["lin_b"] = nrm(keys[next(ki)], (HID_FEATURES,))
    params["bn0_g"] = 1.0 + nrm(keys[next(ki)], (HID_FEATURES,))
    params["bn0_b"] = nrm(keys[next(ki)], (HID_FEATURES,))

    cin = HID_CHANNELS
    for i, (cout, kh, kw) in enumerate(BLOCK_CFG):
        params[f"ct{i}_w"] = nrm(keys[next(ki)], (cin, cout, kh, kw))  # PyTorch layout
        params[f"ct{i}_b"] = nrm(keys[next(ki)], (cout,))
        params[f"ctbn{i}_g"] = 1.0 + nrm(keys[next(ki)], (cout,))
        params[f"ctbn{i}_b"] = nrm(keys[next(ki)], (cout,))
        cin = cout

    cout, kh, kw = FINAL_CFG
    params["out_w"] = nrm(keys[next(ki)], (cin, cout, kh, kw))
    params["out_b"] = nrm(keys[next(ki)], (cout,))
    return params


def prepare_kernel_params(params):
    """Repack canonical params into the fused-kernel layout (host-side, once)."""
    kp = {}
    # Linear: permute output features from (c, h2) to (h2, c) order so the NCHW
    # Reshape becomes two contiguous column slices.  Linear bias is dropped:
    # it is cancelled exactly by the following BatchNorm's mean subtraction.
    perm = (jnp.arange(HID_CHANNELS)[None, :] * H0
            + jnp.arange(H0)[:, None]).reshape(-1)
    kp["wl"] = params["lin_w"][:, perm]
    kp["g0"] = params["bn0_g"][perm].reshape(1, -1)
    kp["b0"] = params["bn0_b"][perm].reshape(1, -1)

    cin = HID_CHANNELS
    for i, (cout, kh, kw) in enumerate(BLOCK_CFG):
        w = params[f"ct{i}_w"]  # (cin, cout, kh, kw)
        # Columns ordered (kernel-position, cout): each kernel position's block
        # of `cout` columns becomes one row-block of the next token matrix.
        kp[f"w{i + 1}"] = w.transpose(0, 2, 3, 1).reshape(cin, kh * kw * cout)
        # ConvT bias dropped: cancelled exactly by the following BatchNorm.
        kp[f"g{i + 1}"] = params[f"ctbn{i}_g"].reshape(1, -1)
        kp[f"b{i + 1}"] = params[f"ctbn{i}_b"].reshape(1, -1)
        cin = cout

    cout, kh, kw = FINAL_CFG
    kp["w5"] = params["out_w"].reshape(cin, cout * kh * kw)  # (16, 12), cols = kw
    kp["b5"] = jnp.broadcast_to(params["out_b"].reshape(1, 1),
                                (1, cout * kh * kw)).astype(jnp.float32)
    return kp


# ----------------------------- pure-JAX reference -----------------------------
def convT_expand(y, n, h, w, cout, kh, kw):
    """Matmul output (N*H*W, Cout*kh*kw) -> NHWC (N, H*kh, W*kw, Cout); valid
    because stride == kernel and padding == 0 (disjoint output blocks)."""
    y = y.reshape(n, h, w, cout, kh, kw)
    y = y.transpose(0, 1, 4, 2, 5, 3)
    return y.reshape(n, h * kh, w * kw, cout)


def bar_generator_forward_reference(x, params):
    """Full PyTorch-module math (all biases kept, two-pass BN statistics)."""

    def bnr(a, g, bt):
        mu = jnp.mean(a, axis=0, keepdims=True)
        var = jnp.mean(jnp.square(a - mu), axis=0, keepdims=True)
        return jnp.maximum(
            (a - mu) * lax.rsqrt(var + EPS) * g[None, :] + bt[None, :], 0.0)

    n = x.shape[0]
    h = jnp.dot(x, params["lin_w"],
                preferred_element_type=jnp.float32) + params["lin_b"][None, :]
    h = bnr(h, params["bn0_g"], params["bn0_b"])

    H, W = H0, 1
    tok = h.reshape(n, HID_CHANNELS, H, W).transpose(0, 2, 3, 1)
    tok = tok.reshape(n * H * W, HID_CHANNELS)

    cin = HID_CHANNELS
    for i, (cout, kh, kw) in enumerate(BLOCK_CFG):
        wm = params[f"ct{i}_w"].reshape(cin, cout * kh * kw)
        bm = jnp.repeat(params[f"ct{i}_b"], kh * kw)
        y = jnp.dot(tok, wm, preferred_element_type=jnp.float32) + bm[None, :]
        nhwc = convT_expand(y, n, H, W, cout, kh, kw)
        H, W = H * kh, W * kw
        tok = bnr(nhwc.reshape(n * H * W, cout),
                  params[f"ctbn{i}_g"], params[f"ctbn{i}_b"])
        cin = cout

    cout, kh, kw = FINAL_CFG
    wm = params["out_w"].reshape(cin, cout * kh * kw)
    bm = jnp.repeat(params["out_b"], kh * kw)
    y = jnp.dot(tok, wm, preferred_element_type=jnp.float32) + bm[None, :]
    nhwc = convT_expand(y, n, H, W, cout, kh, kw)
    out_nchw = nhwc.transpose(0, 3, 1, 2)
    return out_nchw.reshape(n, 1, 1, N_STEPS, N_PITCHES)


# ----------------------------- main ------------------------------------------
if __name__ == "__main__":
    x = jax.random.normal(jax.random.PRNGKey(0), (BATCH, 4 * Z_DIM),
                          dtype=jnp.float32)
    params = init_params(jax.random.PRNGKey(42))
    kparams = prepare_kernel_params(params)

    fwd = jax.jit(lambda a: bar_generator_forward_pallas(a, kparams))
    out = jax.block_until_ready(fwd(x))
    assert out.shape == (BATCH, 1, 1, N_STEPS, N_PITCHES), out.shape

    ref = jax.block_until_ready(
        jax.jit(lambda a: bar_generator_forward_reference(a, params))(x))
    max_err = float(jnp.max(jnp.abs(out - ref)))
    assert jnp.allclose(out, ref, atol=5e-3, rtol=5e-3), max_err

    print("KERNEL_OK")
</pallas_src>

<mosaic_0001>
module attributes {stable_mosaic.version = 11 : i64} {
  func.func @_fused_bar_generator_kernel(%arg0: memref<8x32xf32, #tpu.memory_space<vmem>>, %arg1: memref<32x64xf32, #tpu.memory_space<vmem>>, %arg2: memref<1x64xf32, #tpu.memory_space<vmem>>, %arg3: memref<1x64xf32, #tpu.memory_space<vmem>>, %arg4: memref<32x64xf32, #tpu.memory_space<vmem>>, %arg5: memref<1x32xf32, #tpu.memory_space<vmem>>, %arg6: memref<1x32xf32, #tpu.memory_space<vmem>>, %arg7: memref<32x32xf32, #tpu.memory_space<vmem>>, %arg8: memref<1x16xf32, #tpu.memory_space<vmem>>, %arg9: memref<1x16xf32, #tpu.memory_space<vmem>>, %arg10: memref<16x32xf32, #tpu.memory_space<vmem>>, %arg11: memref<1x16xf32, #tpu.memory_space<vmem>>, %arg12: memref<1x16xf32, #tpu.memory_space<vmem>>, %arg13: memref<16x112xf32, #tpu.memory_space<vmem>>, %arg14: memref<1x16xf32, #tpu.memory_space<vmem>>, %arg15: memref<1x16xf32, #tpu.memory_space<vmem>>, %arg16: memref<16x12xf32, #tpu.memory_space<vmem>>, %arg17: memref<1x12xf32, #tpu.memory_space<vmem>>, %arg18: memref<896x12xf32, #tpu.memory_space<vmem>>, %arg19: memref<16x32xf32, #tpu.memory_space<vmem>>, %arg20: memref<32x32xf32, #tpu.memory_space<vmem>>, %arg21: memref<64x16xf32, #tpu.memory_space<vmem>>, %arg22: memref<128x16xf32, #tpu.memory_space<vmem>>, %arg23: memref<896x16xf32, #tpu.memory_space<vmem>>) attributes {dimension_semantics = [], scalar_prefetch = 0 : i64, scratch_operands = 5 : i64, tpu.core_type = #tpu.core_type<tc>} {
    %c0 = arith.constant 0 : index
    %c0_0 = arith.constant 0 : index
    %0 = vector.load %arg0[%c0, %c0_0] : memref<8x32xf32, #tpu.memory_space<vmem>>, vector<8x32xf32>
    %c0_1 = arith.constant 0 : index
    %c0_2 = arith.constant 0 : index
    %1 = vector.load %arg1[%c0_1, %c0_2] : memref<32x64xf32, #tpu.memory_space<vmem>>, vector<32x64xf32>
    %cst = arith.constant dense<0.000000e+00> : vector<8x64xf32>
    %2 = tpu.matmul %0, %1, %cst {dimension_numbers = #tpu.dot_dimension_numbers<[1], [0], [0], [1], [0, 0, 1, 1], [], []>} : vector<8x32xf32>, vector<32x64xf32>, vector<8x64xf32> -> vector<8x64xf32>
    %c0_3 = arith.constant 0 : index
    %c0_4 = arith.constant 0 : index
    %3 = vector.load %arg2[%c0_3, %c0_4] : memref<1x64xf32, #tpu.memory_space<vmem>>, vector<1x64xf32>
    %c0_5 = arith.constant 0 : index
    %c0_6 = arith.constant 0 : index
    %4 = vector.load %arg3[%c0_5, %c0_6] : memref<1x64xf32, #tpu.memory_space<vmem>>, vector<1x64xf32>
    %cst_7 = arith.constant dense<0.000000e+00> : vector<64xf32>
    %5 = vector.multi_reduction <add>, %2, %cst_7 [0] : vector<8x64xf32> to vector<64xf32>
    %6 = vector.shape_cast %5 : vector<64xf32> to vector<1x64xf32>
    %cst_8 = arith.constant 1.250000e-01 : f32
    %7 = vector.broadcast %cst_8 : f32 to vector<1x64xf32>
    %8 = arith.mulf %6, %7 : vector<1x64xf32>
    %9 = arith.mulf %2, %2 : vector<8x64xf32>
    %cst_9 = arith.constant dense<0.000000e+00> : vector<64xf32>
    %10 = vector.multi_reduction <add>, %9, %cst_9 [0] : vector<8x64xf32> to vector<64xf32>
    %11 = vector.shape_cast %10 : vector<64xf32> to vector<1x64xf32>
    %cst_10 = arith.constant 1.250000e-01 : f32
    %12 = vector.broadcast %cst_10 : f32 to vector<1x64xf32>
    %13 = arith.mulf %11, %12 : vector<1x64xf32>
    %14 = arith.mulf %8, %8 : vector<1x64xf32>
    %15 = arith.subf %13, %14 : vector<1x64xf32>
    %cst_11 = arith.constant 9.99999974E-6 : f32
    %16 = vector.broadcast %cst_11 : f32 to vector<1x64xf32>
    %17 = arith.addf %15, %16 : vector<1x64xf32>
    %18 = math.rsqrt %17 : vector<1x64xf32>
    %19 = arith.mulf %3, %18 : vector<1x64xf32>
    %20 = arith.mulf %8, %19 : vector<1x64xf32>
    %21 = arith.subf %4, %20 : vector<1x64xf32>
    %22 = vector.broadcast %19 : vector<1x64xf32> to vector<8x64xf32>
    %23 = arith.mulf %2, %22 : vector<8x64xf32>
    %24 = vector.broadcast %21 : vector<1x64xf32> to vector<8x64xf32>
    %25 = arith.addf %23, %24 : vector<8x64xf32>
    %cst_12 = arith.constant 0.000000e+00 : f32
    %26 = vector.broadcast %cst_12 : f32 to vector<8x64xf32>
    %27 = arith.maximumf %25, %26 : vector<8x64xf32>
    %28 = vector.extract_strided_slice %27 {offsets = [0, 0], sizes = [8, 32], strides = [1, 1]} : vector<8x64xf32> to vector<8x32xf32>
    %c0_13 = arith.constant 0 : index
    %c0_14 = arith.constant 0 : index
    %29 = vector.load %arg19[%c0_13, %c0_14] : memref<16x32xf32, #tpu.memory_space<vmem>>, vector<8x32xf32>
    tpu.vector_store %arg19[%c0_13, %c0_14], %28 {strides = array<i32>} : memref<16x32xf32, #tpu.memory_space<vmem>>, vector<8x32xf32>,
    %30 = vector.extract_strided_slice %27 {offsets = [0, 32], sizes = [8, 32], strides = [1, 1]} : vector<8x64xf32> to vector<8x32xf32>
    %c8 = arith.constant 8 : index
    %c0_15 = arith.constant 0 : index
    %31 = vector.load %arg19[%c8, %c0_15] : memref<16x32xf32, #tpu.memory_space<vmem>>, vector<8x32xf32>
    tpu.vector_store %arg19[%c8, %c0_15], %30 {strides = array<i32>} : memref<16x32xf32, #tpu.memory_space<vmem>>, vector<8x32xf32>,
    %c0_16 = arith.constant 0 : index
    %c0_17 = arith.constant 0 : index
    %32 = vector.load %arg19[%c0_16, %c0_17] : memref<16x32xf32, #tpu.memory_space<vmem>>, vector<16x32xf32>
    %c0_18 = arith.constant 0 : index
    %c0_19 = arith.constant 0 : index
    %33 = vector.load %arg4[%c0_18, %c0_19] : memref<32x64xf32, #tpu.memory_space<vmem>>, vector<32x64xf32>
    %cst_20 = arith.constant dense<0.000000e+00> : vector<16x64xf32>
    %34 = tpu.matmul %32, %33, %cst_20 {dimension_numbers = #tpu.dot_dimension_numbers<[1], [0], [0], [1], [0, 0, 1, 1], [], []>} : vector<16x32xf32>, vector<32x64xf32>, vector<16x64xf32> -> vector<16x64xf32>
    %35 = vector.extract_strided_slice %34 {offsets = [0, 0], sizes = [16, 32], strides = [1, 1]} : vector<16x64xf32> to vector<16x32xf32>
    %c0_21 = arith.constant 0 : index
    %c0_22 = arith.constant 0 : index
    %36 = vector.load %arg20[%c0_21, %c0_22] : memref<32x32xf32, #tpu.memory_space<vmem>>, vector<16x32xf32>
    tpu.vector_store %arg20[%c0_21, %c0_22], %35 {strides = array<i32>} : memref<32x32xf32, #tpu.memory_space<vmem>>, vector<16x32xf32>,
    %37 = vector.extract_strided_slice %34 {offsets = [0, 32], sizes = [16, 32], strides = [1, 1]} : vector<16x64xf32> to vector<16x32xf32>
    %c16 = arith.constant 16 : index
    %c0_23 = arith.constant 0 : index
    %38 = vector.load %arg20[%c16, %c0_23] : memref<32x32xf32, #tpu.memory_space<vmem>>, vector<16x32xf32>
    tpu.vector_store %arg20[%c16, %c0_23], %37 {strides = array<i32>} : memref<32x32xf32, #tpu.memory_space<vmem>>, vector<16x32xf32>,
    %c0_24 = arith.constant 0 : index
    %c0_25 = arith.constant 0 : index
    %39 = vector.load %arg20[%c0_24, %c0_25] : memref<32x32xf32, #tpu.memory_space<vmem>>, vector<32x32xf32>
    %c0_26 = arith.constant 0 : index
    %c0_27 = arith.constant 0 : index
    %40 = vector.load %arg5[%c0_26, %c0_27] : memref<1x32xf32, #tpu.memory_space<vmem>>, vector<1x32xf32>
    %c0_28 = arith.constant 0 : index
    %c0_29 = arith.constant 0 : index
    %41 = vector.load %arg6[%c0_28, %c0_29] : memref<1x32xf32, #tpu.memory_space<vmem>>, vector<1x32xf32>
    %cst_30 = arith.constant dense<0.000000e+00> : vector<32xf32>
    %42 = vector.multi_reduction <add>, %39, %cst_30 [0] : vector<32x32xf32> to vector<32xf32>
    %43 = vector.shape_cast %42 : vector<32xf32> to vector<1x32xf32>
    %cst_31 = arith.constant 3.125000e-02 : f32
    %44 = vector.broadcast %cst_31 : f32 to vector<1x32xf32>
    %45 = arith.mulf %43, %44 : vector<1x32xf32>
    %46 = arith.mulf %39, %39 : vector<32x32xf32>
    %cst_32 = arith.constant dense<0.000000e+00> : vector<32xf32>
    %47 = vector.multi_reduction <add>, %46, %cst_32 [0] : vector<32x32xf32> to vector<32xf32>
    %48 = vector.shape_cast %47 : vector<32xf32> to vector<1x32xf32>
    %cst_33 = arith.constant 3.125000e-02 : f32
    %49 = vector.broadcast %cst_33 : f32 to vector<1x32xf32>
    %50 = arith.mulf %48, %49 : vector<1x32xf32>
    %51 = arith.mulf %45, %45 : vector<1x32xf32>
    %52 = arith.subf %50, %51 : vector<1x32xf32>
    %cst_34 = arith.constant 9.99999974E-6 : f32
    %53 = vector.broadcast %cst_34 : f32 to vector<1x32xf32>
    %54 = arith.addf %52, %53 : vector<1x32xf32>
    %55 = math.rsqrt %54 : vector<1x32xf32>
    %56 = arith.mulf %40, %55 : vector<1x32xf32>
    %57 = arith.mulf %45, %56 : vector<1x32xf32>
    %58 = arith.subf %41, %57 : vector<1x32xf32>
    %59 = vector.broadcast %56 : vector<1x32xf32> to vector<32x32xf32>
    %60 = arith.mulf %39, %59 : vector<32x32xf32>
    %61 = vector.broadcast %58 : vector<1x32xf32> to vector<32x32xf32>
    %62 = arith.addf %60, %61 : vector<32x32xf32>
    %cst_35 = arith.constant 0.000000e+00 : f32
    %63 = vector.broadcast %cst_35 : f32 to vector<32x32xf32>
    %64 = arith.maximumf %62, %63 : vector<32x32xf32>
    %c0_36 = arith.constant 0 : index
    %c0_37 = arith.constant 0 : index
    %65 = vector.load %arg7[%c0_36, %c0_37] : memref<32x32xf32, #tpu.memory_space<vmem>>, vector<32x32xf32>
    %cst_38 = arith.constant dense<0.000000e+00> : vector<32x32xf32>
    %66 = tpu.matmul %64, %65, %cst_38 {dimension_numbers = #tpu.dot_dimension_numbers<[1], [0], [0], [1], [0, 0, 1, 1], [], []>} : vector<32x32xf32>, vector<32x32xf32>, vector<32x32xf32> -> vector<32x32xf32>
    %67 = vector.extract_strided_slice %66 {offsets = [0, 0], sizes = [32, 16], strides = [1, 1]} : vector<32x32xf32> to vector<32x16xf32>
    %c0_39 = arith.constant 0 : index
    %c0_40 = arith.constant 0 : index
    %68 = vector.load %arg21[%c0_39, %c0_40] : memref<64x16xf32, #tpu.memory_space<vmem>>, vector<32x16xf32>
    tpu.vector_store %arg21[%c0_39, %c0_40], %67 {strides = array<i32>} : memref<64x16xf32, #tpu.memory_space<vmem>>, vector<32x16xf32>,
    %69 = vector.extract_strided_slice %66 {offsets = [0, 16], sizes = [32, 16], strides = [1, 1]} : vector<32x32xf32> to vector<32x16xf32>
    %c32 = arith.constant 32 : index
    %c0_41 = arith.constant 0 : index
    %70 = vector.load %arg21[%c32, %c0_41] : memref<64x16xf32, #tpu.memory_space<vmem>>, vector<32x16xf32>
    tpu.vector_store %arg21[%c32, %c0_41], %69 {strides = array<i32>} : memref<64x16xf32, #tpu.memory_space<vmem>>, vector<32x16xf32>,
    %c0_42 = arith.constant 0 : index
    %c0_43 = arith.constant 0 : index
    %71 = vector.load %arg21[%c0_42, %c0_43] : memref<64x16xf32, #tpu.memory_space<vmem>>, vector<64x16xf32>
    %c0_44 = arith.constant 0 : index
    %c0_45 = arith.constant 0 : index
    %72 = vector.load %arg8[%c0_44, %c0_45] : memref<1x16xf32, #tpu.memory_space<vmem>>, vector<1x16xf32>
    %c0_46 = arith.constant 0 : index
    %c0_47 = arith.constant 0 : index
    %73 = vector.load %arg9[%c0_46, %c0_47] : memref<1x16xf32, #tpu.memory_space<vmem>>, vector<1x16xf32>
    %cst_48 = arith.constant dense<0.000000e+00> : vector<16xf32>
    %74 = vector.multi_reduction <add>, %71, %cst_48 [0] : vector<64x16xf32> to vector<16xf32>
    %75 = vector.shape_cast %74 : vector<16xf32> to vector<1x16xf32>
    %cst_49 = arith.constant 1.562500e-02 : f32
    %76 = vector.broadcast %cst_49 : f32 to vector<1x16xf32>
    %77 = arith.mulf %75, %76 : vector<1x16xf32>
    %78 = arith.mulf %71, %71 : vector<64x16xf32>
    %cst_50 = arith.constant dense<0.000000e+00> : vector<16xf32>
    %79 = vector.multi_reduction <add>, %78, %cst_50 [0] : vector<64x16xf32> to vector<16xf32>
    %80 = vector.shape_cast %79 : vector<16xf32> to vector<1x16xf32>
    %cst_51 = arith.constant 1.562500e-02 : f32
    %81 = vector.broadcast %cst_51 : f32 to vector<1x16xf32>
    %82 = arith.mulf %80, %81 : vector<1x16xf32>
    %83 = arith.mulf %77, %77 : vector<1x16xf32>
    %84 = arith.subf %82, %83 : vector<1x16xf32>
    %cst_52 = arith.constant 9.99999974E-6 : f32
    %85 = vector.broadcast %cst_52 : f32 to vector<1x16xf32>
    %86 = arith.addf %84, %85 : vector<1x16xf32>
    %87 = math.rsqrt %86 : vector<1x16xf32>
    %88 = arith.mulf %72, %87 : vector<1x16xf32>
    %89 = arith.mulf %77, %88 : vector<1x16xf32>
    %90 = arith.subf %73, %89 : vector<1x16xf32>
    %91 = vector.broadcast %88 : vector<1x16xf32> to vector<64x16xf32>
    %92 = arith.mulf %71, %91 : vector<64x16xf32>
    %93 = vector.broadcast %90 : vector<1x16xf32> to vector<64x16xf32>
    %94 = arith.addf %92, %93 : vector<64x16xf32>
    %cst_53 = arith.constant 0.000000e+00 : f32
    %95 = vector.broadcast %cst_53 : f32 to vector<64x16xf32>
    %96 = arith.maximumf %94, %95 : vector<64x16xf32>
    %c0_54 = arith.constant 0 : index
    %c0_55 = arith.constant 0 : index
    %97 = vector.load %arg10[%c0_54, %c0_55] : memref<16x32xf32, #tpu.memory_space<vmem>>, vector<16x32xf32>
    %cst_56 = arith.constant dense<0.000000e+00> : vector<64x32xf32>
    %98 = tpu.matmul %96, %97, %cst_56 {dimension_numbers = #tpu.dot_dimension_numbers<[1], [0], [0], [1], [0, 0, 1, 1], [], []>} : vector<64x16xf32>, vector<16x32xf32>, vector<64x32xf32> -> vector<64x32xf32>
    %99 = vector.extract_strided_slice %98 {offsets = [0, 0], sizes = [64, 16], strides = [1, 1]} : vector<64x32xf32> to vector<64x16xf32>
    %c0_57 = arith.constant 0 : index
    %c0_58 = arith.constant 0 : index
    %100 = vector.load %arg22[%c0_57, %c0_58] : memref<128x16xf32, #tpu.memory_space<vmem>>, vector<64x16xf32>
    tpu.vector_store %arg22[%c0_57, %c0_58], %99 {strides = array<i32>} : memref<128x16xf32, #tpu.memory_space<vmem>>, vector<64x16xf32>,
    %101 = vector.extract_strided_slice %98 {offsets = [0, 16], sizes = [64, 16], strides = [1, 1]} : vector<64x32xf32> to vector<64x16xf32>
    %c64 = arith.constant 64 : index
    %c0_59 = arith.constant 0 : index
    %102 = vector.load %arg22[%c64, %c0_59] : memref<128x16xf32, #tpu.memory_space<vmem>>, vector<64x16xf32>
    tpu.vector_store %arg22[%c64, %c0_59], %101 {strides = array<i32>} : memref<128x16xf32, #tpu.memory_space<vmem>>, vector<64x16xf32>,
    %c0_60 = arith.constant 0 : index
    %c0_61 = arith.constant 0 : index
    %103 = vector.load %arg22[%c0_60, %c0_61] : memref<128x16xf32, #tpu.memory_space<vmem>>, vector<128x16xf32>
    %c0_62 = arith.constant 0 : index
    %c0_63 = arith.constant 0 : index
    %104 = vector.load %arg11[%c0_62, %c0_63] : memref<1x16xf32, #tpu.memory_space<vmem>>, vector<1x16xf32>
    %c0_64 = arith.constant 0 : index
    %c0_65 = arith.constant 0 : index
    %105 = vector.load %arg12[%c0_64, %c0_65] : memref<1x16xf32, #tpu.memory_space<vmem>>, vector<1x16xf32>
    %cst_66 = arith.constant dense<0.000000e+00> : vector<16xf32>
    %106 = vector.multi_reduction <add>, %103, %cst_66 [0] : vector<128x16xf32> to vector<16xf32>
    %107 = vector.shape_cast %106 : vector<16xf32> to vector<1x16xf32>
    %cst_67 = arith.constant 7.812500e-03 : f32
    %108 = vector.broadcast %cst_67 : f32 to vector<1x16xf32>
    %109 = arith.mulf %107, %108 : vector<1x16xf32>
    %110 = arith.mulf %103, %103 : vector<128x16xf32>
    %cst_68 = arith.constant dense<0.000000e+00> : vector<16xf32>
    %111 = vector.multi_reduction <add>, %110, %cst_68 [0] : vector<128x16xf32> to vector<16xf32>
    %112 = vector.shape_cast %111 : vector<16xf32> to vector<1x16xf32>
    %cst_69 = arith.constant 7.812500e-03 : f32
    %113 = vector.broadcast %cst_69 : f32 to vector<1x16xf32>
    %114 = arith.mulf %112, %113 : vector<1x16xf32>
    %115 = arith.mulf %109, %109 : vector<1x16xf32>
    %116 = arith.subf %114, %115 : vector<1x16xf32>
    %cst_70 = arith.constant 9.99999974E-6 : f32
    %117 = vector.broadcast %cst_70 : f32 to vector<1x16xf32>
    %118 = arith.addf %116, %117 : vector<1x16xf32>
    %119 = math.rsqrt %118 : vector<1x16xf32>
    %120 = arith.mulf %104, %119 : vector<1x16xf32>
    %121 = arith.mulf %109, %120 : vector<1x16xf32>
    %122 = arith.subf %105, %121 : vector<1x16xf32>
    %123 = vector.broadcast %120 : vector<1x16xf32> to vector<128x16xf32>
    %124 = arith.mulf %103, %123 : vector<128x16xf32>
    %125 = vector.broadcast %122 : vector<1x16xf32> to vector<128x16xf32>
    %126 = arith.addf %124, %125 : vector<128x16xf32>
    %cst_71 = arith.constant 0.000000e+00 : f32
    %127 = vector.broadcast %cst_71 : f32 to vector<128x16xf32>
    %128 = arith.maximumf %126, %127 : vector<128x16xf32>
    %c0_72 = arith.constant 0 : index
    %c0_73 = arith.constant 0 : index
    %129 = vector.load %arg13[%c0_72, %c0_73] : memref<16x112xf32, #tpu.memory_space<vmem>>, vector<16x112xf32>
    %cst_74 = arith.constant dense<0.000000e+00> : vector<128x112xf32>
    %130 = tpu.matmul %128, %129, %cst_74 {dimension_numbers = #tpu.dot_dimension_numbers<[1], [0], [0], [1], [0, 0, 1, 1], [], []>} : vector<128x16xf32>, vector<16x112xf32>, vector<128x112xf32> -> vector<128x112xf32>
    %131 = vector.extract_strided_slice %130 {offsets = [0, 0], sizes = [128, 16], strides = [1, 1]} : vector<128x112xf32> to vector<128x16xf32>
    %c0_75 = arith.constant 0 : index
    %c0_76 = arith.constant 0 : index
    %132 = vector.load %arg23[%c0_75, %c0_76] : memref<896x16xf32, #tpu.memory_space<vmem>>, vector<128x16xf32>
    tpu.vector_store %arg23[%c0_75, %c0_76], %131 {strides = array<i32>} : memref<896x16xf32, #tpu.memory_space<vmem>>, vector<128x16xf32>,
    %133 = vector.extract_strided_slice %130 {offsets = [0, 16], sizes = [128, 16], strides = [1, 1]} : vector<128x112xf32> to vector<128x16xf32>
    %c128 = arith.constant 128 : index
    %c0_77 = arith.constant 0 : index
    %134 = vector.load %arg23[%c128, %c0_77] : memref<896x16xf32, #tpu.memory_space<vmem>>, vector<128x16xf32>
    tpu.vector_store %arg23[%c128, %c0_77], %133 {strides = array<i32>} : memref<896x16xf32, #tpu.memory_space<vmem>>, vector<128x16xf32>,
    %135 = vector.extract_strided_slice %130 {offsets = [0, 32], sizes = [128, 16], strides = [1, 1]} : vector<128x112xf32> to vector<128x16xf32>
    %c256 = arith.constant 256 : index
    %c0_78 = arith.constant 0 : index
    %136 = vector.load %arg23[%c256, %c0_78] : memref<896x16xf32, #tpu.memory_space<vmem>>, vector<128x16xf32>
    tpu.vector_store %arg23[%c256, %c0_78], %135 {strides = array<i32>} : memref<896x16xf32, #tpu.memory_space<vmem>>, vector<128x16xf32>,
    %137 = vector.extract_strided_slice %130 {offsets = [0, 48], sizes = [128, 16], strides = [1, 1]} : vector<128x112xf32> to vector<128x16xf32>
    %c384 = arith.constant 384 : index
    %c0_79 = arith.constant 0 : index
    %138 = vector.load %arg23[%c384, %c0_79] : memref<896x16xf32, #tpu.memory_space<vmem>>, vector<128x16xf32>
    tpu.vector_store %arg23[%c384, %c0_79], %137 {strides = array<i32>} : memref<896x16xf32, #tpu.memory_space<vmem>>, vector<128x16xf32>,
    %139 = vector.extract_strided_slice %130 {offsets = [0, 64], sizes = [128, 16], strides = [1, 1]} : vector<128x112xf32> to vector<128x16xf32>
    %c512 = arith.constant 512 : index
    %c0_80 = arith.constant 0 : index
    %140 = vector.load %arg23[%c512, %c0_80] : memref<896x16xf32, #tpu.memory_space<vmem>>, vector<128x16xf32>
    tpu.vector_store %arg23[%c512, %c0_80], %139 {strides = array<i32>} : memref<896x16xf32, #tpu.memory_space<vmem>>, vector<128x16xf32>,
    %141 = vector.extract_strided_slice %130 {offsets = [0, 80], sizes = [128, 16], strides = [1, 1]} : vector<128x112xf32> to vector<128x16xf32>
    %c640 = arith.constant 640 : index
    %c0_81 = arith.constant 0 : index
    %142 = vector.load %arg23[%c640, %c0_81] : memref<896x16xf32, #tpu.memory_space<vmem>>, vector<128x16xf32>
    tpu.vector_store %arg23[%c640, %c0_81], %141 {strides = array<i32>} : memref<896x16xf32, #tpu.memory_space<vmem>>, vector<128x16xf32>,
    %143 = vector.extract_strided_slice %130 {offsets = [0, 96], sizes = [128, 16], strides = [1, 1]} : vector<128x112xf32> to vector<128x16xf32>
    %c768 = arith.constant 768 : index
    %c0_82 = arith.constant 0 : index
    %144 = vector.load %arg23[%c768, %c0_82] : memref<896x16xf32, #tpu.memory_space<vmem>>, vector<128x16xf32>
    tpu.vector_store %arg23[%c768, %c0_82], %143 {strides = array<i32>} : memref<896x16xf32, #tpu.memory_space<vmem>>, vector<128x16xf32>,
    %c0_83 = arith.constant 0 : index
    %c0_84 = arith.constant 0 : index
    %145 = vector.load %arg23[%c0_83, %c0_84] : memref<896x16xf32, #tpu.memory_space<vmem>>, vector<896x16xf32>
    %c0_85 = arith.constant 0 : index
    %c0_86 = arith.constant 0 : index
    %146 = vector.load %arg14[%c0_85, %c0_86] : memref<1x16xf32, #tpu.memory_space<vmem>>, vector<1x16xf32>
    %c0_87 = arith.constant 0 : index
    %c0_88 = arith.constant 0 : index
    %147 = vector.load %arg15[%c0_87, %c0_88] : memref<1x16xf32, #tpu.memory_space<vmem>>, vector<1x16xf32>
    %cst_89 = arith.constant dense<0.000000e+00> : vector<16xf32>
    %148 = vector.multi_reduction <add>, %145, %cst_89 [0] : vector<896x16xf32> to vector<16xf32>
    %149 = vector.shape_cast %148 : vector<16xf32> to vector<1x16xf32>
    %cst_90 = arith.constant 0.00111607148 : f32
    %150 = vector.broadcast %cst_90 : f32 to vector<1x16xf32>
    %151 = arith.mulf %149, %150 : vector<1x16xf32>
    %152 = arith.mulf %145, %145 : vector<896x16xf32>
    %cst_91 = arith.constant dense<0.000000e+00> : vector<16xf32>
    %153 = vector.multi_reduction <add>, %152, %cst_91 [0] : vector<896x16xf32> to vector<16xf32>
    %154 = vector.shape_cast %153 : vector<16xf32> to vector<1x16xf32>
    %cst_92 = arith.constant 0.00111607148 : f32
    %155 = vector.broadcast %cst_92 : f32 to vector<1x16xf32>
    %156 = arith.mulf %154, %155 : vector<1x16xf32>
    %157 = arith.mulf %151, %151 : vector<1x16xf32>
    %158 = arith.subf %156, %157 : vector<1x16xf32>
    %cst_93 = arith.constant 9.99999974E-6 : f32
    %159 = vector.broadcast %cst_93 : f32 to vector<1x16xf32>
    %160 = arith.addf %158, %159 : vector<1x16xf32>
    %161 = math.rsqrt %160 : vector<1x16xf32>
    %162 = arith.mulf %146, %161 : vector<1x16xf32>
    %163 = arith.mulf %151, %162 : vector<1x16xf32>
    %164 = arith.subf %147, %163 : vector<1x16xf32>
    %165 = vector.broadcast %162 : vector<1x16xf32> to vector<896x16xf32>
    %166 = arith.mulf %145, %165 : vector<896x16xf32>
    %167 = vector.broadcast %164 : vector<1x16xf32> to vector<896x16xf32>
    %168 = arith.addf %166, %167 : vector<896x16xf32>
    %cst_94 = arith.constant 0.000000e+00 : f32
    %169 = vector.broadcast %cst_94 : f32 to vector<896x16xf32>
    %170 = arith.maximumf %168, %169 : vector<896x16xf32>
    %c0_95 = arith.constant 0 : index
    %c0_96 = arith.constant 0 : index
    %171 = vector.load %arg16[%c0_95, %c0_96] : memref<16x12xf32, #tpu.memory_space<vmem>>, vector<16x12xf32>
    %cst_97 = arith.constant dense<0.000000e+00> : vector<896x12xf32>
    %172 = tpu.matmul %170, %171, %cst_97 {dimension_numbers = #tpu.dot_dimension_numbers<[1], [0], [0], [1], [0, 0, 1, 1], [], []>} : vector<896x16xf32>, vector<16x12xf32>, vector<896x12xf32> -> vector<896x12xf32>
    %c0_98 = arith.constant 0 : index
    %c0_99 = arith.constant 0 : index
    %173 = vector.load %arg17[%c0_98, %c0_99] : memref<1x12xf32, #tpu.memory_space<vmem>>, vector<1x12xf32>
    %174 = vector.broadcast %173 : vector<1x12xf32> to vector<896x12xf32>
    %175 = arith.addf %172, %174 : vector<896x12xf32>
    %c0_100 = arith.constant 0 : index
    %c0_101 = arith.constant 0 : index
    %176 = vector.load %arg18[%c0_100, %c0_101] : memref<896x12xf32, #tpu.memory_space<vmem>>, vector<896x12xf32>
    tpu.vector_store %arg18[%c0_100, %c0_101], %175 {strides = array<i32>} : memref<896x12xf32, #tpu.memory_space<vmem>>, vector<896x12xf32>,
    return
  }
}

</mosaic_0001>

<llo_original>
// kernel: _lambda_.1
$region0: #{_lambda_.1}
  #allocation0 [shape = 'u32[]', space=smem, size = 0x4, offset = 0x4, fixed_abs, tag = 'smem constant byte address 0x4 - core index']
  #allocation1 [shape = 'u32[72,128]{1,0:T(1,128)}', space=vmem, size = 0x9000, scoped, tag = 'internal scratch']
  #allocation2 [shape = 'f32[16,32]{1,0:T(8,128)}', space=vmem, size = 0x2000, scoped, tag = 'scratch operand']
  #allocation3 [shape = 'f32[32,32]{1,0:T(8,128)}', space=vmem, size = 0x4000, scoped, tag = 'scratch operand']
  #allocation4 [shape = 'f32[64,16]{1,0:T(8,128)}', space=vmem, size = 0x8000, scoped, tag = 'scratch operand']
  #allocation5 [shape = 'f32[128,16]{1,0:T(8,128)}', space=vmem, size = 0x10000, scoped, tag = 'scratch operand']
  #allocation6 [shape = 'f32[896,16]{1,0:T(8,128)}', space=vmem, size = 0x70000, scoped, tag = 'scratch operand']
  %s0 = inlined_call_operand.hbm [shape: f32[8,32], index: 0, kind: input, shape index: {}]
  %s1 = inlined_call_operand.hbm [shape: f32[32,64], index: 1, kind: input, shape index: {}]
  %s2 = inlined_call_operand.hbm [shape: f32[1,64], index: 2, kind: input, shape index: {}]
  %s3 = inlined_call_operand.hbm [shape: f32[1,64], index: 3, kind: input, shape index: {}]
  %s4 = inlined_call_operand.hbm [shape: f32[32,64], index: 4, kind: input, shape index: {}]
  %s5 = inlined_call_operand.hbm [shape: f32[1,32], index: 5, kind: input, shape index: {}]
  %s6 = inlined_call_operand.hbm [shape: f32[1,32], index: 6, kind: input, shape index: {}]
  %s7 = inlined_call_operand.hbm [shape: f32[32,32], index: 7, kind: input, shape index: {}]
  %s8 = inlined_call_operand.hbm [shape: f32[1,16], index: 8, kind: input, shape index: {}]
  %s9 = inlined_call_operand.hbm [shape: f32[1,16], index: 9, kind: input, shape index: {}]
  %s10 = inlined_call_operand.hbm [shape: f32[16,32], index: 10, kind: input, shape index: {}]
  %s11 = inlined_call_operand.hbm [shape: f32[1,16], index: 11, kind: input, shape index: {}]
  %s12 = inlined_call_operand.hbm [shape: f32[1,16], index: 12, kind: input, shape index: {}]
  %s13 = inlined_call_operand.hbm [shape: f32[16,112], index: 13, kind: input, shape index: {}]
  %s14 = inlined_call_operand.vmem [shape: f32[1,16], index: 14, kind: input, shape index: {}]
  %s15 = inlined_call_operand.vmem [shape: f32[1,16], index: 15, kind: input, shape index: {}]
  %s16 = inlined_call_operand.vmem [shape: f32[16,12], index: 16, kind: input, shape index: {}]
  %s17 = inlined_call_operand.vmem [shape: f32[1,12], index: 17, kind: input, shape index: {}]
  %s18 = inlined_call_operand.vmem [shape: f32[896,12], index: 18, kind: output, shape index: {}]
  %s19 = sld [smem:[#allocation0]]
  $region138: #{_lambda_.1} parent=0
    _
  %s21 = ssub.s32 1, %s19
  %s22 = scalar_select 0, %s21, %s19
  $region1: #{_lambda_.1} parent=0
    #allocation7 [shape = 'u8[4096]{0}', space=vmem, size = 0x1000, scoped, tag = 'input window, operand 0, single buffered']
    #allocation8 [shape = 's32[1]{0}', space=sflag, size = 0x4, scoped, tag = 'scoped memory for _lambda_.1']
    #allocation9 [shape = 'u8[16384]{0}', space=vmem, size = 0x4000, scoped, tag = 'input window, operand 1, single buffered']
    #allocation10 [shape = 's32[1]{0}', space=sflag, size = 0x4, scoped, tag = 'scoped memory for _lambda_.1']
    #allocation11 [shape = 'u8[512]{0}', space=vmem, size = 0x400, scoped, tag = 'input window, operand 2, single buffered']
    #allocation12 [shape = 'u8[512]{0}', space=vmem, size = 0x400, scoped, tag = 'input window, operand 3, single buffered']
    #allocation13 [shape = 's32[1]{0}', space=sflag, size = 0x4, scoped, tag = 'scoped memory for _lambda_.1']
    #allocation14 [shape = 'u8[16384]{0}', space=vmem, size = 0x4000, scoped, tag = 'input window, operand 4, single buffered']
    #allocation15 [shape = 'u8[512]{0}', space=vmem, size = 0x400, scoped, tag = 'input window, operand 5, single buffered']
    #allocation16 [shape = 's32[1]{0}', space=sflag, size = 0x4, scoped, tag = 'scoped memory for _lambda_.1']
    #allocation17 [shape = 'u8[512]{0}', space=vmem, size = 0x400, scoped, tag = 'input window, operand 6, single buffered']
    #allocation18 [shape = 'u8[16384]{0}', space=vmem, size = 0x4000, scoped, tag = 'input window, operand 7, single buffered']
    #allocation19 [shape = 's32[1]{0}', space=sflag, size = 0x4, scoped, tag = 'scoped memory for _lambda_.1']
    #allocation20 [shape = 'u8[512]{0}', space=vmem, size = 0x400, scoped, tag = 'input window, operand 8, single buffered']
    #allocation21 [shape = 'u8[512]{0}', space=vmem, size = 0x400, scoped, tag = 'input window, operand 9, single buffered']
    #allocation22 [shape = 's32[1]{0}', space=sflag, size = 0x4, scoped, tag = 'scoped memory for _lambda_.1']
    #allocation23 [shape = 'u8[8192]{0}', space=vmem, size = 0x2000, scoped, tag = 'input window, operand 10, single buffered']
    #allocation24 [shape = 'u8[512]{0}', space=vmem, size = 0x400, scoped, tag = 'input window, operand 11, single buffered']
    #allocation25 [shape = 's32[1]{0}', space=sflag, size = 0x4, scoped, tag = 'scoped memory for _lambda_.1']
    #allocation26 [shape = 'u8[512]{0}', space=vmem, size = 0x400, scoped, tag = 'input window, operand 12, single buffered']
    #allocation27 [shape = 'u8[8192]{0}', space=vmem, size = 0x2000, scoped, tag = 'input window, operand 13, single buffered']
    #allocation28 [shape = 's32[1]{0}', space=sflag, size = 0x4, scoped, tag = 'scoped memory for _lambda_.1']
    %23 = vsyncpa [#allocation8], 0
    %24 = vsyncpa [#allocation10], 0
    %25 = vsyncpa [#allocation13], 0
    %26 = vsyncpa [#allocation16], 0
    %27 = vsyncpa [#allocation19], 0
    %28 = vsyncpa [#allocation22], 0
    %29 = vsyncpa [#allocation25], 0
    %30 = vsyncpa [#allocation28], 0
    // Predicated region
    $region2: #{_lambda_.1} parent=1 // pred_check
      _
    $region3: #{_lambda_.1} parent=1 // pred_check_branch
      %32 = sbr.rel (0) target = $region5
    $region4: #{_lambda_.1} parent=1 // pred_region
      %34 = vsyncadd [#allocation8], 0
      %s36 = sshll.u32 %s0, 4
      %s37 = int_to_ptr.hbm [resolvable:$true] %s36
      %s38 = sshll.u32 [#allocation7], 4
      %s39 = int_to_ptr.vmem [resolvable:$true] %s38
      %41 = dma.hbm_to_vmem [thread:$0]  %s37, 128, %s39, [#allocation8]
    $region5: #{_lambda_.1} parent=1 // pred_fallthru
      _
    // Predicated region
    $region6: #{_lambda_.1} parent=1 // pred_check
      _
    $region7: #{_lambda_.1} parent=1 // pred_check_branch
      %43 = sbr.rel (0) target = $region9
    $region8: #{_lambda_.1} parent=1 // pred_region
      %45 = vsyncadd [#allocation10], 0
      %s46 = sshll.u32 %s1, 4
      %s47 = int_to_ptr.hbm [resolvable:$true] %s46
      %s48 = sshll.u32 [#allocation9], 4
      %s49 = int_to_ptr.vmem [resolvable:$true] %s48
      %54 = dma.hbm_to_vmem [thread:$0]  %s47, 512, %s49, [#allocation10], 128, 128, 8
    $region9: #{_lambda_.1} parent=1 // pred_fallthru
      _
    // Predicated region
    $region10: #{_lambda_.1} parent=1 // pred_check
      _
    $region11: #{_lambda_.1} parent=1 // pred_check_branch
      %56 = sbr.rel (0) target = $region13
    $region12: #{_lambda_.1} parent=1 // pred_region
      %58 = vsyncadd [#allocation10], 0
      %s60 = sshll.u32 %s2, 4
      %s61 = int_to_ptr.hbm [resolvable:$true] %s60
      %s62 = sshll.u32 [#allocation11], 4
      %s63 = int_to_ptr.vmem [resolvable:$true] %s62
      %65 = dma.hbm_to_vmem [thread:$0]  %s61, 16, %s63, [#allocation10]
    $region13: #{_lambda_.1} parent=1 // pred_fallthru
      _
    // Predicated region
    $region14: #{_lambda_.1} parent=1 // pred_check
      _
    $region15: #{_lambda_.1} parent=1 // pred_check_branch
      %67 = sbr.rel (0) target = $region17
    $region16: #{_lambda_.1} parent=1 // pred_region
      %69 = vsyncadd [#allocation13], 0
      %s71 = sshll.u32 %s3, 4
      %s72 = int_to_ptr.hbm [resolvable:$true] %s71
      %s73 = sshll.u32 [#allocation12], 4
      %s74 = int_to_ptr.vmem [resolvable:$true] %s73
      %76 = dma.hbm_to_vmem [thread:$0]  %s72, 16, %s74, [#allocation13]
    $region17: #{_lambda_.1} parent=1 // pred_fallthru
      _
    // Predicated region
    $region18: #{_lambda_.1} parent=1 // pred_check
      _
    $region19: #{_lambda_.1} parent=1 // pred_check_branch
      %78 = sbr.rel (0) target = $region21
    $region20: #{_lambda_.1} parent=1 // pred_region
      %80 = vsyncadd [#allocation13], 0
      %s81 = sshll.u32 %s4, 4
      %s82 = int_to_ptr.hbm [resolvable:$true] %s81
      %s83 = sshll.u32 [#allocation14], 4
      %s84 = int_to_ptr.vmem [resolvable:$true] %s83
      %89 = dma.hbm_to_vmem [thread:$0]  %s82, 512, %s84, [#allocation13], 128, 128, 8
    $region21: #{_lambda_.1} parent=1 // pred_fallthru
      _
    // Predicated region
    $region22: #{_lambda_.1} parent=1 // pred_check
      _
    $region23: #{_lambda_.1} parent=1 // pred_check_branch
      %91 = sbr.rel (0) target = $region25
    $region24: #{_lambda_.1} parent=1 // pred_region
      %93 = vsyncadd [#allocation16], 0
      %s95 = sshll.u32 %s5, 4
      %s96 = int_to_ptr.hbm [resolvable:$true] %s95
      %s97 = sshll.u32 [#allocation15], 4
      %s98 = int_to_ptr.vmem [resolvable:$true] %s97
      %100 = dma.hbm_to_vmem [thread:$0]  %s96, 16, %s98, [#allocation16]
    $region25: #{_lambda_.1} parent=1 // pred_fallthru
      _
    // Predicated region
    $region26: #{_lambda_.1} parent=1 // pred_check
      _
    $region27: #{_lambda_.1} parent=1 // pred_check_branch
      %102 = sbr.rel (0) target = $region29
    $region28: #{_lambda_.1} parent=1 // pred_region
      %104 = vsyncadd [#allocation16], 0
      %s106 = sshll.u32 %s6, 4
      %s107 = int_to_ptr.hbm [resolvable:$true] %s106
      %s108 = sshll.u32 [#allocation17], 4
      %s109 = int_to_ptr.vmem [resolvable:$true] %s108
      %111 = dma.hbm_to_vmem [thread:$0]  %s107, 16, %s109, [#allocation16]
    $region29: #{_lambda_.1} parent=1 // pred_fallthru
      _
    // Predicated region
    $region30: #{_lambda_.1} parent=1 // pred_check
      _
    $region31: #{_lambda_.1} parent=1 // pred_check_branch
      %113 = sbr.rel (0) target = $region33
    $region32: #{_lambda_.1} parent=1 // pred_region
      %115 = vsyncadd [#allocation19], 0
      %s116 = sshll.u32 %s7, 4
      %s117 = int_to_ptr.hbm [resolvable:$true] %s116
      %s118 = sshll.u32 [#allocation18], 4
      %s119 = int_to_ptr.vmem [resolvable:$true] %s118
      %124 = dma.hbm_to_vmem [thread:$0]  %s117, 512, %s119, [#allocation19], 128, 128, 8
    $region33: #{_lambda_.1} parent=1 // pred_fallthru
      _
    // Predicated region
    $region34: #{_lambda_.1} parent=1 // pred_check
      _
    $region35: #{_lambda_.1} parent=1 // pred_check_branch
      %126 = sbr.rel (0) target = $region37
    $region36: #{_lambda_.1} parent=1 // pred_region
      %128 = vsyncadd [#allocation19], 0
      %s130 = sshll.u32 %s8, 4
      %s131 = int_to_ptr.hbm [resolvable:$true] %s130
      %s132 = sshll.u32 [#allocation20], 4
      %s133 = int_to_ptr.vmem [resolvable:$true] %s132
      %135 = dma.hbm_to_vmem [thread:$0]  %s131, 16, %s133, [#allocation19]
    $region37: #{_lambda_.1} parent=1 // pred_fallthru
      _
    // Predicated region
    $region38: #{_lambda_.1} parent=1 // pred_check
      _
    $region39: #{_lambda_.1} parent=1 // pred_check_branch
      %137 = sbr.rel (0) target = $region41
    $region40: #{_lambda_.1} parent=1 // pred_region
      %139 = vsyncadd [#allocation22], 0
      %s141 = sshll.u32 %s9, 4
      %s142 = int_to_ptr.hbm [resolvable:$true] %s141
      %s143 = sshll.u32 [#allocation21], 4
      %s144 = int_to_ptr.vmem [resolvable:$true] %s143
      %146 = dma.hbm_to_vmem [thread:$0]  %s142, 16, %s144, [#allocation22]
    $region41: #{_lambda_.1} parent=1 // pred_fallthru
      _
    // Predicated region
    $region42: #{_lambda_.1} parent=1 // pred_check
      _
    $region43: #{_lambda_.1} parent=1 // pred_check_branch
      %148 = sbr.rel (0) target = $region45
    $region44: #{_lambda_.1} parent=1 // pred_region
      %150 = vsyncadd [#allocation22], 0
      %s151 = sshll.u32 %s10, 4
      %s152 = int_to_ptr.hbm [resolvable:$true] %s151
      %s153 = sshll.u32 [#allocation23], 4
      %s154 = int_to_ptr.vmem [resolvable:$true] %s153
      %159 = dma.hbm_to_vmem [thread:$0]  %s152, 256, %s154, [#allocation22], 128, 128, 8
    $region45: #{_lambda_.1} parent=1 // pred_fallthru
      _
    // Predicated region
    $region46: #{_lambda_.1} parent=1 // pred_check
      _
    $region47: #{_lambda_.1} parent=1 // pred_check_branch
      %161 = sbr.rel (0) target = $region49
    $region48: #{_lambda_.1} parent=1 // pred_region
      %163 = vsyncadd [#allocation25], 0
      %s165 = sshll.u32 %s11, 4
      %s166 = int_to_ptr.hbm [resolvable:$true] %s165
      %s167 = sshll.u32 [#allocation24], 4
      %s168 = int_to_ptr.vmem [resolvable:$true] %s167
      %170 = dma.hbm_to_vmem [thread:$0]  %s166, 16, %s168, [#allocation25]
    $region49: #{_lambda_.1} parent=1 // pred_fallthru
      _
    // Predicated region
    $region50: #{_lambda_.1} parent=1 // pred_check
      _
    $region51: #{_lambda_.1} parent=1 // pred_check_branch
      %172 = sbr.rel (0) target = $region53
    $region52: #{_lambda_.1} parent=1 // pred_region
      %174 = vsyncadd [#allocation25], 0
      %s176 = sshll.u32 %s12, 4
      %s177 = int_to_ptr.hbm [resolvable:$true] %s176
      %s178 = sshll.u32 [#allocation26], 4
      %s179 = int_to_ptr.vmem [resolvable:$true] %s178
      %181 = dma.hbm_to_vmem [thread:$0]  %s177, 16, %s179, [#allocation25]
    $region53: #{_lambda_.1} parent=1 // pred_fallthru
      _
    // Predicated region
    $region54: #{_lambda_.1} parent=1 // pred_check
      _
    $region55: #{_lambda_.1} parent=1 // pred_check_branch
      %183 = sbr.rel (0) target = $region57
    $region56: #{_lambda_.1} parent=1 // pred_region
      %185 = vsyncadd [#allocation28], 0
      %s186 = sshll.u32 %s13, 4
      %s187 = int_to_ptr.hbm [resolvable:$true] %s186
      %s188 = sshll.u32 [#allocation27], 4
      %s189 = int_to_ptr.vmem [resolvable:$true] %s188
      %194 = dma.hbm_to_vmem [thread:$0]  %s187, 256, %s189, [#allocation28], 128, 128, 8
    $region57: #{_lambda_.1} parent=1 // pred_fallthru
      _
    // Predicated region
    $region58: #{_lambda_.1} parent=1 // pred_check
      _
    $region59: #{_lambda_.1} parent=1 // pred_check_branch
      %196 = sbr.rel (0) target = $region61
    $region60: #{_lambda_.1} parent=1 // pred_region
      _
    $region61: #{_lambda_.1} parent=1 // pred_fallthru
      _
    // Predicated region
    $region62: #{_lambda_.1} parent=1 // pred_check
      _
    $region63: #{_lambda_.1} parent=1 // pred_check_branch
      %198 = sbr.rel (0) target = $region65
    $region64: #{_lambda_.1} parent=1 // pred_region
      _
    $region65: #{_lambda_.1} parent=1 // pred_fallthru
      _
    // Predicated region
    $region66: #{_lambda_.1} parent=1 // pred_check
      _
    $region67: #{_lambda_.1} parent=1 // pred_check_branch
      %200 = sbr.rel (0) target = $region69
    $region68: #{_lambda_.1} parent=1 // pred_region
      _
    $region69: #{_lambda_.1} parent=1 // pred_fallthru
      _
    // Predicated region
    $region70: #{_lambda_.1} parent=1 // pred_check
      _
    $region71: #{_lambda_.1} parent=1 // pred_check_branch
      %202 = sbr.rel (0) target = $region73
    $region72: #{_lambda_.1} parent=1 // pred_region
      _
    $region73: #{_lambda_.1} parent=1 // pred_fallthru
      _
    // Predicated region
    $region74: #{_lambda_.1} parent=1 // pred_check
      _
    $region75: #{_lambda_.1} parent=1 // pred_check_branch
      %204 = sbr.rel (0) target = $region77
    $region76: #{_lambda_.1} parent=1 // pred_region
      %206 = dma.done [#allocation8], 128
    $region77: #{_lambda_.1} parent=1 // pred_fallthru
      _
    // Predicated region
    $region78: #{_lambda_.1} parent=1 // pred_check
      _
    $region79: #{_lambda_.1} parent=1 // pred_check_branch
      %208 = sbr.rel (0) target = $region81
    $region80: #{_lambda_.1} parent=1 // pred_region
      %210 = dma.done [#allocation10], 512
    $region81: #{_lambda_.1} parent=1 // pred_fallthru
      _
    // Predicated region
    $region82: #{_lambda_.1} parent=1 // pred_check
      _
    $region83: #{_lambda_.1} parent=1 // pred_check_branch
      %212 = sbr.rel (0) target = $region85
    $region84: #{_lambda_.1} parent=1 // pred_region
      %214 = dma.done [#allocation10], 16
    $region85: #{_lambda_.1} parent=1 // pred_fallthru
      _
    // Predicated region
    $region86: #{_lambda_.1} parent=1 // pred_check
      _
    $region87: #{_lambda_.1} parent=1 // pred_check_branch
      %216 = sbr.rel (0) target = $region89
    $region88: #{_lambda_.1} parent=1 // pred_region
      %218 = dma.done [#allocation13], 16
    $region89: #{_lambda_.1} parent=1 // pred_fallthru
      _
    // Predicated region
    $region90: #{_lambda_.1} parent=1 // pred_check
      _
    $region91: #{_lambda_.1} parent=1 // pred_check_branch
      %220 = sbr.rel (0) target = $region93
    $region92: #{_lambda_.1} parent=1 // pred_region
      %222 = dma.done [#allocation13], 512
    $region93: #{_lambda_.1} parent=1 // pred_fallthru
      _
    // Predicated region
    $region94: #{_lambda_.1} parent=1 // pred_check
      _
    $region95: #{_lambda_.1} parent=1 // pred_check_branch
      %224 = sbr.rel (0) target = $region97
    $region96: #{_lambda_.1} parent=1 // pred_region
      %226 = dma.done [#allocation16], 16
    $region97: #{_lambda_.1} parent=1 // pred_fallthru
      _
    // Predicated region
    $region98: #{_lambda_.1} parent=1 // pred_check
      _
    $region99: #{_lambda_.1} parent=1 // pred_check_branch
      %228 = sbr.rel (0) target = $region101
    $region100: #{_lambda_.1} parent=1 // pred_region
      %230 = dma.done [#allocation16], 16
    $region101: #{_lambda_.1} parent=1 // pred_fallthru
      _
    // Predicated region
    $region102: #{_lambda_.1} parent=1 // pred_check
      _
    $region103: #{_lambda_.1} parent=1 // pred_check_branch
      %232 = sbr.rel (0) target = $region105
    $region104: #{_lambda_.1} parent=1 // pred_region
      %234 = dma.done [#allocation19], 512
    $region105: #{_lambda_.1} parent=1 // pred_fallthru
      _
    // Predicated region
    $region106: #{_lambda_.1} parent=1 // pred_check
      _
    $region107: #{_lambda_.1} parent=1 // pred_check_branch
      %236 = sbr.rel (0) target = $region109
    $region108: #{_lambda_.1} parent=1 // pred_region
      %238 = dma.done [#allocation19], 16
    $region109: #{_lambda_.1} parent=1 // pred_fallthru
      _
    // Predicated region
    $region110: #{_lambda_.1} parent=1 // pred_check
      _
    $region111: #{_lambda_.1} parent=1 // pred_check_branch
      %240 = sbr.rel (0) target = $region113
    $region112: #{_lambda_.1} parent=1 // pred_region
      %242 = dma.done [#allocation22], 16
    $region113: #{_lambda_.1} parent=1 // pred_fallthru
      _
    // Predicated region
    $region114: #{_lambda_.1} parent=1 // pred_check
      _
    $region115: #{_lambda_.1} parent=1 // pred_check_branch
      %244 = sbr.rel (0) target = $region117
    $region116: #{_lambda_.1} parent=1 // pred_region
      %246 = dma.done [#allocation22], 256
    $region117: #{_lambda_.1} parent=1 // pred_fallthru
      _
    // Predicated region
    $region118: #{_lambda_.1} parent=1 // pred_check
      _
    $region119: #{_lambda_.1} parent=1 // pred_check_branch
      %248 = sbr.rel (0) target = $region121
    $region120: #{_lambda_.1} parent=1 // pred_region
      %250 = dma.done [#allocation25], 16
    $region121: #{_lambda_.1} parent=1 // pred_fallthru
      _
    // Predicated region
    $region122: #{_lambda_.1} parent=1 // pred_check
      _
    $region123: #{_lambda_.1} parent=1 // pred_check_branch
      %252 = sbr.rel (0) target = $region125
    $region124: #{_lambda_.1} parent=1 // pred_region
      %254 = dma.done [#allocation25], 16
    $region125: #{_lambda_.1} parent=1 // pred_fallthru
      _
    // Predicated region
    $region126: #{_lambda_.1} parent=1 // pred_check
      _
    $region127: #{_lambda_.1} parent=1 // pred_check_branch
      %256 = sbr.rel (0) target = $region129
    $region128: #{_lambda_.1} parent=1 // pred_region
      %258 = dma.done [#allocation28], 256
    $region129: #{_lambda_.1} parent=1 // pred_fallthru
      _
    %v259 = vld [vmem:[#allocation7] sm:$0xff]
    %v260 = vld [vmem:[#allocation9] sm:$0xff]
    %v261 = vld [vmem:[#allocation9 + $0x8] sm:$0xff]
    %v262 = vld [vmem:[#allocation9 + $0x10] sm:$0xff]
    %v263 = vld [vmem:[#allocation9 + $0x18] sm:$0xff]
    %vm264 = vcmask 261120
    %v266 = vsel %vm264, %v259, 0
    %268 = vmatpush.msra.mxu0 0.0
    %269 = vmatpush.msra.mxu0 0.0
    %270 = vmatpush.msra.mxu0 0.0
    %271 = vmatpush.msra.mxu0 0.0
    %272 = vmatpush.msra.mxu0 0.0
    %273 = vmatpush.msra.mxu0 0.0
    %274 = vmatpush.msra.mxu0 0.0
    %275 = vmatpush.msra.mxu0 0.0
    %276 = vmatpush.msra.mxu0 0.0
    %277 = vmatpush.msra.mxu0 0.0
    %278 = vmatpush.msra.mxu0 0.0
    %279 = vmatpush.msra.mxu0 0.0
    %280 = vmatpush.msra.mxu0 %v263
    %281 = vmatpush.msra.mxu0 %v262
    %282 = vmatpush.msra.mxu0 %v261
    %283 = vmatpush.msra.mxu0 %v260
    %284 = vmatmul.f32.gmra.mxu0 %v266
    %v285 = vpop.f32.mrf.mxu0
    %v286 = vadd.f32 0.0, %v285
    %287 = vdwg.mxu0
    %v288 = vld [vmem:[#allocation11] sm:$0x1]
    %v289 = vld [vmem:[#allocation12] sm:$0x1]
    %vm290 = vcmask 523264
    %v291 = vsel %vm290, %v286, 0.0
    %v292 = vrot.slane %v291, 4
    %v293 = vadd.f32 %v291, %v292
    %v294 = vrot.slane %v293, 2
    %v295 = vadd.f32 %v293, %v294
    %v296 = vrot.slane %v295, 1
    %v297 = vadd.f32 %v295, %v296
    %v298 = vmul.f32 %v297, 0.125
    %v299 = vmul.f32 %v286, %v286
    %v300 = vsel %vm290, %v299, 0.0
    %v301 = vrot.slane %v300, 4
    %v302 = vadd.f32 %v300, %v301
    %v303 = vrot.slane %v302, 2
    %v304 = vadd.f32 %v302, %v303
    %v305 = vrot.slane %v304, 1
    %v306 = vadd.f32 %v304, %v305
    %v307 = vmul.f32 %v306, 0.125
    %v308 = vmul.f32 %v298, %v298
    %v309 = vsub.f32 %v307, %v308
    %v310 = vadd.f32 %v309, 1e-05
    %v311 = vrsqrt.pop %v310
    %v312 = vmul.f32 %v311, %v310
    %v313 = vmul.f32 %v312, %v311
    %v314 = vmul.f32 0.5, %v313
    %v315 = vsub.f32 1.5, %v314
    %v316 = vmul.f32 %v311, %v315
    %vm317 = vweird.f32 %v310
    %vm318 = vweird.f32 %v311
    %vm319 = vmor %vm317, %vm318
    %v320 = vsel %vm319, %v311, %v316
    %v321 = vmul.f32 %v288, %v320
    %v322 = vmul.f32 %v298, %v321
    %v323 = vsub.f32 %v289, %v322
    %v325 = vperm.slane %v321, 0
    %v327 = vmul.f32 %v286, %v325
    %v329 = vperm.slane %v323, 0
    %v331 = vadd.f32 %v327, %v329
    %v332 = vmax.f32 %v331, 0.0
    %333 = vst.msk [vmem:[#allocation2] sm:$0xff] %vm264, %v332
    %335 = vrot.lane.b32.xlu0 %v332, 96
    %v336 = vpop.permute.xlu0 %335
    %338 = vst.msk [vmem:[#allocation2 + $0x8] sm:$0xff] %vm264, %v336
    %v339 = vld [vmem:[#allocation2] sm:$0xff]
    %v340 = vld [vmem:[#allocation2 + $0x8] sm:$0xff]
    %v341 = vld [vmem:[#allocation14] sm:$0xff]
    %v342 = vld [vmem:[#allocation14 + $0x8] sm:$0xff]
    %v343 = vld [vmem:[#allocation14 + $0x10] sm:$0xff]
    %v344 = vld [vmem:[#allocation14 + $0x18] sm:$0xff]
    %v346 = vsel %vm264, %v339, 0
    %v349 = vsel %vm264, %v340, 0
    %351 = vmatpush.msra.mxu0 0.0
    %352 = vmatpush.msra.mxu0 0.0
    %353 = vmatpush.msra.mxu0 0.0
    %354 = vmatpush.msra.mxu0 0.0
    %355 = vmatpush.msra.mxu0 0.0
    %356 = vmatpush.msra.mxu0 0.0
    %357 = vmatpush.msra.mxu0 0.0
    %358 = vmatpush.msra.mxu0 0.0
    %359 = vmatpush.msra.mxu0 0.0
    %360 = vmatpush.msra.mxu0 0.0
    %361 = vmatpush.msra.mxu0 0.0
    %362 = vmatpush.msra.mxu0 0.0
    %363 = vmatpush.msra.mxu0 %v344
    %364 = vmatpush.msra.mxu0 %v343
    %365 = vmatpush.msra.mxu0 %v342
    %366 = vmatpush.msra.mxu0 %v341
    %367 = vmatmul.f32.gmra.mxu0 %v346
    %v368 = vpop.f32.mrf.mxu0
    %v369 = vadd.f32 0.0, %v368
    %370 = vmatmul.f32.gmra.mxu0 %v349
    %v371 = vpop.f32.mrf.mxu0
    %v372 = vadd.f32 0.0, %v371
    %373 = vdwg.mxu0
    %374 = vst.msk [vmem:[#allocation3] sm:$0xff] %vm264, %v369
    %375 = vst.msk [vmem:[#allocation3 + $0x8] sm:$0xff] %vm264, %v372
    %378 = vrot.lane.b32.xlu0 %v369, 96
    %v379 = vpop.permute.xlu0 %378
    %380 = vrot.lane.b32.xlu0 %v372, 96
    %v381 = vpop.permute.xlu0 %380
    %384 = vst.msk [vmem:[#allocation3 + $0x10] sm:$0xff] %vm264, %v379
    %385 = vst.msk [vmem:[#allocation3 + $0x18] sm:$0xff] %vm264, %v381
    %v386 = vld [vmem:[#allocation3] sm:$0xff]
    %v387 = vld [vmem:[#allocation3 + $0x8] sm:$0xff]
    %v388 = vld [vmem:[#allocation3 + $0x10] sm:$0xff]
    %v389 = vld [vmem:[#allocation3 + $0x18] sm:$0xff]
    %v390 = vld [vmem:[#allocation15] sm:$0x1]
    %v391 = vld [vmem:[#allocation17] sm:$0x1]
    %v392 = vsel %vm264, %v386, 0.0
    %v393 = vsel %vm264, %v387, 0.0
    %v394 = vadd.f32 %v392, %v393
    %v395 = vsel %vm264, %v388, 0.0
    %v396 = vadd.f32 %v394, %v395
    %v397 = vsel %vm264, %v389, 0.0
    %v398 = vadd.f32 %v396, %v397
    %v399 = vrot.slane %v398, 4
    %v400 = vadd.f32 %v398, %v399
    %v401 = vrot.slane %v400, 2
    %v402 = vadd.f32 %v400, %v401
    %v403 = vrot.slane %v402, 1
    %v404 = vadd.f32 %v402, %v403
    %v405 = vmul.f32 %v404, 0.03125
    %v406 = vmul.f32 %v386, %v386
    %v407 = vmul.f32 %v387, %v387
    %v408 = vmul.f32 %v388, %v388
    %v409 = vmul.f32 %v389, %v389
    %v410 = vsel %vm264, %v406, 0.0
    %v411 = vsel %vm264, %v407, 0.0
    %v412 = vadd.f32 %v410, %v411
    %v413 = vsel %vm264, %v408, 0.0
    %v414 = vadd.f32 %v412, %v413
    %v415 = vsel %vm264, %v409, 0.0
    %v416 = vadd.f32 %v414, %v415
    %v417 = vrot.slane %v416, 4
    %v418 = vadd.f32 %v416, %v417
    %v419 = vrot.slane %v418, 2
    %v420 = vadd.f32 %v418, %v419
    %v421 = vrot.slane %v420, 1
    %v422 = vadd.f32 %v420, %v421
    %v423 = vmul.f32 %v422, 0.03125
    %v424 = vmul.f32 %v405, %v405
    %v425 = vsub.f32 %v423, %v424
    %v426 = vadd.f32 %v425, 1e-05
    %v427 = vrsqrt.pop %v426
    %v428 = vmul.f32 %v427, %v426
    %v429 = vmul.f32 %v428, %v427
    %v430 = vmul.f32 0.5, %v429
    %v431 = vsub.f32 1.5, %v430
    %v432 = vmul.f32 %v427, %v431
    %vm433 = vweird.f32 %v426
    %vm434 = vweird.f32 %v427
    %vm435 = vmor %vm433, %vm434
    %v436 = vsel %vm435, %v427, %v432
    %v437 = vmul.f32 %v390, %v436
    %v438 = vmul.f32 %v405, %v437
    %v439 = vsub.f32 %v391, %v438
    %v441 = vperm.slane %v437, 0
    %v443 = vmul.f32 %v386, %v441
    %v444 = vmul.f32 %v387, %v441
    %v445 = vmul.f32 %v388, %v441
    %v446 = vmul.f32 %v389, %v441
    %v448 = vperm.slane %v439, 0
    %v450 = vadd.f32 %v443, %v448
    %v451 = vadd.f32 %v444, %v448
    %v452 = vadd.f32 %v445, %v448
    %v453 = vadd.f32 %v446, %v448
    %v454 = vmax.f32 %v450, 0.0
    %v455 = vmax.f32 %v451, 0.0
    %v456 = vmax.f32 %v452, 0.0
    %v457 = vmax.f32 %v453, 0.0
    %v458 = vld [vmem:[#allocation18] sm:$0xff]
    %v459 = vld [vmem:[#allocation18 + $0x8] sm:$0xff]
    %v460 = vld [vmem:[#allocation18 + $0x10] sm:$0xff]
    %v461 = vld [vmem:[#allocation18 + $0x18] sm:$0xff]
    %v463 = vsel %vm264, %v454, 0
    %v466 = vsel %vm264, %v455, 0
    %v469 = vsel %vm264, %v456, 0
    %v472 = vsel %vm264, %v457, 0
    %474 = vmatpush.msra.mxu0 0.0
    %475 = vmatpush.msra.mxu0 0.0
    %476 = vmatpush.msra.mxu0 0.0
    %477 = vmatpush.msra.mxu0 0.0
    %478 = vmatpush.msra.mxu0 0.0
    %479 = vmatpush.msra.mxu0 0.0
    %480 = vmatpush.msra.mxu0 0.0
    %481 = vmatpush.msra.mxu0 0.0
    %482 = vmatpush.msra.mxu0 0.0
    %483 = vmatpush.msra.mxu0 0.0
    %484 = vmatpush.msra.mxu0 0.0
    %485 = vmatpush.msra.mxu0 0.0
    %486 = vmatpush.msra.mxu0 %v461
    %487 = vmatpush.msra.mxu0 %v460
    %488 = vmatpush.msra.mxu0 %v459
    %489 = vmatpush.msra.mxu0 %v458
    %490 = vmatmul.f32.gmra.mxu0 %v463
    %v491 = vpop.f32.mrf.mxu0
    %v492 = vadd.f32 0.0, %v491
    %493 = vmatmul.f32.gmra.mxu0 %v466
    %v494 = vpop.f32.mrf.mxu0
    %v495 = vadd.f32 0.0, %v494
    %496 = vmatmul.f32.gmra.mxu0 %v469
    %v497 = vpop.f32.mrf.mxu0
    %v498 = vadd.f32 0.0, %v497
    %499 = vmatmul.f32.gmra.mxu0 %v472
    %v500 = vpop.f32.mrf.mxu0
    %v501 = vadd.f32 0.0, %v500
    %502 = vdwg.mxu0
    %vm503 = vcmask 130048
    %504 = vst.msk [vmem:[#allocation4] sm:$0xff] %vm503, %v492
    %505 = vst.msk [vmem:[#allocation4 + $0x8] sm:$0xff] %vm503, %v495
    %506 = vst.msk [vmem:[#allocation4 + $0x10] sm:$0xff] %vm503, %v498
    %507 = vst.msk [vmem:[#allocation4 + $0x18] sm:$0xff] %vm503, %v501
    %512 = vrot.lane.b32.xlu0 %v492, 112
    %v513 = vpop.permute.xlu0 %512
    %514 = vrot.lane.b32.xlu0 %v495, 112
    %v515 = vpop.permute.xlu0 %514
    %516 = vrot.lane.b32.xlu0 %v498, 112
    %v517 = vpop.permute.xlu0 %516
    %518 = vrot.lane.b32.xlu0 %v501, 112
    %v519 = vpop.permute.xlu0 %518
    %524 = vst.msk [vmem:[#allocation4 + $0x20] sm:$0xff] %vm503, %v513
    %525 = vst.msk [vmem:[#allocation4 + $0x28] sm:$0xff] %vm503, %v515
    %526 = vst.msk [vmem:[#allocation4 + $0x30] sm:$0xff] %vm503, %v517
    %527 = vst.msk [vmem:[#allocation4 + $0x38] sm:$0xff] %vm503, %v519
    %v528 = vld [vmem:[#allocation4] sm:$0xff]
    %v529 = vld [vmem:[#allocation4 + $0x8] sm:$0xff]
    %v530 = vld [vmem:[#allocation4 + $0x10] sm:$0xff]
    %v531 = vld [vmem:[#allocation4 + $0x18] sm:$0xff]
    %v532 = vld [vmem:[#allocation4 + $0x20] sm:$0xff]
    %v533 = vld [vmem:[#allocation4 + $0x28] sm:$0xff]
    %v534 = vld [vmem:[#allocation4 + $0x30] sm:$0xff]
    %v535 = vld [vmem:[#allocation4 + $0x38] sm:$0xff]
    %v536 = vld [vmem:[#allocation20] sm:$0x1]
    %v537 = vld [vmem:[#allocation21] sm:$0x1]
    %v538 = vsel %vm503, %v528, 0.0
    %v539 = vsel %vm503, %v529, 0.0
    %v540 = vadd.f32 %v538, %v539
    %v541 = vsel %vm503, %v530, 0.0
    %v542 = vadd.f32 %v540, %v541
    %v543 = vsel %vm503, %v531, 0.0
    %v544 = vadd.f32 %v542, %v543
    %v545 = vsel %vm503, %v532, 0.0
    %v546 = vadd.f32 %v544, %v545
    %v547 = vsel %vm503, %v533, 0.0
    %v548 = vadd.f32 %v546, %v547
    %v549 = vsel %vm503, %v534, 0.0
    %v550 = vadd.f32 %v548, %v549
    %v551 = vsel %vm503, %v535, 0.0
    %v552 = vadd.f32 %v550, %v551
    %v553 = vrot.slane %v552, 4
    %v554 = vadd.f32 %v552, %v553
    %v555 = vrot.slane %v554, 2
    %v556 = vadd.f32 %v554, %v555
    %v557 = vrot.slane %v556, 1
    %v558 = vadd.f32 %v556, %v557
    %v559 = vmul.f32 %v558, 0.015625
    %v560 = vmul.f32 %v528, %v528
    %v561 = vmul.f32 %v529, %v529
    %v562 = vmul.f32 %v530, %v530
    %v563 = vmul.f32 %v531, %v531
    %v564 = vmul.f32 %v532, %v532
    %v565 = vmul.f32 %v533, %v533
    %v566 = vmul.f32 %v534, %v534
    %v567 = vmul.f32 %v535, %v535
    %v568 = vsel %vm503, %v560, 0.0
    %v569 = vsel %vm503, %v561, 0.0
    %v570 = vadd.f32 %v568, %v569
    %v571 = vsel %vm503, %v562, 0.0
    %v572 = vadd.f32 %v570, %v571
    %v573 = vsel %vm503, %v563, 0.0
    %v574 = vadd.f32 %v572, %v573
    %v575 = vsel %vm503, %v564, 0.0
    %v576 = vadd.f32 %v574, %v575
    %v577 = vsel %vm503, %v565, 0.0
    %v578 = vadd.f32 %v576, %v577
    %v579 = vsel %vm503, %v566, 0.0
    %v580 = vadd.f32 %v578, %v579
    %v581 = vsel %vm503, %v567, 0.0
    %v582 = vadd.f32 %v580, %v581
    %v583 = vrot.slane %v582, 4
    %v584 = vadd.f32 %v582, %v583
    %v585 = vrot.slane %v584, 2
    %v586 = vadd.f32 %v584, %v585
    %v587 = vrot.slane %v586, 1
    %v588 = vadd.f32 %v586, %v587
    %v589 = vmul.f32 %v588, 0.015625
    %v590 = vmul.f32 %v559, %v559
    %v591 = vsub.f32 %v589, %v590
    %v592 = vadd.f32 %v591, 1e-05
    %v593 = vrsqrt.pop %v592
    %v594 = vmul.f32 %v593, %v592
    %v595 = vmul.f32 %v594, %v593
    %v596 = vmul.f32 0.5, %v595
    %v597 = vsub.f32 1.5, %v596
    %v598 = vmul.f32 %v593, %v597
    %vm599 = vweird.f32 %v592
    %vm600 = vweird.f32 %v593
    %vm601 = vmor %vm599, %vm600
    %v602 = vsel %vm601, %v593, %v598
    %v603 = vmul.f32 %v536, %v602
    %v604 = vmul.f32 %v559, %v603
    %v605 = vsub.f32 %v537, %v604
    %v607 = vperm.slane %v603, 0
    %v609 = vmul.f32 %v528, %v607
    %v610 = vmul.f32 %v529, %v607
    %v611 = vmul.f32 %v530, %v607
    %v612 = vmul.f32 %v531, %v607
    %v613 = vmul.f32 %v532, %v607
    %v614 = vmul.f32 %v533, %v607
    %v615 = vmul.f32 %v534, %v607
    %v616 = vmul.f32 %v535, %v607
    %v618 = vperm.slane %v605, 0
    %v620 = vadd.f32 %v609, %v618
    %v621 = vadd.f32 %v610, %v618
    %v622 = vadd.f32 %v611, %v618
    %v623 = vadd.f32 %v612, %v618
    %v624 = vadd.f32 %v613, %v618
    %v625 = vadd.f32 %v614, %v618
    %v626 = vadd.f32 %v615, %v618
    %v627 = vadd.f32 %v616, %v618
    %v628 = vmax.f32 %v620, 0.0
    %v629 = vmax.f32 %v621, 0.0
    %v630 = vmax.f32 %v622, 0.0
    %v631 = vmax.f32 %v623, 0.0
    %v632 = vmax.f32 %v624, 0.0
    %v633 = vmax.f32 %v625, 0.0
    %v634 = vmax.f32 %v626, 0.0
    %v635 = vmax.f32 %v627, 0.0
    %v636 = vld [vmem:[#allocation23] sm:$0xff]
    %v637 = vld [vmem:[#allocation23 + $0x8] sm:$0xff]
    %v639 = vsel %vm503, %v628, 0
    %v642 = vsel %vm503, %v629, 0
    %v645 = vsel %vm503, %v630, 0
    %v648 = vsel %vm503, %v631, 0
    %v651 = vsel %vm503, %v632, 0
    %v654 = vsel %vm503, %v633, 0
    %v657 = vsel %vm503, %v634, 0
    %v660 = vsel %vm503, %v635, 0
    %662 = vmatpush.msra.mxu0 0.0
    %663 = vmatpush.msra.mxu0 0.0
    %664 = vmatpush.msra.mxu0 0.0
    %665 = vmatpush.msra.mxu0 0.0
    %666 = vmatpush.msra.mxu0 0.0
    %667 = vmatpush.msra.mxu0 0.0
    %668 = vmatpush.msra.mxu0 0.0
    %669 = vmatpush.msra.mxu0 0.0
    %670 = vmatpush.msra.mxu0 0.0
    %671 = vmatpush.msra.mxu0 0.0
    %672 = vmatpush.msra.mxu0 0.0
    %673 = vmatpush.msra.mxu0 0.0
    %674 = vmatpush.msra.mxu0 0.0
    %675 = vmatpush.msra.mxu0 0.0
    %676 = vmatpush.msra.mxu0 %v637
    %677 = vmatpush.msra.mxu0 %v636
    %678 = vmatmul.f32.gmra.mxu0 %v639
    %v679 = vpop.f32.mrf.mxu0
    %v680 = vadd.f32 0.0, %v679
    %681 = vmatmul.f32.gmra.mxu0 %v642
    %v682 = vpop.f32.mrf.mxu0
    %v683 = vadd.f32 0.0, %v682
    %684 = vmatmul.f32.gmra.mxu0 %v645
    %v685 = vpop.f32.mrf.mxu0
    %v686 = vadd.f32 0.0, %v685
    %687 = vmatmul.f32.gmra.mxu0 %v648
    %v688 = vpop.f32.mrf.mxu0
    %v689 = vadd.f32 0.0, %v688
    %690 = vmatmul.f32.gmra.mxu0 %v651
    %v691 = vpop.f32.mrf.mxu0
    %v692 = vadd.f32 0.0, %v691
    %693 = vmatmul.f32.gmra.mxu0 %v654
    %v694 = vpop.f32.mrf.mxu0
    %v695 = vadd.f32 0.0, %v694
    %696 = vmatmul.f32.gmra.mxu0 %v657
    %v697 = vpop.f32.mrf.mxu0
    %v698 = vadd.f32 0.0, %v697
    %699 = vmatmul.f32.gmra.mxu0 %v660
    %v700 = vpop.f32.mrf.mxu0
    %v701 = vadd.f32 0.0, %v700
    %702 = vdwg.mxu0
    %703 = vst.msk [vmem:[#allocation5] sm:$0xff] %vm503, %v680
    %704 = vst.msk [vmem:[#allocation5 + $0x8] sm:$0xff] %vm503, %v683
    %705 = vst.msk [vmem:[#allocation5 + $0x10] sm:$0xff] %vm503, %v686
    %706 = vst.msk [vmem:[#allocation5 + $0x18] sm:$0xff] %vm503, %v689
    %707 = vst.msk [vmem:[#allocation5 + $0x20] sm:$0xff] %vm503, %v692
    %708 = vst.msk [vmem:[#allocation5 + $0x28] sm:$0xff] %vm503, %v695
    %709 = vst.msk [vmem:[#allocation5 + $0x30] sm:$0xff] %vm503, %v698
    %710 = vst.msk [vmem:[#allocation5 + $0x38] sm:$0xff] %vm503, %v701
    %719 = vrot.lane.b32.xlu0 %v680, 112
    %v720 = vpop.permute.xlu0 %719
    %721 = vrot.lane.b32.xlu0 %v683, 112
    %v722 = vpop.permute.xlu0 %721
    %723 = vrot.lane.b32.xlu0 %v686, 112
    %v724 = vpop.permute.xlu0 %723
    %725 = vrot.lane.b32.xlu0 %v689, 112
    %v726 = vpop.permute.xlu0 %725
    %727 = vrot.lane.b32.xlu0 %v692, 112
    %v728 = vpop.permute.xlu0 %727
    %729 = vrot.lane.b32.xlu0 %v695, 112
    %v730 = vpop.permute.xlu0 %729
    %731 = vrot.lane.b32.xlu0 %v698, 112
    %v732 = vpop.permute.xlu0 %731
    %733 = vrot.lane.b32.xlu0 %v701, 112
    %v734 = vpop.permute.xlu0 %733
    %743 = vst.msk [vmem:[#allocation5 + $0x40] sm:$0xff] %vm503, %v720
    %744 = vst.msk [vmem:[#allocation5 + $0x48] sm:$0xff] %vm503, %v722
    %745 = vst.msk [vmem:[#allocation5 + $0x50] sm:$0xff] %vm503, %v724
    %746 = vst.msk [vmem:[#allocation5 + $0x58] sm:$0xff] %vm503, %v726
    %747 = vst.msk [vmem:[#allocation5 + $0x60] sm:$0xff] %vm503, %v728
    %748 = vst.msk [vmem:[#allocation5 + $0x68] sm:$0xff] %vm503, %v730
    %749 = vst.msk [vmem:[#allocation5 + $0x70] sm:$0xff] %vm503, %v732
    %750 = vst.msk [vmem:[#allocation5 + $0x78] sm:$0xff] %vm503, %v734
    %v751 = vld [vmem:[#allocation5] sm:$0xff]
    %v752 = vld [vmem:[#allocation5 + $0x8] sm:$0xff]
    %v753 = vld [vmem:[#allocation5 + $0x10] sm:$0xff]
    %v754 = vld [vmem:[#allocation5 + $0x18] sm:$0xff]
    %v755 = vld [vmem:[#allocation5 + $0x20] sm:$0xff]
    %v756 = vld [vmem:[#allocation5 + $0x28] sm:$0xff]
    %v757 = vld [vmem:[#allocation5 + $0x30] sm:$0xff]
    %v758 = vld [vmem:[#allocation5 + $0x38] sm:$0xff]
    %v759 = vld [vmem:[#allocation5 + $0x40] sm:$0xff]
    %v760 = vld [vmem:[#allocation5 + $0x48] sm:$0xff]
    %v761 = vld [vmem:[#allocation5 + $0x50] sm:$0xff]
    %v762 = vld [vmem:[#allocation5 + $0x58] sm:$0xff]
    %v763 = vld [vmem:[#allocation5 + $0x60] sm:$0xff]
    %v764 = vld [vmem:[#allocation5 + $0x68] sm:$0xff]
    %v765 = vld [vmem:[#allocation5 + $0x70] sm:$0xff]
    %v766 = vld [vmem:[#allocation5 + $0x78] sm:$0xff]
    %v767 = vld [vmem:[#allocation24] sm:$0x1]
    %v768 = vld [vmem:[#allocation26] sm:$0x1]
    %v769 = vsel %vm503, %v751, 0.0
    %v770 = vsel %vm503, %v752, 0.0
    %v771 = vadd.f32 %v769, %v770
    %v772 = vsel %vm503, %v753, 0.0
    %v773 = vadd.f32 %v771, %v772
    %v774 = vsel %vm503, %v754, 0.0
    %v775 = vadd.f32 %v773, %v774
    %v776 = vsel %vm503, %v755, 0.0
    %v777 = vadd.f32 %v775, %v776
    %v778 = vsel %vm503, %v756, 0.0
    %v779 = vadd.f32 %v777, %v778
    %v780 = vsel %vm503, %v757, 0.0
    %v781 = vadd.f32 %v779, %v780
    %v782 = vsel %vm503, %v758, 0.0
    %v783 = vadd.f32 %v781, %v782
    %v784 = vsel %vm503, %v759, 0.0
    %v785 = vadd.f32 %v783, %v784
    %v786 = vsel %vm503, %v760, 0.0
    %v787 = vadd.f32 %v785, %v786
    %v788 = vsel %vm503, %v761, 0.0
    %v789 = vadd.f32 %v787, %v788
    %v790 = vsel %vm503, %v762, 0.0
    %v791 = vadd.f32 %v789, %v790
    %v792 = vsel %vm503, %v763, 0.0
    %v793 = vadd.f32 %v791, %v792
    %v794 = vsel %vm503, %v764, 0.0
    %v795 = vadd.f32 %v793, %v794
    %v796 = vsel %vm503, %v765, 0.0
    %v797 = vadd.f32 %v795, %v796
    %v798 = vsel %vm503, %v766, 0.0
    %v799 = vadd.f32 %v797, %v798
    %v800 = vrot.slane %v799, 4
    %v801 = vadd.f32 %v799, %v800
    %v802 = vrot.slane %v801, 2
    %v803 = vadd.f32 %v801, %v802
    %v804 = vrot.slane %v803, 1
    %v805 = vadd.f32 %v803, %v804
    %v806 = vmul.f32 %v805, 0.0078125
    %v807 = vmul.f32 %v751, %v751
    %v808 = vmul.f32 %v752, %v752
    %v809 = vmul.f32 %v753, %v753
    %v810 = vmul.f32 %v754, %v754
    %v811 = vmul.f32 %v755, %v755
    %v812 = vmul.f32 %v756, %v756
    %v813 = vmul.f32 %v757, %v757
    %v814 = vmul.f32 %v758, %v758
    %v815 = vmul.f32 %v759, %v759
    %v816 = vmul.f32 %v760, %v760
    %v817 = vmul.f32 %v761, %v761
    %v818 = vmul.f32 %v762, %v762
    %v819 = vmul.f32 %v763, %v763
    %v820 = vmul.f32 %v764, %v764
    %v821 = vmul.f32 %v765, %v765
    %v822 = vmul.f32 %v766, %v766
    %v823 = vsel %vm503, %v807, 0.0
    %v824 = vsel %vm503, %v808, 0.0
    %v825 = vadd.f32 %v823, %v824
    %v826 = vsel %vm503, %v809, 0.0
    %v827 = vadd.f32 %v825, %v826
    %v828 = vsel %vm503, %v810, 0.0
    %v829 = vadd.f32 %v827, %v828
    %v830 = vsel %vm503, %v811, 0.0
    %v831 = vadd.f32 %v829, %v830
    %v832 = vsel %vm503, %v812, 0.0
    %v833 = vadd.f32 %v831, %v832
    %v834 = vsel %vm503, %v813, 0.0
    %v835 = vadd.f32 %v833, %v834
    %v836 = vsel %vm503, %v814, 0.0
    %v837 = vadd.f32 %v835, %v836
    %v838 = vsel %vm503, %v815, 0.0
    %v839 = vadd.f32 %v837, %v838
    %v840 = vsel %vm503, %v816, 0.0
    %v841 = vadd.f32 %v839, %v840
    %v842 = vsel %vm503, %v817, 0.0
    %v843 = vadd.f32 %v841, %v842
    %v844 = vsel %vm503, %v818, 0.0
    %v845 = vadd.f32 %v843, %v844
    %v846 = vsel %vm503, %v819, 0.0
    %v847 = vadd.f32 %v845, %v846
    %v848 = vsel %vm503, %v820, 0.0
    %v849 = vadd.f32 %v847, %v848
    %v850 = vsel %vm503, %v821, 0.0
    %v851 = vadd.f32 %v849, %v850
    %v852 = vsel %vm503, %v822, 0.0
    %v853 = vadd.f32 %v851, %v852
    %v854 = vrot.slane %v853, 4
    %v855 = vadd.f32 %v853, %v854
    %v856 = vrot.slane %v855, 2
    %v857 = vadd.f32 %v855, %v856
    %v858 = vrot.slane %v857, 1
    %v859 = vadd.f32 %v857, %v858
    %v860 = vmul.f32 %v859, 0.0078125
    %v861 = vmul.f32 %v806, %v806
    %v862 = vsub.f32 %v860, %v861
    %v863 = vadd.f32 %v862, 1e-05
    %v864 = vrsqrt.pop %v863
    %v865 = vmul.f32 %v864, %v863
    %v866 = vmul.f32 %v865, %v864
    %v867 = vmul.f32 0.5, %v866
    %v868 = vsub.f32 1.5, %v867
    %v869 = vmul.f32 %v864, %v868
    %vm870 = vweird.f32 %v863
    %vm871 = vweird.f32 %v864
    %vm872 = vmor %vm870, %vm871
    %v873 = vsel %vm872, %v864, %v869
    %v874 = vmul.f32 %v767, %v873
    %v875 = vmul.f32 %v806, %v874
    %v876 = vsub.f32 %v768, %v875
    %v878 = vperm.slane %v874, 0
    %v880 = vmul.f32 %v751, %v878
    %v881 = vmul.f32 %v752, %v878
    %v882 = vmul.f32 %v753, %v878
    %v883 = vmul.f32 %v754, %v878
    %v884 = vmul.f32 %v755, %v878
    %v885 = vmul.f32 %v756, %v878
    %v886 = vmul.f32 %v757, %v878
    %v887 = vmul.f32 %v758, %v878
    %v888 = vmul.f32 %v759, %v878
    %v889 = vmul.f32 %v760, %v878
    %v890 = vmul.f32 %v761, %v878
    %v891 = vmul.f32 %v762, %v878
    %v892 = vmul.f32 %v763, %v878
    %v893 = vmul.f32 %v764, %v878
    %v894 = vmul.f32 %v765, %v878
    %v895 = vmul.f32 %v766, %v878
    %v897 = vperm.slane %v876, 0
    %v899 = vadd.f32 %v880, %v897
    %v900 = vadd.f32 %v881, %v897
    %v901 = vadd.f32 %v882, %v897
    %v902 = vadd.f32 %v883, %v897
    %v903 = vadd.f32 %v884, %v897
    %v904 = vadd.f32 %v885, %v897
    %v905 = vadd.f32 %v886, %v897
    %v906 = vadd.f32 %v887, %v897
    %v907 = vadd.f32 %v888, %v897
    %v908 = vadd.f32 %v889, %v897
    %v909 = vadd.f32 %v890, %v897
    %v910 = vadd.f32 %v891, %v897
    %v911 = vadd.f32 %v892, %v897
    %v912 = vadd.f32 %v893, %v897
    %v913 = vadd.f32 %v894, %v897
    %v914 = vadd.f32 %v895, %v897
    %v915 = vmax.f32 %v899, 0.0
    %v916 = vmax.f32 %v900, 0.0
    %v917 = vmax.f32 %v901, 0.0
    %v918 = vmax.f32 %v902, 0.0
    %v919 = vmax.f32 %v903, 0.0
    %v920 = vmax.f32 %v904, 0.0
    %v921 = vmax.f32 %v905, 0.0
    %v922 = vmax.f32 %v906, 0.0
    %v923 = vmax.f32 %v907, 0.0
    %v924 = vmax.f32 %v908, 0.0
    %v925 = vmax.f32 %v909, 0.0
    %v926 = vmax.f32 %v910, 0.0
    %v927 = vmax.f32 %v911, 0.0
    %v928 = vmax.f32 %v912, 0.0
    %v929 = vmax.f32 %v913, 0.0
    %v930 = vmax.f32 %v914, 0.0
    %v931 = vld [vmem:[#allocation27] sm:$0xff]
    %v932 = vld [vmem:[#allocation27 + $0x8] sm:$0xff]
    %v934 = vsel %vm503, %v915, 0
    %v937 = vsel %vm503, %v916, 0
    %v940 = vsel %vm503, %v917, 0
    %v943 = vsel %vm503, %v918, 0
    %v946 = vsel %vm503, %v919, 0
    %v949 = vsel %vm503, %v920, 0
    %v952 = vsel %vm503, %v921, 0
    %v955 = vsel %vm503, %v922, 0
    %v958 = vsel %vm503, %v923, 0
    %v961 = vsel %vm503, %v924, 0
    %v964 = vsel %vm503, %v925, 0
    %v967 = vsel %vm503, %v926, 0
    %v970 = vsel %vm503, %v927, 0
    %v973 = vsel %vm503, %v928, 0
    %v976 = vsel %vm503, %v929, 0
    %v979 = vsel %vm503, %v930, 0
    %981 = vmatpush.msra.mxu0 0.0
    %982 = vmatpush.msra.mxu0 0.0
    %983 = vmatpush.msra.mxu0 0.0
    %984 = vmatpush.msra.mxu0 0.0
    %985 = vmatpush.msra.mxu0 0.0
    %986 = vmatpush.msra.mxu0 0.0
    %987 = vmatpush.msra.mxu0 0.0
    %988 = vmatpush.msra.mxu0 0.0
    %989 = vmatpush.msra.mxu0 0.0
    %990 = vmatpush.msra.mxu0 0.0
    %991 = vmatpush.msra.mxu0 0.0
    %992 = vmatpush.msra.mxu0 0.0
    %993 = vmatpush.msra.mxu0 0.0
    %994 = vmatpush.msra.mxu0 0.0
    %995 = vmatpush.msra.mxu0 %v932
    %996 = vmatpush.msra.mxu0 %v931
    %997 = vmatmul.f32.gmra.mxu0 %v934
    %v998 = vpop.f32.mrf.mxu0
    %v999 = vadd.f32 0.0, %v998
    %1000 = vmatmul.f32.gmra.mxu0 %v937
    %v1001 = vpop.f32.mrf.mxu0
    %v1002 = vadd.f32 0.0, %v1001
    %1003 = vmatmul.f32.gmra.mxu0 %v940
    %v1004 = vpop.f32.mrf.mxu0
    %v1005 = vadd.f32 0.0, %v1004
    %1006 = vmatmul.f32.gmra.mxu0 %v943
    %v1007 = vpop.f32.mrf.mxu0
    %v1008 = vadd.f32 0.0, %v1007
    %1009 = vmatmul.f32.gmra.mxu0 %v946
    %v1010 = vpop.f32.mrf.mxu0
    %v1011 = vadd.f32 0.0, %v1010
    %1012 = vmatmul.f32.gmra.mxu0 %v949
    %v1013 = vpop.f32.mrf.mxu0
    %v1014 = vadd.f32 0.0, %v1013
    %1015 = vmatmul.f32.gmra.mxu0 %v952
    %v1016 = vpop.f32.mrf.mxu0
    %v1017 = vadd.f32 0.0, %v1016
    %1018 = vmatmul.f32.gmra.mxu0 %v955
    %v1019 = vpop.f32.mrf.mxu0
    %v1020 = vadd.f32 0.0, %v1019
    %1021 = vmatmul.f32.gmra.mxu0 %v958
    %v1022 = vpop.f32.mrf.mxu0
    %v1023 = vadd.f32 0.0, %v1022
    %1024 = vmatmul.f32.gmra.mxu0 %v961
    %v1025 = vpop.f32.mrf.mxu0
    %v1026 = vadd.f32 0.0, %v1025
    %1027 = vmatmul.f32.gmra.mxu0 %v964
    %v1028 = vpop.f32.mrf.mxu0
    %v1029 = vadd.f32 0.0, %v1028
    %1030 = vmatmul.f32.gmra.mxu0 %v967
    %v1031 = vpop.f32.mrf.mxu0
    %v1032 = vadd.f32 0.0, %v1031
    %1033 = vmatmul.f32.gmra.mxu0 %v970
    %v1034 = vpop.f32.mrf.mxu0
    %v1035 = vadd.f32 0.0, %v1034
    %1036 = vmatmul.f32.gmra.mxu0 %v973
    %v1037 = vpop.f32.mrf.mxu0
    %v1038 = vadd.f32 0.0, %v1037
    %1039 = vmatmul.f32.gmra.mxu0 %v976
    %v1040 = vpop.f32.mrf.mxu0
    %v1041 = vadd.f32 0.0, %v1040
    %1042 = vmatmul.f32.gmra.mxu0 %v979
    %v1043 = vpop.f32.mrf.mxu0
    %v1044 = vadd.f32 0.0, %v1043
    %1045 = vdwg.mxu0
    %1046 = vst.msk [vmem:[#allocation6] sm:$0xff] %vm503, %v999
    %1047 = vst.msk [vmem:[#allocation6 + $0x8] sm:$0xff] %vm503, %v1002
    %1048 = vst.msk [vmem:[#allocation6 + $0x10] sm:$0xff] %vm503, %v1005
    %1049 = vst.msk [vmem:[#allocation6 + $0x18] sm:$0xff] %vm503, %v1008
    %1050 = vst.msk [vmem:[#allocation6 + $0x20] sm:$0xff] %vm503, %v1011
    %1051 = vst.msk [vmem:[#allocation6 + $0x28] sm:$0xff] %vm503, %v1014
    %1052 = vst.msk [vmem:[#allocation6 + $0x30] sm:$0xff] %vm503, %v1017
    %1053 = vst.msk [vmem:[#allocation6 + $0x38] sm:$0xff] %vm503, %v1020
    %1054 = vst.msk [vmem:[#allocation6 + $0x40] sm:$0xff] %vm503, %v1023
    %1055 = vst.msk [vmem:[#allocation6 + $0x48] sm:$0xff] %vm503, %v1026
    %1056 = vst.msk [vmem:[#allocation6 + $0x50] sm:$0xff] %vm503, %v1029
    %1057 = vst.msk [vmem:[#allocation6 + $0x58] sm:$0xff] %vm503, %v1032
    %1058 = vst.msk [vmem:[#allocation6 + $0x60] sm:$0xff] %vm503, %v1035
    %1059 = vst.msk [vmem:[#allocation6 + $0x68] sm:$0xff] %vm503, %v1038
    %1060 = vst.msk [vmem:[#allocation6 + $0x70] sm:$0xff] %vm503, %v1041
    %1061 = vst.msk [vmem:[#allocation6 + $0x78] sm:$0xff] %vm503, %v1044
    %1078 = vrot.lane.b32.xlu0 %v999, 112
    %v1079 = vpop.permute.xlu0 %1078
    %1080 = vrot.lane.b32.xlu0 %v1002, 112
    %v1081 = vpop.permute.xlu0 %1080
    %1082 = vrot.lane.b32.xlu0 %v1005, 112
    %v1083 = vpop.permute.xlu0 %1082
    %1084 = vrot.lane.b32.xlu0 %v1008, 112
    %v1085 = vpop.permute.xlu0 %1084
    %1086 = vrot.lane.b32.xlu0 %v1011, 112
    %v1087 = vpop.permute.xlu0 %1086
    %1088 = vrot.lane.b32.xlu0 %v1014, 112
    %v1089 = vpop.permute.xlu0 %1088
    %1090 = vrot.lane.b32.xlu0 %v1017, 112
    %v1091 = vpop.permute.xlu0 %1090
    %1092 = vrot.lane.b32.xlu0 %v1020, 112
    %v1093 = vpop.permute.xlu0 %1092
    %1094 = vrot.lane.b32.xlu0 %v1023, 112
    %v1095 = vpop.permute.xlu0 %1094
    %1096 = vrot.lane.b32.xlu0 %v1026, 112
    %v1097 = vpop.permute.xlu0 %1096
    %1098 = vrot.lane.b32.xlu0 %v1029, 112
    %v1099 = vpop.permute.xlu0 %1098
    %1100 = vrot.lane.b32.xlu0 %v1032, 112
    %v1101 = vpop.permute.xlu0 %1100
    %1102 = vrot.lane.b32.xlu0 %v1035, 112
    %v1103 = vpop.permute.xlu0 %1102
    %1104 = vrot.lane.b32.xlu0 %v1038, 112
    %v1105 = vpop.permute.xlu0 %1104
    %1106 = vrot.lane.b32.xlu0 %v1041, 112
    %v1107 = vpop.permute.xlu0 %1106
    %1108 = vrot.lane.b32.xlu0 %v1044, 112
    %v1109 = vpop.permute.xlu0 %1108
    %1126 = vst.msk [vmem:[#allocation6 + $0x80] sm:$0xff] %vm503, %v1079
    %1127 = vst.msk [vmem:[#allocation6 + $0x88] sm:$0xff] %vm503, %v1081
    %1128 = vst.msk [vmem:[#allocation6 + $0x90] sm:$0xff] %vm503, %v1083
    %1129 = vst.msk [vmem:[#allocation6 + $0x98] sm:$0xff] %vm503, %v1085
    %1130 = vst.msk [vmem:[#allocation6 + $0xa0] sm:$0xff] %vm503, %v1087
    %1131 = vst.msk [vmem:[#allocation6 + $0xa8] sm:$0xff] %vm503, %v1089
    %1132 = vst.msk [vmem:[#allocation6 + $0xb0] sm:$0xff] %vm503, %v1091
    %1133 = vst.msk [vmem:[#allocation6 + $0xb8] sm:$0xff] %vm503, %v1093
    %1134 = vst.msk [vmem:[#allocation6 + $0xc0] sm:$0xff] %vm503, %v1095
    %1135 = vst.msk [vmem:[#allocation6 + $0xc8] sm:$0xff] %vm503, %v1097
    %1136 = vst.msk [vmem:[#allocation6 + $0xd0] sm:$0xff] %vm503, %v1099
    %1137 = vst.msk [vmem:[#allocation6 + $0xd8] sm:$0xff] %vm503, %v1101
    %1138 = vst.msk [vmem:[#allocation6 + $0xe0] sm:$0xff] %vm503, %v1103
    %1139 = vst.msk [vmem:[#allocation6 + $0xe8] sm:$0xff] %vm503, %v1105
    %1140 = vst.msk [vmem:[#allocation6 + $0xf0] sm:$0xff] %vm503, %v1107
    %1141 = vst.msk [vmem:[#allocation6 + $0xf8] sm:$0xff] %vm503, %v1109
    %1142 = vrot.lane.b32.xlu0 %v999, 96
    %v1143 = vpop.permute.xlu0 %1142
    %1144 = vrot.lane.b32.xlu0 %v1002, 96
    %v1145 = vpop.permute.xlu0 %1144
    %1146 = vrot.lane.b32.xlu0 %v1005, 96
    %v1147 = vpop.permute.xlu0 %1146
    %1148 = vrot.lane.b32.xlu0 %v1008, 96
    %v1149 = vpop.permute.xlu0 %1148
    %1150 = vrot.lane.b32.xlu0 %v1011, 96
    %v1151 = vpop.permute.xlu0 %1150
    %1152 = vrot.lane.b32.xlu0 %v1014, 96
    %v1153 = vpop.permute.xlu0 %1152
    %1154 = vrot.lane.b32.xlu0 %v1017, 96
    %v1155 = vpop.permute.xlu0 %1154
    %1156 = vrot.lane.b32.xlu0 %v1020, 96
    %v1157 = vpop.permute.xlu0 %1156
    %1158 = vrot.lane.b32.xlu0 %v1023, 96
    %v1159 = vpop.permute.xlu0 %1158
    %1160 = vrot.lane.b32.xlu0 %v1026, 96
    %v1161 = vpop.permute.xlu0 %1160
    %1162 = vrot.lane.b32.xlu0 %v1029, 96
    %v1163 = vpop.permute.xlu0 %1162
    %1164 = vrot.lane.b32.xlu0 %v1032, 96
    %v1165 = vpop.permute.xlu0 %1164
    %1166 = vrot.lane.b32.xlu0 %v1035, 96
    %v1167 = vpop.permute.xlu0 %1166
    %1168 = vrot.lane.b32.xlu0 %v1038, 96
    %v1169 = vpop.permute.xlu0 %1168
    %1170 = vrot.lane.b32.xlu0 %v1041, 96
    %v1171 = vpop.permute.xlu0 %1170
    %1172 = vrot.lane.b32.xlu0 %v1044, 96
    %v1173 = vpop.permute.xlu0 %1172
    %1190 = vst.msk [vmem:[#allocation6 + $0x100] sm:$0xff] %vm503, %v1143
    %1191 = vst.msk [vmem:[#allocation6 + $0x108] sm:$0xff] %vm503, %v1145
    %1192 = vst.msk [vmem:[#allocation6 + $0x110] sm:$0xff] %vm503, %v1147
    %1193 = vst.msk [vmem:[#allocation6 + $0x118] sm:$0xff] %vm503, %v1149
    %1194 = vst.msk [vmem:[#allocation6 + $0x120] sm:$0xff] %vm503, %v1151
    %1195 = vst.msk [vmem:[#allocation6 + $0x128] sm:$0xff] %vm503, %v1153
    %1196 = vst.msk [vmem:[#allocation6 + $0x130] sm:$0xff] %vm503, %v1155
    %1197 = vst.msk [vmem:[#allocation6 + $0x138] sm:$0xff] %vm503, %v1157
    %1198 = vst.msk [vmem:[#allocation6 + $0x140] sm:$0xff] %vm503, %v1159
    %1199 = vst.msk [vmem:[#allocation6 + $0x148] sm:$0xff] %vm503, %v1161
    %1200 = vst.msk [vmem:[#allocation6 + $0x150] sm:$0xff] %vm503, %v1163
    %1201 = vst.msk [vmem:[#allocation6 + $0x158] sm:$0xff] %vm503, %v1165
    %1202 = vst.msk [vmem:[#allocation6 + $0x160] sm:$0xff] %vm503, %v1167
    %1203 = vst.msk [vmem:[#allocation6 + $0x168] sm:$0xff] %vm503, %v1169
    %1204 = vst.msk [vmem:[#allocation6 + $0x170] sm:$0xff] %vm503, %v1171
    %1205 = vst.msk [vmem:[#allocation6 + $0x178] sm:$0xff] %vm503, %v1173
    %1206 = vrot.lane.b32.xlu0 %v999, 80
    %v1207 = vpop.permute.xlu0 %1206
    %1208 = vrot.lane.b32.xlu0 %v1002, 80
    %v1209 = vpop.permute.xlu0 %1208
    %1210 = vrot.lane.b32.xlu0 %v1005, 80
    %v1211 = vpop.permute.xlu0 %1210
    %1212 = vrot.lane.b32.xlu0 %v1008, 80
    %v1213 = vpop.permute.xlu0 %1212
    %1214 = vrot.lane.b32.xlu0 %v1011, 80
    %v1215 = vpop.permute.xlu0 %1214
    %1216 = vrot.lane.b32.xlu0 %v1014, 80
    %v1217 = vpop.permute.xlu0 %1216
    %1218 = vrot.lane.b32.xlu0 %v1017, 80
    %v1219 = vpop.permute.xlu0 %1218
    %1220 = vrot.lane.b32.xlu0 %v1020, 80
    %v1221 = vpop.permute.xlu0 %1220
    %1222 = vrot.lane.b32.xlu0 %v1023, 80
    %v1223 = vpop.permute.xlu0 %1222
    %1224 = vrot.lane.b32.xlu0 %v1026, 80
    %v1225 = vpop.permute.xlu0 %1224
    %1226 = vrot.lane.b32.xlu0 %v1029, 80
    %v1227 = vpop.permute.xlu0 %1226
    %1228 = vrot.lane.b32.xlu0 %v1032, 80
    %v1229 = vpop.permute.xlu0 %1228
    %1230 = vrot.lane.b32.xlu0 %v1035, 80
    %v1231 = vpop.permute.xlu0 %1230
    %1232 = vrot.lane.b32.xlu0 %v1038, 80
    %v1233 = vpop.permute.xlu0 %1232
    %1234 = vrot.lane.b32.xlu0 %v1041, 80
    %v1235 = vpop.permute.xlu0 %1234
    %1236 = vrot.lane.b32.xlu0 %v1044, 80
    %v1237 = vpop.permute.xlu0 %1236
    %1254 = vst.msk [vmem:[#allocation6 + $0x180] sm:$0xff] %vm503, %v1207
    %1255 = vst.msk [vmem:[#allocation6 + $0x188] sm:$0xff] %vm503, %v1209
    %1256 = vst.msk [vmem:[#allocation6 + $0x190] sm:$0xff] %vm503, %v1211
    %1257 = vst.msk [vmem:[#allocation6 + $0x198] sm:$0xff] %vm503, %v1213
    %1258 = vst.msk [vmem:[#allocation6 + $0x1a0] sm:$0xff] %vm503, %v1215
    %1259 = vst.msk [vmem:[#allocation6 + $0x1a8] sm:$0xff] %vm503, %v1217
    %1260 = vst.msk [vmem:[#allocation6 + $0x1b0] sm:$0xff] %vm503, %v1219
    %1261 = vst.msk [vmem:[#allocation6 + $0x1b8] sm:$0xff] %vm503, %v1221
    %1262 = vst.msk [vmem:[#allocation6 + $0x1c0] sm:$0xff] %vm503, %v1223
    %1263 = vst.msk [vmem:[#allocation6 + $0x1c8] sm:$0xff] %vm503, %v1225
    %1264 = vst.msk [vmem:[#allocation6 + $0x1d0] sm:$0xff] %vm503, %v1227
    %1265 = vst.msk [vmem:[#allocation6 + $0x1d8] sm:$0xff] %vm503, %v1229
    %1266 = vst.msk [vmem:[#allocation6 + $0x1e0] sm:$0xff] %vm503, %v1231
    %1267 = vst.msk [vmem:[#allocation6 + $0x1e8] sm:$0xff] %vm503, %v1233
    %1268 = vst.msk [vmem:[#allocation6 + $0x1f0] sm:$0xff] %vm503, %v1235
    %1269 = vst.msk [vmem:[#allocation6 + $0x1f8] sm:$0xff] %vm503, %v1237
    %1270 = vrot.lane.b32.xlu0 %v999, 64
    %v1271 = vpop.permute.xlu0 %1270
    %1272 = vrot.lane.b32.xlu0 %v1002, 64
    %v1273 = vpop.permute.xlu0 %1272
    %1274 = vrot.lane.b32.xlu0 %v1005, 64
    %v1275 = vpop.permute.xlu0 %1274
    %1276 = vrot.lane.b32.xlu0 %v1008, 64
    %v1277 = vpop.permute.xlu0 %1276
    %1278 = vrot.lane.b32.xlu0 %v1011, 64
    %v1279 = vpop.permute.xlu0 %1278
    %1280 = vrot.lane.b32.xlu0 %v1014, 64
    %v1281 = vpop.permute.xlu0 %1280
    %1282 = vrot.lane.b32.xlu0 %v1017, 64
    %v1283 = vpop.permute.xlu0 %1282
    %1284 = vrot.lane.b32.xlu0 %v1020, 64
    %v1285 = vpop.permute.xlu0 %1284
    %1286 = vrot.lane.b32.xlu0 %v1023, 64
    %v1287 = vpop.permute.xlu0 %1286
    %1288 = vrot.lane.b32.xlu0 %v1026, 64
    %v1289 = vpop.permute.xlu0 %1288
    %1290 = vrot.lane.b32.xlu0 %v1029, 64
    %v1291 = vpop.permute.xlu0 %1290
    %1292 = vrot.lane.b32.xlu0 %v1032, 64
    %v1293 = vpop.permute.xlu0 %1292
    %1294 = vrot.lane.b32.xlu0 %v1035, 64
    %v1295 = vpop.permute.xlu0 %1294
    %1296 = vrot.lane.b32.xlu0 %v1038, 64
    %v1297 = vpop.permute.xlu0 %1296
    %1298 = vrot.lane.b32.xlu0 %v1041, 64
    %v1299 = vpop.permute.xlu0 %1298
    %1300 = vrot.lane.b32.xlu0 %v1044, 64
    %v1301 = vpop.permute.xlu0 %1300
    %1318 = vst.msk [vmem:[#allocation6 + $0x200] sm:$0xff] %vm503, %v1271
    %1319 = vst.msk [vmem:[#allocation6 + $0x208] sm:$0xff] %vm503, %v1273
    %1320 = vst.msk [vmem:[#allocation6 + $0x210] sm:$0xff] %vm503, %v1275
    %1321 = vst.msk [vmem:[#allocation6 + $0x218] sm:$0xff] %vm503, %v1277
    %1322 = vst.msk [vmem:[#allocation6 + $0x220] sm:$0xff] %vm503, %v1279
    %1323 = vst.msk [vmem:[#allocation6 + $0x228] sm:$0xff] %vm503, %v1281
    %1324 = vst.msk [vmem:[#allocation6 + $0x230] sm:$0xff] %vm503, %v1283
    %1325 = vst.msk [vmem:[#allocation6 + $0x238] sm:$0xff] %vm503, %v1285
    %1326 = vst.msk [vmem:[#allocation6 + $0x240] sm:$0xff] %vm503, %v1287
    %1327 = vst.msk [vmem:[#allocation6 + $0x248] sm:$0xff] %vm503, %v1289
    %1328 = vst.msk [vmem:[#allocation6 + $0x250] sm:$0xff] %vm503, %v1291
    %1329 = vst.msk [vmem:[#allocation6 + $0x258] sm:$0xff] %vm503, %v1293
    %1330 = vst.msk [vmem:[#allocation6 + $0x260] sm:$0xff] %vm503, %v1295
    %1331 = vst.msk [vmem:[#allocation6 + $0x268] sm:$0xff] %vm503, %v1297
    %1332 = vst.msk [vmem:[#allocation6 + $0x270] sm:$0xff] %vm503, %v1299
    %1333 = vst.msk [vmem:[#allocation6 + $0x278] sm:$0xff] %vm503, %v1301
    %1334 = vrot.lane.b32.xlu0 %v999, 48
    %v1335 = vpop.permute.xlu0 %1334
    %1336 = vrot.lane.b32.xlu0 %v1002, 48
    %v1337 = vpop.permute.xlu0 %1336
    %1338 = vrot.lane.b32.xlu0 %v1005, 48
    %v1339 = vpop.permute.xlu0 %1338
    %1340 = vrot.lane.b32.xlu0 %v1008, 48
    %v1341 = vpop.permute.xlu0 %1340
    %1342 = vrot.lane.b32.xlu0 %v1011, 48
    %v1343 = vpop.permute.xlu0 %1342
    %1344 = vrot.lane.b32.xlu0 %v1014, 48
    %v1345 = vpop.permute.xlu0 %1344
    %1346 = vrot.lane.b32.xlu0 %v1017, 48
    %v1347 = vpop.permute.xlu0 %1346
    %1348 = vrot.lane.b32.xlu0 %v1020, 48
    %v1349 = vpop.permute.xlu0 %1348
    %1350 = vrot.lane.b32.xlu0 %v1023, 48
    %v1351 = vpop.permute.xlu0 %1350
    %1352 = vrot.lane.b32.xlu0 %v1026, 48
    %v1353 = vpop.permute.xlu0 %1352
    %1354 = vrot.lane.b32.xlu0 %v1029, 48
    %v1355 = vpop.permute.xlu0 %1354
    %1356 = vrot.lane.b32.xlu0 %v1032, 48
    %v1357 = vpop.permute.xlu0 %1356
    %1358 = vrot.lane.b32.xlu0 %v1035, 48
    %v1359 = vpop.permute.xlu0 %1358
    %1360 = vrot.lane.b32.xlu0 %v1038, 48
    %v1361 = vpop.permute.xlu0 %1360
    %1362 = vrot.lane.b32.xlu0 %v1041, 48
    %v1363 = vpop.permute.xlu0 %1362
    %1364 = vrot.lane.b32.xlu0 %v1044, 48
    %v1365 = vpop.permute.xlu0 %1364
    %1382 = vst.msk [vmem:[#allocation6 + $0x280] sm:$0xff] %vm503, %v1335
    %1383 = vst.msk [vmem:[#allocation6 + $0x288] sm:$0xff] %vm503, %v1337
    %1384 = vst.msk [vmem:[#allocation6 + $0x290] sm:$0xff] %vm503, %v1339
    %1385 = vst.msk [vmem:[#allocation6 + $0x298] sm:$0xff] %vm503, %v1341
    %1386 = vst.msk [vmem:[#allocation6 + $0x2a0] sm:$0xff] %vm503, %v1343
    %1387 = vst.msk [vmem:[#allocation6 + $0x2a8] sm:$0xff] %vm503, %v1345
    %1388 = vst.msk [vmem:[#allocation6 + $0x2b0] sm:$0xff] %vm503, %v1347
    %1389 = vst.msk [vmem:[#allocation6 + $0x2b8] sm:$0xff] %vm503, %v1349
    %1390 = vst.msk [vmem:[#allocation6 + $0x2c0] sm:$0xff] %vm503, %v1351
    %1391 = vst.msk [vmem:[#allocation6 + $0x2c8] sm:$0xff] %vm503, %v1353
    %1392 = vst.msk [vmem:[#allocation6 + $0x2d0] sm:$0xff] %vm503, %v1355
    %1393 = vst.msk [vmem:[#allocation6 + $0x2d8] sm:$0xff] %vm503, %v1357
    %1394 = vst.msk [vmem:[#allocation6 + $0x2e0] sm:$0xff] %vm503, %v1359
    %1395 = vst.msk [vmem:[#allocation6 + $0x2e8] sm:$0xff] %vm503, %v1361
    %1396 = vst.msk [vmem:[#allocation6 + $0x2f0] sm:$0xff] %vm503, %v1363
    %1397 = vst.msk [vmem:[#allocation6 + $0x2f8] sm:$0xff] %vm503, %v1365
    %1398 = vrot.lane.b32.xlu0 %v999, 32
    %v1399 = vpop.permute.xlu0 %1398
    %1400 = vrot.lane.b32.xlu0 %v1002, 32
    %v1401 = vpop.permute.xlu0 %1400
    %1402 = vrot.lane.b32.xlu0 %v1005, 32
    %v1403 = vpop.permute.xlu0 %1402
    %1404 = vrot.lane.b32.xlu0 %v1008, 32
    %v1405 = vpop.permute.xlu0 %1404
    %1406 = vrot.lane.b32.xlu0 %v1011, 32
    %v1407 = vpop.permute.xlu0 %1406
    %1408 = vrot.lane.b32.xlu0 %v1014, 32
    %v1409 = vpop.permute.xlu0 %1408
    %1410 = vrot.lane.b32.xlu0 %v1017, 32
    %v1411 = vpop.permute.xlu0 %1410
    %1412 = vrot.lane.b32.xlu0 %v1020, 32
    %v1413 = vpop.permute.xlu0 %1412
    %1414 = vrot.lane.b32.xlu0 %v1023, 32
    %v1415 = vpop.permute.xlu0 %1414
    %1416 = vrot.lane.b32.xlu0 %v1026, 32
    %v1417 = vpop.permute.xlu0 %1416
    %1418 = vrot.lane.b32.xlu0 %v1029, 32
    %v1419 = vpop.permute.xlu0 %1418
    %1420 = vrot.lane.b32.xlu0 %v1032, 32
    %v1421 = vpop.permute.xlu0 %1420
    %1422 = vrot.lane.b32.xlu0 %v1035, 32
    %v1423 = vpop.permute.xlu0 %1422
    %1424 = vrot.lane.b32.xlu0 %v1038, 32
    %v1425 = vpop.permute.xlu0 %1424
    %1426 = vrot.lane.b32.xlu0 %v1041, 32
    %v1427 = vpop.permute.xlu0 %1426
    %1428 = vrot.lane.b32.xlu0 %v1044, 32
    %v1429 = vpop.permute.xlu0 %1428
    %1446 = vst.msk [vmem:[#allocation6 + $0x300] sm:$0xff] %vm503, %v1399
    %1447 = vst.msk [vmem:[#allocation6 + $0x308] sm:$0xff] %vm503, %v1401
    %1448 = vst.msk [vmem:[#allocation6 + $0x310] sm:$0xff] %vm503, %v1403
    %1449 = vst.msk [vmem:[#allocation6 + $0x318] sm:$0xff] %vm503, %v1405
    %1450 = vst.msk [vmem:[#allocation6 + $0x320] sm:$0xff] %vm503, %v1407
    %1451 = vst.msk [vmem:[#allocation6 + $0x328] sm:$0xff] %vm503, %v1409
    %1452 = vst.msk [vmem:[#allocation6 + $0x330] sm:$0xff] %vm503, %v1411
    %1453 = vst.msk [vmem:[#allocation6 + $0x338] sm:$0xff] %vm503, %v1413
    %1454 = vst.msk [vmem:[#allocation6 + $0x340] sm:$0xff] %vm503, %v1415
    %1455 = vst.msk [vmem:[#allocation6 + $0x348] sm:$0xff] %vm503, %v1417
    %1456 = vst.msk [vmem:[#allocation6 + $0x350] sm:$0xff] %vm503, %v1419
    %1457 = vst.msk [vmem:[#allocation6 + $0x358] sm:$0xff] %vm503, %v1421
    %1458 = vst.msk [vmem:[#allocation6 + $0x360] sm:$0xff] %vm503, %v1423
    %1459 = vst.msk [vmem:[#allocation6 + $0x368] sm:$0xff] %vm503, %v1425
    %1460 = vst.msk [vmem:[#allocation6 + $0x370] sm:$0xff] %vm503, %v1427
    %1461 = vst.msk [vmem:[#allocation6 + $0x378] sm:$0xff] %vm503, %v1429
    %v1462 = vld [vmem:[#allocation6] sm:$0xff]
    %v1463 = vld [vmem:[#allocation6 + $0x8] sm:$0xff]
    %v1464 = vld [vmem:[#allocation6 + $0x10] sm:$0xff]
    %v1465 = vld [vmem:[#allocation6 + $0x18] sm:$0xff]
    %v1466 = vld [vmem:[#allocation6 + $0x20] sm:$0xff]
    %v1467 = vld [vmem:[#allocation6 + $0x28] sm:$0xff]
    %v1468 = vld [vmem:[#allocation6 + $0x30] sm:$0xff]
    %v1469 = vld [vmem:[#allocation6 + $0x38] sm:$0xff]
    %v1470 = vld [vmem:[#allocation6 + $0x40] sm:$0xff]
    %v1471 = vld [vmem:[#allocation6 + $0x48] sm:$0xff]
    %v1472 = vld [vmem:[#allocation6 + $0x50] sm:$0xff]
    %v1473 = vld [vmem:[#allocation6 + $0x58] sm:$0xff]
    %v1474 = vld [vmem:[#allocation6 + $0x60] sm:$0xff]
    %v1475 = vld [vmem:[#allocation6 + $0x68] sm:$0xff]
    %v1476 = vld [vmem:[#allocation6 + $0x70] sm:$0xff]
    %v1477 = vld [vmem:[#allocation6 + $0x78] sm:$0xff]
    %v1478 = vld [vmem:[#allocation6 + $0x80] sm:$0xff]
    %v1479 = vld [vmem:[#allocation6 + $0x88] sm:$0xff]
    %v1480 = vld [vmem:[#allocation6 + $0x90] sm:$0xff]
    %v1481 = vld [vmem:[#allocation6 + $0x98] sm:$0xff]
    %v1482 = vld [vmem:[#allocation6 + $0xa0] sm:$0xff]
    %v1483 = vld [vmem:[#allocation6 + $0xa8] sm:$0xff]
    %v1484 = vld [vmem:[#allocation6 + $0xb0] sm:$0xff]
    %v1485 = vld [vmem:[#allocation6 + $0xb8] sm:$0xff]
    %v1486 = vld [vmem:[#allocation6 + $0xc0] sm:$0xff]
    %v1487 = vld [vmem:[#allocation6 + $0xc8] sm:$0xff]
    %v1488 = vld [vmem:[#allocation6 + $0xd0] sm:$0xff]
    %v1489 = vld [vmem:[#allocation6 + $0xd8] sm:$0xff]
    %v1490 = vld [vmem:[#allocation6 + $0xe0] sm:$0xff]
    %v1491 = vld [vmem:[#allocation6 + $0xe8] sm:$0xff]
    %v1492 = vld [vmem:[#allocation6 + $0xf0] sm:$0xff]
    %v1493 = vld [vmem:[#allocation6 + $0xf8] sm:$0xff]
    %v1494 = vld [vmem:[#allocation6 + $0x100] sm:$0xff]
    %v1495 = vld [vmem:[#allocation6 + $0x108] sm:$0xff]
    %v1496 = vld [vmem:[#allocation6 + $0x110] sm:$0xff]
    %v1497 = vld [vmem:[#allocation6 + $0x118] sm:$0xff]
    %v1498 = vld [vmem:[#allocation6 + $0x120] sm:$0xff]
    %v1499 = vld [vmem:[#allocation6 + $0x128] sm:$0xff]
    %v1500 = vld [vmem:[#allocation6 + $0x130] sm:$0xff]
    %v1501 = vld [vmem:[#allocation6 + $0x138] sm:$0xff]
    %v1502 = vld [vmem:[#allocation6 + $0x140] sm:$0xff]
    %v1503 = vld [vmem:[#allocation6 + $0x148] sm:$0xff]
    %v1504 = vld [vmem:[#allocation6 + $0x150] sm:$0xff]
    %v1505 = vld [vmem:[#allocation6 + $0x158] sm:$0xff]
    %v1506 = vld [vmem:[#allocation6 + $0x160] sm:$0xff]
    %v1507 = vld [vmem:[#allocation6 + $0x168] sm:$0xff]
    %v1508 = vld [vmem:[#allocation6 + $0x170] sm:$0xff]
    %v1509 = vld [vmem:[#allocation6 + $0x178] sm:$0xff]
    %v1510 = vld [vmem:[#allocation6 + $0x180] sm:$0xff]
    %v1511 = vld [vmem:[#allocation6 + $0x188] sm:$0xff]
    %v1512 = vld [vmem:[#allocation6 + $0x190] sm:$0xff]
    %v1513 = vld [vmem:[#allocation6 + $0x198] sm:$0xff]
    %v1514 = vld [vmem:[#allocation6 + $0x1a0] sm:$0xff]
    %v1515 = vld [vmem:[#allocation6 + $0x1a8] sm:$0xff]
    %v1516 = vld [vmem:[#allocation6 + $0x1b0] sm:$0xff]
    %v1517 = vld [vmem:[#allocation6 + $0x1b8] sm:$0xff]
    %v1518 = vld [vmem:[#allocation6 + $0x1c0] sm:$0xff]
    %v1519 = vld [vmem:[#allocation6 + $0x1c8] sm:$0xff]
    %v1520 = vld [vmem:[#allocation6 + $0x1d0] sm:$0xff]
    %v1521 = vld [vmem:[#allocation6 + $0x1d8] sm:$0xff]
    %v1522 = vld [vmem:[#allocation6 + $0x1e0] sm:$0xff]
    %v1523 = vld [vmem:[#allocation6 + $0x1e8] sm:$0xff]
    %v1524 = vld [vmem:[#allocation6 + $0x1f0] sm:$0xff]
    %v1525 = vld [vmem:[#allocation6 + $0x1f8] sm:$0xff]
    %v1526 = vld [vmem:[#allocation6 + $0x200] sm:$0xff]
    %v1527 = vld [vmem:[#allocation6 + $0x208] sm:$0xff]
    %v1528 = vld [vmem:[#allocation6 + $0x210] sm:$0xff]
    %v1529 = vld [vmem:[#allocation6 + $0x218] sm:$0xff]
    %v1530 = vld [vmem:[#allocation6 + $0x220] sm:$0xff]
    %v1531 = vld [vmem:[#allocation6 + $0x228] sm:$0xff]
    %v1532 = vld [vmem:[#allocation6 + $0x230] sm:$0xff]
    %v1533 = vld [vmem:[#allocation6 + $0x238] sm:$0xff]
    %v1534 = vld [vmem:[#allocation6 + $0x240] sm:$0xff]
    %v1535 = vld [vmem:[#allocation6 + $0x248] sm:$0xff]
    %v1536 = vld [vmem:[#allocation6 + $0x250] sm:$0xff]
    %v1537 = vld [vmem:[#allocation6 + $0x258] sm:$0xff]
    %v1538 = vld [vmem:[#allocation6 + $0x260] sm:$0xff]
    %v1539 = vld [vmem:[#allocation6 + $0x268] sm:$0xff]
    %v1540 = vld [vmem:[#allocation6 + $0x270] sm:$0xff]
    %v1541 = vld [vmem:[#allocation6 + $0x278] sm:$0xff]
    %v1542 = vld [vmem:[#allocation6 + $0x280] sm:$0xff]
    %v1543 = vld [vmem:[#allocation6 + $0x288] sm:$0xff]
    %v1544 = vld [vmem:[#allocation6 + $0x290] sm:$0xff]
    %v1545 = vld [vmem:[#allocation6 + $0x298] sm:$0xff]
    %v1546 = vld [vmem:[#allocation6 + $0x2a0] sm:$0xff]
    %v1547 = vld [vmem:[#allocation6 + $0x2a8] sm:$0xff]
    %v1548 = vld [vmem:[#allocation6 + $0x2b0] sm:$0xff]
    %v1549 = vld [vmem:[#allocation6 + $0x2b8] sm:$0xff]
    %v1550 = vld [vmem:[#allocation6 + $0x2c0] sm:$0xff]
    %v1551 = vld [vmem:[#allocation6 + $0x2c8] sm:$0xff]
    %v1552 = vld [vmem:[#allocation6 + $0x2d0] sm:$0xff]
    %v1553 = vld [vmem:[#allocation6 + $0x2d8] sm:$0xff]
    %v1554 = vld [vmem:[#allocation6 + $0x2e0] sm:$0xff]
    %v1555 = vld [vmem:[#allocation6 + $0x2e8] sm:$0xff]
    %v1556 = vld [vmem:[#allocation6 + $0x2f0] sm:$0xff]
    %v1557 = vld [vmem:[#allocation6 + $0x2f8] sm:$0xff]
    %v1558 = vld [vmem:[#allocation6 + $0x300] sm:$0xff]
    %v1559 = vld [vmem:[#allocation6 + $0x308] sm:$0xff]
    %v1560 = vld [vmem:[#allocation6 + $0x310] sm:$0xff]
    %v1561 = vld [vmem:[#allocation6 + $0x318] sm:$0xff]
    %v1562 = vld [vmem:[#allocation6 + $0x320] sm:$0xff]
    %v1563 = vld [vmem:[#allocation6 + $0x328] sm:$0xff]
    %v1564 = vld [vmem:[#allocation6 + $0x330] sm:$0xff]
    %v1565 = vld [vmem:[#allocation6 + $0x338] sm:$0xff]
    %v1566 = vld [vmem:[#allocation6 + $0x340] sm:$0xff]
    %v1567 = vld [vmem:[#allocation6 + $0x348] sm:$0xff]
    %v1568 = vld [vmem:[#allocation6 + $0x350] sm:$0xff]
    %v1569 = vld [vmem:[#allocation6 + $0x358] sm:$0xff]
    %v1570 = vld [vmem:[#allocation6 + $0x360] sm:$0xff]
    %v1571 = vld [vmem:[#allocation6 + $0x368] sm:$0xff]
    %v1572 = vld [vmem:[#allocation6 + $0x370] sm:$0xff]
    %v1573 = vld [vmem:[#allocation6 + $0x378] sm:$0xff]
    %v1574 = vld [vmem:[%s14] sm:$0x1]
    %v1575 = vld [vmem:[%s15] sm:$0x1]
    %v1576 = vsel %vm503, %v1462, 0.0
    %v1577 = vsel %vm503, %v1463, 0.0
    %v1578 = vadd.f32 %v1576, %v1577
    %v1579 = vsel %vm503, %v1464, 0.0
    %v1580 = vadd.f32 %v1578, %v1579
    %v1581 = vsel %vm503, %v1465, 0.0
    %v1582 = vadd.f32 %v1580, %v1581
    %v1583 = vsel %vm503, %v1466, 0.0
    %v1584 = vadd.f32 %v1582, %v1583
    %v1585 = vsel %vm503, %v1467, 0.0
    %v1586 = vadd.f32 %v1584, %v1585
    %v1587 = vsel %vm503, %v1468, 0.0
    %v1588 = vadd.f32 %v1586, %v1587
    %v1589 = vsel %vm503, %v1469, 0.0
    %v1590 = vadd.f32 %v1588, %v1589
    %v1591 = vsel %vm503, %v1470, 0.0
    %v1592 = vadd.f32 %v1590, %v1591
    %v1593 = vsel %vm503, %v1471, 0.0
    %v1594 = vadd.f32 %v1592, %v1593
    %v1595 = vsel %vm503, %v1472, 0.0
    %v1596 = vadd.f32 %v1594, %v1595
    %v1597 = vsel %vm503, %v1473, 0.0
    %v1598 = vadd.f32 %v1596, %v1597
    %v1599 = vsel %vm503, %v1474, 0.0
    %v1600 = vadd.f32 %v1598, %v1599
    %v1601 = vsel %vm503, %v1475, 0.0
    %v1602 = vadd.f32 %v1600, %v1601
    %v1603 = vsel %vm503, %v1476, 0.0
    %v1604 = vadd.f32 %v1602, %v1603
    %v1605 = vsel %vm503, %v1477, 0.0
    %v1606 = vadd.f32 %v1604, %v1605
    %v1607 = vsel %vm503, %v1478, 0.0
    %v1608 = vadd.f32 %v1606, %v1607
    %v1609 = vsel %vm503, %v1479, 0.0
    %v1610 = vadd.f32 %v1608, %v1609
    %v1611 = vsel %vm503, %v1480, 0.0
    %v1612 = vadd.f32 %v1610, %v1611
    %v1613 = vsel %vm503, %v1481, 0.0
    %v1614 = vadd.f32 %v1612, %v1613
    %v1615 = vsel %vm503, %v1482, 0.0
    %v1616 = vadd.f32 %v1614, %v1615
    %v1617 = vsel %vm503, %v1483, 0.0
    %v1618 = vadd.f32 %v1616, %v1617
    %v1619 = vsel %vm503, %v1484, 0.0
    %v1620 = vadd.f32 %v1618, %v1619
    %v1621 = vsel %vm503, %v1485, 0.0
    %v1622 = vadd.f32 %v1620, %v1621
    %v1623 = vsel %vm503, %v1486, 0.0
    %v1624 = vadd.f32 %v1622, %v1623
    %v1625 = vsel %vm503, %v1487, 0.0
    %v1626 = vadd.f32 %v1624, %v1625
    %v1627 = vsel %vm503, %v1488, 0.0
    %v1628 = vadd.f32 %v1626, %v1627
    %v1629 = vsel %vm503, %v1489, 0.0
    %v1630 = vadd.f32 %v1628, %v1629
    %v1631 = vsel %vm503, %v1490, 0.0
    %v1632 = vadd.f32 %v1630, %v1631
    %v1633 = vsel %vm503, %v1491, 0.0
    %v1634 = vadd.f32 %v1632, %v1633
    %v1635 = vsel %vm503, %v1492, 0.0
    %v1636 = vadd.f32 %v1634, %v1635
    %v1637 = vsel %vm503, %v1493, 0.0
    %v1638 = vadd.f32 %v1636, %v1637
    %v1639 = vsel %vm503, %v1494, 0.0
    %v1640 = vadd.f32 %v1638, %v1639
    %v1641 = vsel %vm503, %v1495, 0.0
    %v1642 = vadd.f32 %v1640, %v1641
    %v1643 = vsel %vm503, %v1496, 0.0
    %v1644 = vadd.f32 %v1642, %v1643
    %v1645 = vsel %vm503, %v1497, 0.0
    %v1646 = vadd.f32 %v1644, %v1645
    %v1647 = vsel %vm503, %v1498, 0.0
    %v1648 = vadd.f32 %v1646, %v1647
    %v1649 = vsel %vm503, %v1499, 0.0
    %v1650 = vadd.f32 %v1648, %v1649
    %v1651 = vsel %vm503, %v1500, 0.0
    %v1652 = vadd.f32 %v1650, %v1651
    %v1653 = vsel %vm503, %v1501, 0.0
    %v1654 = vadd.f32 %v1652, %v1653
    %v1655 = vsel %vm503, %v1502, 0.0
    %v1656 = vadd.f32 %v1654, %v1655
    %v1657 = vsel %vm503, %v1503, 0.0
    %v1658 = vadd.f32 %v1656, %v1657
    %v1659 = vsel %vm503, %v1504, 0.0
    %v1660 = vadd.f32 %v1658, %v1659
    %v1661 = vsel %vm503, %v1505, 0.0
    %v1662 = vadd.f32 %v1660, %v1661
    %v1663 = vsel %vm503, %v1506, 0.0
    %v1664 = vadd.f32 %v1662, %v1663
    %v1665 = vsel %vm503, %v1507, 0.0
    %v1666 = vadd.f32 %v1664, %v1665
    %v1667 = vsel %vm503, %v1508, 0.0
    %v1668 = vadd.f32 %v1666, %v1667
    %v1669 = vsel %vm503, %v1509, 0.0
    %v1670 = vadd.f32 %v1668, %v1669
    %v1671 = vsel %vm503, %v1510, 0.0
    %v1672 = vadd.f32 %v1670, %v1671
    %v1673 = vsel %vm503, %v1511, 0.0
    %v1674 = vadd.f32 %v1672, %v1673
    %v1675 = vsel %vm503, %v1512, 0.0
    %v1676 = vadd.f32 %v1674, %v1675
    %v1677 = vsel %vm503, %v1513, 0.0
    %v1678 = vadd.f32 %v1676, %v1677
    %v1679 = vsel %vm503, %v1514, 0.0
    %v1680 = vadd.f32 %v1678, %v1679
    %v1681 = vsel %vm503, %v1515, 0.0
    %v1682 = vadd.f32 %v1680, %v1681
    %v1683 = vsel %vm503, %v1516, 0.0
    %v1684 = vadd.f32 %v1682, %v1683
    %v1685 = vsel %vm503, %v1517, 0.0
    %v1686 = vadd.f32 %v1684, %v1685
    %v1687 = vsel %vm503, %v1518, 0.0
    %v1688 = vadd.f32 %v1686, %v1687
    %v1689 = vsel %vm503, %v1519, 0.0
    %v1690 = vadd.f32 %v1688, %v1689
    %v1691 = vsel %vm503, %v1520, 0.0
    %v1692 = vadd.f32 %v1690, %v1691
    %v1693 = vsel %vm503, %v1521, 0.0
    %v1694 = vadd.f32 %v1692, %v1693
    %v1695 = vsel %vm503, %v1522, 0.0
    %v1696 = vadd.f32 %v1694, %v1695
    %v1697 = vsel %vm503, %v1523, 0.0
    %v1698 = vadd.f32 %v1696, %v1697
    %v1699 = vsel %vm503, %v1524, 0.0
    %v1700 = vadd.f32 %v1698, %v1699
    %v1701 = vsel %vm503, %v1525, 0.0
    %v1702 = vadd.f32 %v1700, %v1701
    %v1703 = vsel %vm503, %v1526, 0.0
    %v1704 = vadd.f32 %v1702, %v1703
    %v1705 = vsel %vm503, %v1527, 0.0
    %v1706 = vadd.f32 %v1704, %v1705
    %v1707 = vsel %vm503, %v1528, 0.0
    %v1708 = vadd.f32 %v1706, %v1707
    %v1709 = vsel %vm503, %v1529, 0.0
    %v1710 = vadd.f32 %v1708, %v1709
    %v1711 = vsel %vm503, %v1530, 0.0
    %v1712 = vadd.f32 %v1710, %v1711
    %v1713 = vsel %vm503, %v1531, 0.0
    %v1714 = vadd.f32 %v1712, %v1713
    %v1715 = vsel %vm503, %v1532, 0.0
    %v1716 = vadd.f32 %v1714, %v1715
    %v1717 = vsel %vm503, %v1533, 0.0
    %v1718 = vadd.f32 %v1716, %v1717
    %v1719 = vsel %vm503, %v1534, 0.0
    %v1720 = vadd.f32 %v1718, %v1719
    %v1721 = vsel %vm503, %v1535, 0.0
    %v1722 = vadd.f32 %v1720, %v1721
    %v1723 = vsel %vm503, %v1536, 0.0
    %v1724 = vadd.f32 %v1722, %v1723
    %v1725 = vsel %vm503, %v1537, 0.0
    %v1726 = vadd.f32 %v1724, %v1725
    %v1727 = vsel %vm503, %v1538, 0.0
    %v1728 = vadd.f32 %v1726, %v1727
    %v1729 = vsel %vm503, %v1539, 0.0
    %v1730 = vadd.f32 %v1728, %v1729
    %v1731 = vsel %vm503, %v1540, 0.0
    %v1732 = vadd.f32 %v1730, %v1731
    %v1733 = vsel %vm503, %v1541, 0.0
    %v1734 = vadd.f32 %v1732, %v1733
    %v1735 = vsel %vm503, %v1542, 0.0
    %v1736 = vadd.f32 %v1734, %v1735
    %v1737 = vsel %vm503, %v1543, 0.0
    %v1738 = vadd.f32 %v1736, %v1737
    %v1739 = vsel %vm503, %v1544, 0.0
    %v1740 = vadd.f32 %v1738, %v1739
    %v1741 = vsel %vm503, %v1545, 0.0
    %v1742 = vadd.f32 %v1740, %v1741
    %v1743 = vsel %vm503, %v1546, 0.0
    %v1744 = vadd.f32 %v1742, %v1743
    %v1745 = vsel %vm503, %v1547, 0.0
    %v1746 = vadd.f32 %v1744, %v1745
    %v1747 = vsel %vm503, %v1548, 0.0
    %v1748 = vadd.f32 %v1746, %v1747
    %v1749 = vsel %vm503, %v1549, 0.0
    %v1750 = vadd.f32 %v1748, %v1749
    %v1751 = vsel %vm503, %v1550, 0.0
    %v1752 = vadd.f32 %v1750, %v1751
    %v1753 = vsel %vm503, %v1551, 0.0
    %v1754 = vadd.f32 %v1752, %v1753
    %v1755 = vsel %vm503, %v1552, 0.0
    %v1756 = vadd.f32 %v1754, %v1755
    %v1757 = vsel %vm503, %v1553, 0.0
    %v1758 = vadd.f32 %v1756, %v1757
    %v1759 = vsel %vm503, %v1554, 0.0
    %v1760 = vadd.f32 %v1758, %v1759
    %v1761 = vsel %vm503, %v1555, 0.0
    %v1762 = vadd.f32 %v1760, %v1761
    %v1763 = vsel %vm503, %v1556, 0.0
    %v1764 = vadd.f32 %v1762, %v1763
    %v1765 = vsel %vm503, %v1557, 0.0
    %v1766 = vadd.f32 %v1764, %v1765
    %v1767 = vsel %vm503, %v1558, 0.0
    %v1768 = vadd.f32 %v1766, %v1767
    %v1769 = vsel %vm503, %v1559, 0.0
    %v1770 = vadd.f32 %v1768, %v1769
    %v1771 = vsel %vm503, %v1560, 0.0
    %v1772 = vadd.f32 %v1770, %v1771
    %v1773 = vsel %vm503, %v1561, 0.0
    %v1774 = vadd.f32 %v1772, %v1773
    %v1775 = vsel %vm503, %v1562, 0.0
    %v1776 = vadd.f32 %v1774, %v1775
    %v1777 = vsel %vm503, %v1563, 0.0
    %v1778 = vadd.f32 %v1776, %v1777
    %v1779 = vsel %vm503, %v1564, 0.0
    %v1780 = vadd.f32 %v1778, %v1779
    %v1781 = vsel %vm503, %v1565, 0.0
    %v1782 = vadd.f32 %v1780, %v1781
    %v1783 = vsel %vm503, %v1566, 0.0
    %v1784 = vadd.f32 %v1782, %v1783
    %v1785 = vsel %vm503, %v1567, 0.0
    %v1786 = vadd.f32 %v1784, %v1785
    %v1787 = vsel %vm503, %v1568, 0.0
    %v1788 = vadd.f32 %v1786, %v1787
    %v1789 = vsel %vm503, %v1569, 0.0
    %v1790 = vadd.f32 %v1788, %v1789
    %v1791 = vsel %vm503, %v1570, 0.0
    %v1792 = vadd.f32 %v1790, %v1791
    %v1793 = vsel %vm503, %v1571, 0.0
    %v1794 = vadd.f32 %v1792, %v1793
    %v1795 = vsel %vm503, %v1572, 0.0
    %v1796 = vadd.f32 %v1794, %v1795
    %v1797 = vsel %vm503, %v1573, 0.0
    %v1798 = vadd.f32 %v1796, %v1797
    %v1799 = vrot.slane %v1798, 4
    %v1800 = vadd.f32 %v1798, %v1799
    %v1801 = vrot.slane %v1800, 2
    %v1802 = vadd.f32 %v1800, %v1801
    %v1803 = vrot.slane %v1802, 1
    %v1804 = vadd.f32 %v1802, %v1803
    %v1805 = vmul.f32 %v1804, 0.0011160715
    %v1806 = vmul.f32 %v1462, %v1462
    %v1807 = vmul.f32 %v1463, %v1463
    %v1808 = vmul.f32 %v1464, %v1464
    %v1809 = vmul.f32 %v1465, %v1465
    %v1810 = vmul.f32 %v1466, %v1466
    %v1811 = vmul.f32 %v1467, %v1467
    %v1812 = vmul.f32 %v1468, %v1468
    %v1813 = vmul.f32 %v1469, %v1469
    %v1814 = vmul.f32 %v1470, %v1470
    %v1815 = vmul.f32 %v1471, %v1471
    %v1816 = vmul.f32 %v1472, %v1472
    %v1817 = vmul.f32 %v1473, %v1473
    %v1818 = vmul.f32 %v1474, %v1474
    %v1819 = vmul.f32 %v1475, %v1475
    %v1820 = vmul.f32 %v1476, %v1476
    %v1821 = vmul.f32 %v1477, %v1477
    %v1822 = vmul.f32 %v1478, %v1478
    %v1823 = vmul.f32 %v1479, %v1479
    %v1824 = vmul.f32 %v1480, %v1480
    %v1825 = vmul.f32 %v1481, %v1481
    %v1826 = vmul.f32 %v1482, %v1482
    %v1827 = vmul.f32 %v1483, %v1483
    %v1828 = vmul.f32 %v1484, %v1484
    %v1829 = vmul.f32 %v1485, %v1485
    %v1830 = vmul.f32 %v1486, %v1486
    %v1831 = vmul.f32 %v1487, %v1487
    %v1832 = vmul.f32 %v1488, %v1488
    %v1833 = vmul.f32 %v1489, %v1489
    %v1834 = vmul.f32 %v1490, %v1490
    %v1835 = vmul.f32 %v1491, %v1491
    %v1836 = vmul.f32 %v1492, %v1492
    %v1837 = vmul.f32 %v1493, %v1493
    %v1838 = vmul.f32 %v1494, %v1494
    %v1839 = vmul.f32 %v1495, %v1495
    %v1840 = vmul.f32 %v1496, %v1496
    %v1841 = vmul.f32 %v1497, %v1497
    %v1842 = vmul.f32 %v1498, %v1498
    %v1843 = vmul.f32 %v1499, %v1499
    %v1844 = vmul.f32 %v1500, %v1500
    %v1845 = vmul.f32 %v1501, %v1501
    %v1846 = vmul.f32 %v1502, %v1502
    %v1847 = vmul.f32 %v1503, %v1503
    %v1848 = vmul.f32 %v1504, %v1504
    %v1849 = vmul.f32 %v1505, %v1505
    %v1850 = vmul.f32 %v1506, %v1506
    %v1851 = vmul.f32 %v1507, %v1507
    %v1852 = vmul.f32 %v1508, %v1508
    %v1853 = vmul.f32 %v1509, %v1509
    %v1854 = vmul.f32 %v1510, %v1510
    %v1855 = vmul.f32 %v1511, %v1511
    %v1856 = vmul.f32 %v1512, %v1512
    %v1857 = vmul.f32 %v1513, %v1513
    %v1858 = vmul.f32 %v1514, %v1514
    %v1859 = vmul.f32 %v1515, %v1515
    %v1860 = vmul.f32 %v1516, %v1516
    %v1861 = vmul.f32 %v1517, %v1517
    %v1862 = vmul.f32 %v1518, %v1518
    %v1863 = vmul.f32 %v1519, %v1519
    %v1864 = vmul.f32 %v1520, %v1520
    %v1865 = vmul.f32 %v1521, %v1521
    %v1866 = vmul.f32 %v1522, %v1522
    %v1867 = vmul.f32 %v1523, %v1523
    %v1868 = vmul.f32 %v1524, %v1524
    %v1869 = vmul.f32 %v1525, %v1525
    %v1870 = vmul.f32 %v1526, %v1526
    %v1871 = vmul.f32 %v1527, %v1527
    %v1872 = vmul.f32 %v1528, %v1528
    %v1873 = vmul.f32 %v1529, %v1529
    %v1874 = vmul.f32 %v1530, %v1530
    %v1875 = vmul.f32 %v1531, %v1531
    %v1876 = vmul.f32 %v1532, %v1532
    %v1877 = vmul.f32 %v1533, %v1533
    %v1878 = vmul.f32 %v1534, %v1534
    %v1879 = vmul.f32 %v1535, %v1535
    %v1880 = vmul.f32 %v1536, %v1536
    %v1881 = vmul.f32 %v1537, %v1537
    %v1882 = vmul.f32 %v1538, %v1538
    %v1883 = vmul.f32 %v1539, %v1539
    %v1884 = vmul.f32 %v1540, %v1540
    %v1885 = vmul.f32 %v1541, %v1541
    %v1886 = vmul.f32 %v1542, %v1542
    %v1887 = vmul.f32 %v1543, %v1543
    %v1888 = vmul.f32 %v1544, %v1544
    %v1889 = vmul.f32 %v1545, %v1545
    %v1890 = vmul.f32 %v1546, %v1546
    %v1891 = vmul.f32 %v1547, %v1547
    %v1892 = vmul.f32 %v1548, %v1548
    %v1893 = vmul.f32 %v1549, %v1549
    %v1894 = vmul.f32 %v1550, %v1550
    %v1895 = vmul.f32 %v1551, %v1551
    %v1896 = vmul.f32 %v1552, %v1552
    %v1897 = vmul.f32 %v1553, %v1553
    %v1898 = vmul.f32 %v1554, %v1554
    %v1899 = vmul.f32 %v1555, %v1555
    %v1900 = vmul.f32 %v1556, %v1556
    %v1901 = vmul.f32 %v1557, %v1557
    %v1902 = vmul.f32 %v1558, %v1558
    %v1903 = vmul.f32 %v1559, %v1559
    %v1904 = vmul.f32 %v1560, %v1560
    %v1905 = vmul.f32 %v1561, %v1561
    %v1906 = vmul.f32 %v1562, %v1562
    %v1907 = vmul.f32 %v1563, %v1563
    %v1908 = vmul.f32 %v1564, %v1564
    %v1909 = vmul.f32 %v1565, %v1565
    %v1910 = vmul.f32 %v1566, %v1566
    %v1911 = vmul.f32 %v1567, %v1567
    %v1912 = vmul.f32 %v1568, %v1568
    %v1913 = vmul.f32 %v1569, %v1569
    %v1914 = vmul.f32 %v1570, %v1570
    %v1915 = vmul.f32 %v1571, %v1571
    %v1916 = vmul.f32 %v1572, %v1572
    %v1917 = vmul.f32 %v1573, %v1573
    %v1918 = vsel %vm503, %v1806, 0.0
    %v1919 = vsel %vm503, %v1807, 0.0
    %v1920 = vadd.f32 %v1918, %v1919
    %v1921 = vsel %vm503, %v1808, 0.0
    %v1922 = vadd.f32 %v1920, %v1921
    %v1923 = vsel %vm503, %v1809, 0.0
    %v1924 = vadd.f32 %v1922, %v1923
    %v1925 = vsel %vm503, %v1810, 0.0
    %v1926 = vadd.f32 %v1924, %v1925
    %v1927 = vsel %vm503, %v1811, 0.0
    %v1928 = vadd.f32 %v1926, %v1927
    %v1929 = vsel %vm503, %v1812, 0.0
    %v1930 = vadd.f32 %v1928, %v1929
    %v1931 = vsel %vm503, %v1813, 0.0
    %v1932 = vadd.f32 %v1930, %v1931
    %v1933 = vsel %vm503, %v1814, 0.0
    %v1934 = vadd.f32 %v1932, %v1933
    %v1935 = vsel %vm503, %v1815, 0.0
    %v1936 = vadd.f32 %v1934, %v1935
    %v1937 = vsel %vm503, %v1816, 0.0
    %v1938 = vadd.f32 %v1936, %v1937
    %v1939 = vsel %vm503, %v1817, 0.0
    %v1940 = vadd.f32 %v1938, %v1939
    %v1941 = vsel %vm503, %v1818, 0.0
    %v1942 = vadd.f32 %v1940, %v1941
    %v1943 = vsel %vm503, %v1819, 0.0
    %v1944 = vadd.f32 %v1942, %v1943
    %v1945 = vsel %vm503, %v1820, 0.0
    %v1946 = vadd.f32 %v1944, %v1945
    %v1947 = vsel %vm503, %v1821, 0.0
    %v1948 = vadd.f32 %v1946, %v1947
    %v1949 = vsel %vm503, %v1822, 0.0
    %v1950 = vadd.f32 %v1948, %v1949
    %v1951 = vsel %vm503, %v1823, 0.0
    %v1952 = vadd.f32 %v1950, %v1951
    %v1953 = vsel %vm503, %v1824, 0.0
    %v1954 = vadd.f32 %v1952, %v1953
    %v1955 = vsel %vm503, %v1825, 0.0
    %v1956 = vadd.f32 %v1954, %v1955
    %v1957 = vsel %vm503, %v1826, 0.0
    %v1958 = vadd.f32 %v1956, %v1957
    %v1959 = vsel %vm503, %v1827, 0.0
    %v1960 = vadd.f32 %v1958, %v1959
    %v1961 = vsel %vm503, %v1828, 0.0
    %v1962 = vadd.f32 %v1960, %v1961
    %v1963 = vsel %vm503, %v1829, 0.0
    %v1964 = vadd.f32 %v1962, %v1963
    %v1965 = vsel %vm503, %v1830, 0.0
    %v1966 = vadd.f32 %v1964, %v1965
    %v1967 = vsel %vm503, %v1831, 0.0
    %v1968 = vadd.f32 %v1966, %v1967
    %v1969 = vsel %vm503, %v1832, 0.0
    %v1970 = vadd.f32 %v1968, %v1969
    %v1971 = vsel %vm503, %v1833, 0.0
    %v1972 = vadd.f32 %v1970, %v1971
    %v1973 = vsel %vm503, %v1834, 0.0
    %v1974 = vadd.f32 %v1972, %v1973
    %v1975 = vsel %vm503, %v1835, 0.0
    %v1976 = vadd.f32 %v1974, %v1975
    %v1977 = vsel %vm503, %v1836, 0.0
    %v1978 = vadd.f32 %v1976, %v1977
    %v1979 = vsel %vm503, %v1837, 0.0
    %v1980 = vadd.f32 %v1978, %v1979
    %v1981 = vsel %vm503, %v1838, 0.0
    %v1982 = vadd.f32 %v1980, %v1981
    %v1983 = vsel %vm503, %v1839, 0.0
    %v1984 = vadd.f32 %v1982, %v1983
    %v1985 = vsel %vm503, %v1840, 0.0
    %v1986 = vadd.f32 %v1984, %v1985
    %v1987 = vsel %vm503, %v1841, 0.0
    %v1988 = vadd.f32 %v1986, %v1987
    %v1989 = vsel %vm503, %v1842, 0.0
    %v1990 = vadd.f32 %v1988, %v1989
    %v1991 = vsel %vm503, %v1843, 0.0
    %v1992 = vadd.f32 %v1990, %v1991
    %v1993 = vsel %vm503, %v1844, 0.0
    %v1994 = vadd.f32 %v1992, %v1993
    %v1995 = vsel %vm503, %v1845, 0.0
    %v1996 = vadd.f32 %v1994, %v1995
    %v1997 = vsel %vm503, %v1846, 0.0
    %v1998 = vadd.f32 %v1996, %v1997
    %v1999 = vsel %vm503, %v1847, 0.0
    %v2000 = vadd.f32 %v1998, %v1999
    %v2001 = vsel %vm503, %v1848, 0.0
    %v2002 = vadd.f32 %v2000, %v2001
    %v2003 = vsel %vm503, %v1849, 0.0
    %v2004 = vadd.f32 %v2002, %v2003
    %v2005 = vsel %vm503, %v1850, 0.0
    %v2006 = vadd.f32 %v2004, %v2005
    %v2007 = vsel %vm503, %v1851, 0.0
    %v2008 = vadd.f32 %v2006, %v2007
    %v2009 = vsel %vm503, %v1852, 0.0
    %v2010 = vadd.f32 %v2008, %v2009
    %v2011 = vsel %vm503, %v1853, 0.0
    %v2012 = vadd.f32 %v2010, %v2011
    %v2013 = vsel %vm503, %v1854, 0.0
    %v2014 = vadd.f32 %v2012, %v2013
    %v2015 = vsel %vm503, %v1855, 0.0
    %v2016 = vadd.f32 %v2014, %v2015
    %v2017 = vsel %vm503, %v1856, 0.0
    %v2018 = vadd.f32 %v2016, %v2017
    %v2019 = vsel %vm503, %v1857, 0.0
    %v2020 = vadd.f32 %v2018, %v2019
    %v2021 = vsel %vm503, %v1858, 0.0
    %v2022 = vadd.f32 %v2020, %v2021
    %v2023 = vsel %vm503, %v1859, 0.0
    %v2024 = vadd.f32 %v2022, %v2023
    %v2025 = vsel %vm503, %v1860, 0.0
    %v2026 = vadd.f32 %v2024, %v2025
    %v2027 = vsel %vm503, %v1861, 0.0
    %v2028 = vadd.f32 %v2026, %v2027
    %v2029 = vsel %vm503, %v1862, 0.0
    %v2030 = vadd.f32 %v2028, %v2029
    %v2031 = vsel %vm503, %v1863, 0.0
    %v2032 = vadd.f32 %v2030, %v2031
    %v2033 = vsel %vm503, %v1864, 0.0
    %v2034 = vadd.f32 %v2032, %v2033
    %v2035 = vsel %vm503, %v1865, 0.0
    %v2036 = vadd.f32 %v2034, %v2035
    %v2037 = vsel %vm503, %v1866, 0.0
    %v2038 = vadd.f32 %v2036, %v2037
    %v2039 = vsel %vm503, %v1867, 0.0
    %v2040 = vadd.f32 %v2038, %v2039
    %v2041 = vsel %vm503, %v1868, 0.0
    %v2042 = vadd.f32 %v2040, %v2041
    %v2043 = vsel %vm503, %v1869, 0.0
    %v2044 = vadd.f32 %v2042, %v2043
    %v2045 = vsel %vm503, %v1870, 0.0
    %v2046 = vadd.f32 %v2044, %v2045
    %v2047 = vsel %vm503, %v1871, 0.0
    %v2048 = vadd.f32 %v2046, %v2047
    %v2049 = vsel %vm503, %v1872, 0.0
    %v2050 = vadd.f32 %v2048, %v2049
    %v2051 = vsel %vm503, %v1873, 0.0
    %v2052 = vadd.f32 %v2050, %v2051
    %v2053 = vsel %vm503, %v1874, 0.0
    %v2054 = vadd.f32 %v2052, %v2053
    %v2055 = vsel %vm503, %v1875, 0.0
    %v2056 = vadd.f32 %v2054, %v2055
    %v2057 = vsel %vm503, %v1876, 0.0
    %v2058 = vadd.f32 %v2056, %v2057
    %v2059 = vsel %vm503, %v1877, 0.0
    %v2060 = vadd.f32 %v2058, %v2059
    %v2061 = vsel %vm503, %v1878, 0.0
    %v2062 = vadd.f32 %v2060, %v2061
    %v2063 = vsel %vm503, %v1879, 0.0
    %v2064 = vadd.f32 %v2062, %v2063
    %v2065 = vsel %vm503, %v1880, 0.0
    %v2066 = vadd.f32 %v2064, %v2065
    %v2067 = vsel %vm503, %v1881, 0.0
    %v2068 = vadd.f32 %v2066, %v2067
    %v2069 = vsel %vm503, %v1882, 0.0
    %v2070 = vadd.f32 %v2068, %v2069
    %v2071 = vsel %vm503, %v1883, 0.0
    %v2072 = vadd.f32 %v2070, %v2071
    %v2073 = vsel %vm503, %v1884, 0.0
    %v2074 = vadd.f32 %v2072, %v2073
    %v2075 = vsel %vm503, %v1885, 0.0
    %v2076 = vadd.f32 %v2074, %v2075
    %v2077 = vsel %vm503, %v1886, 0.0
    %v2078 = vadd.f32 %v2076, %v2077
    %v2079 = vsel %vm503, %v1887, 0.0
    %v2080 = vadd.f32 %v2078, %v2079
    %v2081 = vsel %vm503, %v1888, 0.0
    %v2082 = vadd.f32 %v2080, %v2081
    %v2083 = vsel %vm503, %v1889, 0.0
    %v2084 = vadd.f32 %v2082, %v2083
    %v2085 = vsel %vm503, %v1890, 0.0
    %v2086 = vadd.f32 %v2084, %v2085
    %v2087 = vsel %vm503, %v1891, 0.0
    %v2088 = vadd.f32 %v2086, %v2087
    %v2089 = vsel %vm503, %v1892, 0.0
    %v2090 = vadd.f32 %v2088, %v2089
    %v2091 = vsel %vm503, %v1893, 0.0
    %v2092 = vadd.f32 %v2090, %v2091
    %v2093 = vsel %vm503, %v1894, 0.0
    %v2094 = vadd.f32 %v2092, %v2093
    %v2095 = vsel %vm503, %v1895, 0.0
    %v2096 = vadd.f32 %v2094, %v2095
    %v2097 = vsel %vm503, %v1896, 0.0
    %v2098 = vadd.f32 %v2096, %v2097
    %v2099 = vsel %vm503, %v1897, 0.0
    %v2100 = vadd.f32 %v2098, %v2099
    %v2101 = vsel %vm503, %v1898, 0.0
    %v2102 = vadd.f32 %v2100, %v2101
    %v2103 = vsel %vm503, %v1899, 0.0
    %v2104 = vadd.f32 %v2102, %v2103
    %v2105 = vsel %vm503, %v1900, 0.0
    %v2106 = vadd.f32 %v2104, %v2105
    %v2107 = vsel %vm503, %v1901, 0.0
    %v2108 = vadd.f32 %v2106, %v2107
    %v2109 = vsel %vm503, %v1902, 0.0
    %v2110 = vadd.f32 %v2108, %v2109
    %v2111 = vsel %vm503, %v1903, 0.0
    %v2112 = vadd.f32 %v2110, %v2111
    %v2113 = vsel %vm503, %v1904, 0.0
    %v2114 = vadd.f32 %v2112, %v2113
    %v2115 = vsel %vm503, %v1905, 0.0
    %v2116 = vadd.f32 %v2114, %v2115
    %v2117 = vsel %vm503, %v1906, 0.0
    %v2118 = vadd.f32 %v2116, %v2117
    %v2119 = vsel %vm503, %v1907, 0.0
    %v2120 = vadd.f32 %v2118, %v2119
    %v2121 = vsel %vm503, %v1908, 0.0
    %v2122 = vadd.f32 %v2120, %v2121
    %v2123 = vsel %vm503, %v1909, 0.0
    %v2124 = vadd.f32 %v2122, %v2123
    %v2125 = vsel %vm503, %v1910, 0.0
    %v2126 = vadd.f32 %v2124, %v2125
    %v2127 = vsel %vm503, %v1911, 0.0
    %v2128 = vadd.f32 %v2126, %v2127
    %v2129 = vsel %vm503, %v1912, 0.0
    %v2130 = vadd.f32 %v2128, %v2129
    %v2131 = vsel %vm503, %v1913, 0.0
    %v2132 = vadd.f32 %v2130, %v2131
    %v2133 = vsel %vm503, %v1914, 0.0
    %v2134 = vadd.f32 %v2132, %v2133
    %v2135 = vsel %vm503, %v1915, 0.0
    %v2136 = vadd.f32 %v2134, %v2135
    %v2137 = vsel %vm503, %v1916, 0.0
    %v2138 = vadd.f32 %v2136, %v2137
    %v2139 = vsel %vm503, %v1917, 0.0
    %v2140 = vadd.f32 %v2138, %v2139
    %v2141 = vrot.slane %v2140, 4
    %v2142 = vadd.f32 %v2140, %v2141
    %v2143 = vrot.slane %v2142, 2
    %v2144 = vadd.f32 %v2142, %v2143
    %v2145 = vrot.slane %v2144, 1
    %v2146 = vadd.f32 %v2144, %v2145
    %v2147 = vmul.f32 %v2146, 0.0011160715
    %v2148 = vmul.f32 %v1805, %v1805
    %v2149 = vsub.f32 %v2147, %v2148
    %v2150 = vadd.f32 %v2149, 1e-05
    %v2151 = vrsqrt.pop %v2150
    %v2152 = vmul.f32 %v2151, %v2150
    %v2153 = vmul.f32 %v2152, %v2151
    %v2154 = vmul.f32 0.5, %v2153
    %v2155 = vsub.f32 1.5, %v2154
    %v2156 = vmul.f32 %v2151, %v2155
    %vm2157 = vweird.f32 %v2150
    %vm2158 = vweird.f32 %v2151
    %vm2159 = vmor %vm2157, %vm2158
    %v2160 = vsel %vm2159, %v2151, %v2156
    %v2161 = vmul.f32 %v1574, %v2160
    %v2162 = vmul.f32 %v1805, %v2161
    %v2163 = vsub.f32 %v1575, %v2162
    %v2165 = vperm.slane %v2161, 0
    %v2167 = vmul.f32 %v1462, %v2165
    %v2168 = vmul.f32 %v1463, %v2165
    %v2169 = vmul.f32 %v1464, %v2165
    %v2170 = vmul.f32 %v1465, %v2165
    %v2171 = vmul.f32 %v1466, %v2165
    %v2172 = vmul.f32 %v1467, %v2165
    %v2173 = vmul.f32 %v1468, %v2165
    %v2174 = vmul.f32 %v1469, %v2165
    %v2175 = vmul.f32 %v1470, %v2165
    %v2176 = vmul.f32 %v1471, %v2165
    %v2177 = vmul.f32 %v1472, %v2165
    %v2178 = vmul.f32 %v1473, %v2165
    %v2179 = vmul.f32 %v1474, %v2165
    %v2180 = vmul.f32 %v1475, %v2165
    %v2181 = vmul.f32 %v1476, %v2165
    %v2182 = vmul.f32 %v1477, %v2165
    %v2183 = vmul.f32 %v1478, %v2165
    %v2184 = vmul.f32 %v1479, %v2165
    %v2185 = vmul.f32 %v1480, %v2165
    %v2186 = vmul.f32 %v1481, %v2165
    %v2187 = vmul.f32 %v1482, %v2165
    %v2188 = vmul.f32 %v1483, %v2165
    %v2189 = vmul.f32 %v1484, %v2165
    %v2190 = vmul.f32 %v1485, %v2165
    %v2191 = vmul.f32 %v1486, %v2165
    %v2192 = vmul.f32 %v1487, %v2165
    %v2193 = vmul.f32 %v1488, %v2165
    %v2194 = vmul.f32 %v1489, %v2165
    %v2195 = vmul.f32 %v1490, %v2165
    %v2196 = vmul.f32 %v1491, %v2165
    %v2197 = vmul.f32 %v1492, %v2165
    %v2198 = vmul.f32 %v1493, %v2165
    %v2199 = vmul.f32 %v1494, %v2165
    %v2200 = vmul.f32 %v1495, %v2165
    %v2201 = vmul.f32 %v1496, %v2165
    %v2202 = vmul.f32 %v1497, %v2165
    %v2203 = vmul.f32 %v1498, %v2165
    %v2204 = vmul.f32 %v1499, %v2165
    %v2205 = vmul.f32 %v1500, %v2165
    %v2206 = vmul.f32 %v1501, %v2165
    %v2207 = vmul.f32 %v1502, %v2165
    %v2208 = vmul.f32 %v1503, %v2165
    %v2209 = vmul.f32 %v1504, %v2165
    %v2210 = vmul.f32 %v1505, %v2165
    %v2211 = vmul.f32 %v1506, %v2165
    %v2212 = vmul.f32 %v1507, %v2165
    %v2213 = vmul.f32 %v1508, %v2165
    %v2214 = vmul.f32 %v1509, %v2165
    %v2215 = vmul.f32 %v1510, %v2165
    %v2216 = vmul.f32 %v1511, %v2165
    %v2217 = vmul.f32 %v1512, %v2165
    %v2218 = vmul.f32 %v1513, %v2165
    %v2219 = vmul.f32 %v1514, %v2165
    %v2220 = vmul.f32 %v1515, %v2165
    %v2221 = vmul.f32 %v1516, %v2165
    %v2222 = vmul.f32 %v1517, %v2165
    %v2223 = vmul.f32 %v1518, %v2165
    %v2224 = vmul.f32 %v1519, %v2165
    %v2225 = vmul.f32 %v1520, %v2165
    %v2226 = vmul.f32 %v1521, %v2165
    %v2227 = vmul.f32 %v1522, %v2165
    %v2228 = vmul.f32 %v1523, %v2165
    %v2229 = vmul.f32 %v1524, %v2165
    %v2230 = vmul.f32 %v1525, %v2165
    %v2231 = vmul.f32 %v1526, %v2165
    %v2232 = vmul.f32 %v1527, %v2165
    %v2233 = vmul.f32 %v1528, %v2165
    %v2234 = vmul.f32 %v1529, %v2165
    %v2235 = vmul.f32 %v1530, %v2165
    %v2236 = vmul.f32 %v1531, %v2165
    %v2237 = vmul.f32 %v1532, %v2165
    %v2238 = vmul.f32 %v1533, %v2165
    %v2239 = vmul.f32 %v1534, %v2165
    %v2240 = vmul.f32 %v1535, %v2165
    %v2241 = vmul.f32 %v1536, %v2165
    %v2242 = vmul.f32 %v1537, %v2165
    %v2243 = vmul.f32 %v1538, %v2165
    %v2244 = vmul.f32 %v1539, %v2165
    %v2245 = vmul.f32 %v1540, %v2165
    %v2246 = vmul.f32 %v1541, %v2165
    %v2247 = vmul.f32 %v1542, %v2165
    %v2248 = vmul.f32 %v1543, %v2165
    %v2249 = vmul.f32 %v1544, %v2165
    %v2250 = vmul.f32 %v1545, %v2165
    %v2251 = vmul.f32 %v1546, %v2165
    %v2252 = vmul.f32 %v1547, %v2165
    %v2253 = vmul.f32 %v1548, %v2165
    %v2254 = vmul.f32 %v1549, %v2165
    %v2255 = vmul.f32 %v1550, %v2165
    %v2256 = vmul.f32 %v1551, %v2165
    %v2257 = vmul.f32 %v1552, %v2165
    %v2258 = vmul.f32 %v1553, %v2165
    %v2259 = vmul.f32 %v1554, %v2165
    %v2260 = vmul.f32 %v1555, %v2165
    %v2261 = vmul.f32 %v1556, %v2165
    %v2262 = vmul.f32 %v1557, %v2165
    %v2263 = vmul.f32 %v1558, %v2165
    %v2264 = vmul.f32 %v1559, %v2165
    %v2265 = vmul.f32 %v1560, %v2165
    %v2266 = vmul.f32 %v1561, %v2165
    %v2267 = vmul.f32 %v1562, %v2165
    %v2268 = vmul.f32 %v1563, %v2165
    %v2269 = vmul.f32 %v1564, %v2165
    %v2270 = vmul.f32 %v1565, %v2165
    %v2271 = vmul.f32 %v1566, %v2165
    %v2272 = vmul.f32 %v1567, %v2165
    %v2273 = vmul.f32 %v1568, %v2165
    %v2274 = vmul.f32 %v1569, %v2165
    %v2275 = vmul.f32 %v1570, %v2165
    %v2276 = vmul.f32 %v1571, %v2165
    %v2277 = vmul.f32 %v1572, %v2165
    %v2278 = vmul.f32 %v1573, %v2165
    %v2280 = vperm.slane %v2163, 0
    %v2282 = vadd.f32 %v2167, %v2280
    %v2283 = vadd.f32 %v2168, %v2280
    %v2284 = vadd.f32 %v2169, %v2280
    %v2285 = vadd.f32 %v2170, %v2280
    %v2286 = vadd.f32 %v2171, %v2280
    %v2287 = vadd.f32 %v2172, %v2280
    %v2288 = vadd.f32 %v2173, %v2280
    %v2289 = vadd.f32 %v2174, %v2280
    %v2290 = vadd.f32 %v2175, %v2280
    %v2291 = vadd.f32 %v2176, %v2280
    %v2292 = vadd.f32 %v2177, %v2280
    %v2293 = vadd.f32 %v2178, %v2280
    %v2294 = vadd.f32 %v2179, %v2280
    %v2295 = vadd.f32 %v2180, %v2280
    %v2296 = vadd.f32 %v2181, %v2280
    %v2297 = vadd.f32 %v2182, %v2280
    %v2298 = vadd.f32 %v2183, %v2280
    %v2299 = vadd.f32 %v2184, %v2280
    %v2300 = vadd.f32 %v2185, %v2280
    %v2301 = vadd.f32 %v2186, %v2280
    %v2302 = vadd.f32 %v2187, %v2280
    %v2303 = vadd.f32 %v2188, %v2280
    %v2304 = vadd.f32 %v2189, %v2280
    %v2305 = vadd.f32 %v2190, %v2280
    %v2306 = vadd.f32 %v2191, %v2280
    %v2307 = vadd.f32 %v2192, %v2280
    %v2308 = vadd.f32 %v2193, %v2280
    %v2309 = vadd.f32 %v2194, %v2280
    %v2310 = vadd.f32 %v2195, %v2280
    %v2311 = vadd.f32 %v2196, %v2280
    %v2312 = vadd.f32 %v2197, %v2280
    %v2313 = vadd.f32 %v2198, %v2280
    %v2314 = vadd.f32 %v2199, %v2280
    %v2315 = vadd.f32 %v2200, %v2280
    %v2316 = vadd.f32 %v2201, %v2280
    %v2317 = vadd.f32 %v2202, %v2280
    %v2318 = vadd.f32 %v2203, %v2280
    %v2319 = vadd.f32 %v2204, %v2280
    %v2320 = vadd.f32 %v2205, %v2280
    %v2321 = vadd.f32 %v2206, %v2280
    %v2322 = vadd.f32 %v2207, %v2280
    %v2323 = vadd.f32 %v2208, %v2280
    %v2324 = vadd.f32 %v2209, %v2280
    %v2325 = vadd.f32 %v2210, %v2280
    %v2326 = vadd.f32 %v2211, %v2280
    %v2327 = vadd.f32 %v2212, %v2280
    %v2328 = vadd.f32 %v2213, %v2280
    %v2329 = vadd.f32 %v2214, %v2280
    %v2330 = vadd.f32 %v2215, %v2280
    %v2331 = vadd.f32 %v2216, %v2280
    %v2332 = vadd.f32 %v2217, %v2280
    %v2333 = vadd.f32 %v2218, %v2280
    %v2334 = vadd.f32 %v2219, %v2280
    %v2335 = vadd.f32 %v2220, %v2280
    %v2336 = vadd.f32 %v2221, %v2280
    %v2337 = vadd.f32 %v2222, %v2280
    %v2338 = vadd.f32 %v2223, %v2280
    %v2339 = vadd.f32 %v2224, %v2280
    %v2340 = vadd.f32 %v2225, %v2280
    %v2341 = vadd.f32 %v2226, %v2280
    %v2342 = vadd.f32 %v2227, %v2280
    %v2343 = vadd.f32 %v2228, %v2280
    %v2344 = vadd.f32 %v2229, %v2280
    %v2345 = vadd.f32 %v2230, %v2280
    %v2346 = vadd.f32 %v2231, %v2280
    %v2347 = vadd.f32 %v2232, %v2280
    %v2348 = vadd.f32 %v2233, %v2280
    %v2349 = vadd.f32 %v2234, %v2280
    %v2350 = vadd.f32 %v2235, %v2280
    %v2351 = vadd.f32 %v2236, %v2280
    %v2352 = vadd.f32 %v2237, %v2280
    %v2353 = vadd.f32 %v2238, %v2280
    %v2354 = vadd.f32 %v2239, %v2280
    %v2355 = vadd.f32 %v2240, %v2280
    %v2356 = vadd.f32 %v2241, %v2280
    %v2357 = vadd.f32 %v2242, %v2280
    %v2358 = vadd.f32 %v2243, %v2280
    %v2359 = vadd.f32 %v2244, %v2280
    %v2360 = vadd.f32 %v2245, %v2280
    %v2361 = vadd.f32 %v2246, %v2280
    %v2362 = vadd.f32 %v2247, %v2280
    %v2363 = vadd.f32 %v2248, %v2280
    %v2364 = vadd.f32 %v2249, %v2280
    %v2365 = vadd.f32 %v2250, %v2280
    %v2366 = vadd.f32 %v2251, %v2280
    %v2367 = vadd.f32 %v2252, %v2280
    %v2368 = vadd.f32 %v2253, %v2280
    %v2369 = vadd.f32 %v2254, %v2280
    %v2370 = vadd.f32 %v2255, %v2280
    %v2371 = vadd.f32 %v2256, %v2280
    %v2372 = vadd.f32 %v2257, %v2280
    %v2373 = vadd.f32 %v2258, %v2280
    %v2374 = vadd.f32 %v2259, %v2280
    %v2375 = vadd.f32 %v2260, %v2280
    %v2376 = vadd.f32 %v2261, %v2280
    %v2377 = vadd.f32 %v2262, %v2280
    %v2378 = vadd.f32 %v2263, %v2280
    %v2379 = vadd.f32 %v2264, %v2280
    %v2380 = vadd.f32 %v2265, %v2280
    %v2381 = vadd.f32 %v2266, %v2280
    %v2382 = vadd.f32 %v2267, %v2280
    %v2383 = vadd.f32 %v2268, %v2280
    %v2384 = vadd.f32 %v2269, %v2280
    %v2385 = vadd.f32 %v2270, %v2280
    %v2386 = vadd.f32 %v2271, %v2280
    %v2387 = vadd.f32 %v2272, %v2280
    %v2388 = vadd.f32 %v2273, %v2280
    %v2389 = vadd.f32 %v2274, %v2280
    %v2390 = vadd.f32 %v2275, %v2280
    %v2391 = vadd.f32 %v2276, %v2280
    %v2392 = vadd.f32 %v2277, %v2280
    %v2393 = vadd.f32 %v2278, %v2280
    %v2394 = vmax.f32 %v2282, 0.0
    %v2395 = vmax.f32 %v2283, 0.0
    %v2396 = vmax.f32 %v2284, 0.0
    %v2397 = vmax.f32 %v2285, 0.0
    %v2398 = vmax.f32 %v2286, 0.0
    %v2399 = vmax.f32 %v2287, 0.0
    %v2400 = vmax.f32 %v2288, 0.0
    %v2401 = vmax.f32 %v2289, 0.0
    %v2402 = vmax.f32 %v2290, 0.0
    %v2403 = vmax.f32 %v2291, 0.0
    %v2404 = vmax.f32 %v2292, 0.0
    %v2405 = vmax.f32 %v2293, 0.0
    %v2406 = vmax.f32 %v2294, 0.0
    %v2407 = vmax.f32 %v2295, 0.0
    %v2408 = vmax.f32 %v2296, 0.0
    %v2409 = vmax.f32 %v2297, 0.0
    %v2410 = vmax.f32 %v2298, 0.0
    %v2411 = vmax.f32 %v2299, 0.0
    %v2412 = vmax.f32 %v2300, 0.0
    %v2413 = vmax.f32 %v2301, 0.0
    %v2414 = vmax.f32 %v2302, 0.0
    %v2415 = vmax.f32 %v2303, 0.0
    %v2416 = vmax.f32 %v2304, 0.0
    %v2417 = vmax.f32 %v2305, 0.0
    %v2418 = vmax.f32 %v2306, 0.0
    %v2419 = vmax.f32 %v2307, 0.0
    %v2420 = vmax.f32 %v2308, 0.0
    %v2421 = vmax.f32 %v2309, 0.0
    %v2422 = vmax.f32 %v2310, 0.0
    %v2423 = vmax.f32 %v2311, 0.0
    %v2424 = vmax.f32 %v2312, 0.0
    %v2425 = vmax.f32 %v2313, 0.0
    %v2426 = vmax.f32 %v2314, 0.0
    %v2427 = vmax.f32 %v2315, 0.0
    %v2428 = vmax.f32 %v2316, 0.0
    %v2429 = vmax.f32 %v2317, 0.0
    %v2430 = vmax.f32 %v2318, 0.0
    %v2431 = vmax.f32 %v2319, 0.0
    %v2432 = vmax.f32 %v2320, 0.0
    %v2433 = vmax.f32 %v2321, 0.0
    %v2434 = vmax.f32 %v2322, 0.0
    %v2435 = vmax.f32 %v2323, 0.0
    %v2436 = vmax.f32 %v2324, 0.0
    %v2437 = vmax.f32 %v2325, 0.0
    %v2438 = vmax.f32 %v2326, 0.0
    %v2439 = vmax.f32 %v2327, 0.0
    %v2440 = vmax.f32 %v2328, 0.0
    %v2441 = vmax.f32 %v2329, 0.0
    %v2442 = vmax.f32 %v2330, 0.0
    %v2443 = vmax.f32 %v2331, 0.0
    %v2444 = vmax.f32 %v2332, 0.0
    %v2445 = vmax.f32 %v2333, 0.0
    %v2446 = vmax.f32 %v2334, 0.0
    %v2447 = vmax.f32 %v2335, 0.0
    %v2448 = vmax.f32 %v2336, 0.0
    %v2449 = vmax.f32 %v2337, 0.0
    %v2450 = vmax.f32 %v2338, 0.0
    %v2451 = vmax.f32 %v2339, 0.0
    %v2452 = vmax.f32 %v2340, 0.0
    %v2453 = vmax.f32 %v2341, 0.0
    %v2454 = vmax.f32 %v2342, 0.0
    %v2455 = vmax.f32 %v2343, 0.0
    %v2456 = vmax.f32 %v2344, 0.0
    %v2457 = vmax.f32 %v2345, 0.0
    %v2458 = vmax.f32 %v2346, 0.0
    %v2459 = vmax.f32 %v2347, 0.0
    %v2460 = vmax.f32 %v2348, 0.0
    %v2461 = vmax.f32 %v2349, 0.0
    %v2462 = vmax.f32 %v2350, 0.0
    %v2463 = vmax.f32 %v2351, 0.0
    %v2464 = vmax.f32 %v2352, 0.0
    %v2465 = vmax.f32 %v2353, 0.0
    %v2466 = vmax.f32 %v2354, 0.0
    %v2467 = vmax.f32 %v2355, 0.0
    %v2468 = vmax.f32 %v2356, 0.0
    %v2469 = vmax.f32 %v2357, 0.0
    %v2470 = vmax.f32 %v2358, 0.0
    %v2471 = vmax.f32 %v2359, 0.0
    %v2472 = vmax.f32 %v2360, 0.0
    %v2473 = vmax.f32 %v2361, 0.0
    %v2474 = vmax.f32 %v2362, 0.0
    %v2475 = vmax.f32 %v2363, 0.0
    %v2476 = vmax.f32 %v2364, 0.0
    %v2477 = vmax.f32 %v2365, 0.0
    %v2478 = vmax.f32 %v2366, 0.0
    %v2479 = vmax.f32 %v2367, 0.0
    %v2480 = vmax.f32 %v2368, 0.0
    %v2481 = vmax.f32 %v2369, 0.0
    %v2482 = vmax.f32 %v2370, 0.0
    %v2483 = vmax.f32 %v2371, 0.0
    %v2484 = vmax.f32 %v2372, 0.0
    %v2485 = vmax.f32 %v2373, 0.0
    %v2486 = vmax.f32 %v2374, 0.0
    %v2487 = vmax.f32 %v2375, 0.0
    %v2488 = vmax.f32 %v2376, 0.0
    %v2489 = vmax.f32 %v2377, 0.0
    %v2490 = vmax.f32 %v2378, 0.0
    %v2491 = vmax.f32 %v2379, 0.0
    %v2492 = vmax.f32 %v2380, 0.0
    %v2493 = vmax.f32 %v2381, 0.0
    %v2494 = vmax.f32 %v2382, 0.0
    %v2495 = vmax.f32 %v2383, 0.0
    %v2496 = vmax.f32 %v2384, 0.0
    %v2497 = vmax.f32 %v2385, 0.0
    %v2498 = vmax.f32 %v2386, 0.0
    %v2499 = vmax.f32 %v2387, 0.0
    %v2500 = vmax.f32 %v2388, 0.0
    %v2501 = vmax.f32 %v2389, 0.0
    %v2502 = vmax.f32 %v2390, 0.0
    %v2503 = vmax.f32 %v2391, 0.0
    %v2504 = vmax.f32 %v2392, 0.0
    %v2505 = vmax.f32 %v2393, 0.0
    %v2506 = vld [vmem:[%s16] sm:$0xff]
    %v2507 = vld [vmem:[%s16 + $0x8] sm:$0xff]
    %v2508 = vld [vmem:[%s17] sm:$0x1]
    %v2510 = vperm.slane %v2508, 0
    %v2513 = vsel %vm503, %v2394, 0
    %v2516 = vsel %vm503, %v2395, 0
    %v2519 = vsel %vm503, %v2396, 0
    %v2522 = vsel %vm503, %v2397, 0
    %v2525 = vsel %vm503, %v2398, 0
    %v2528 = vsel %vm503, %v2399, 0
    %v2531 = vsel %vm503, %v2400, 0
    %v2534 = vsel %vm503, %v2401, 0
    %v2537 = vsel %vm503, %v2402, 0
    %v2540 = vsel %vm503, %v2403, 0
    %v2543 = vsel %vm503, %v2404, 0
    %v2546 = vsel %vm503, %v2405, 0
    %v2549 = vsel %vm503, %v2406, 0
    %v2552 = vsel %vm503, %v2407, 0
    %v2555 = vsel %vm503, %v2408, 0
    %v2558 = vsel %vm503, %v2409, 0
    %v2561 = vsel %vm503, %v2410, 0
    %v2564 = vsel %vm503, %v2411, 0
    %v2567 = vsel %vm503, %v2412, 0
    %v2570 = vsel %vm503, %v2413, 0
    %v2573 = vsel %vm503, %v2414, 0
    %v2576 = vsel %vm503, %v2415, 0
    %v2579 = vsel %vm503, %v2416, 0
    %v2582 = vsel %vm503, %v2417, 0
    %v2585 = vsel %vm503, %v2418, 0
    %v2588 = vsel %vm503, %v2419, 0
    %v2591 = vsel %vm503, %v2420, 0
    %v2594 = vsel %vm503, %v2421, 0
    %v2597 = vsel %vm503, %v2422, 0
    %v2600 = vsel %vm503, %v2423, 0
    %v2603 = vsel %vm503, %v2424, 0
    %v2606 = vsel %vm503, %v2425, 0
    %v2609 = vsel %vm503, %v2426, 0
    %v2612 = vsel %vm503, %v2427, 0
    %v2615 = vsel %vm503, %v2428, 0
    %v2618 = vsel %vm503, %v2429, 0
    %v2621 = vsel %vm503, %v2430, 0
    %v2624 = vsel %vm503, %v2431, 0
    %v2627 = vsel %vm503, %v2432, 0
    %v2630 = vsel %vm503, %v2433, 0
    %v2633 = vsel %vm503, %v2434, 0
    %v2636 = vsel %vm503, %v2435, 0
    %v2639 = vsel %vm503, %v2436, 0
    %v2642 = vsel %vm503, %v2437, 0
    %v2645 = vsel %vm503, %v2438, 0
    %v2648 = vsel %vm503, %v2439, 0
    %v2651 = vsel %vm503, %v2440, 0
    %v2654 = vsel %vm503, %v2441, 0
    %v2657 = vsel %vm503, %v2442, 0
    %v2660 = vsel %vm503, %v2443, 0
    %v2663 = vsel %vm503, %v2444, 0
    %v2666 = vsel %vm503, %v2445, 0
    %v2669 = vsel %vm503, %v2446, 0
    %v2672 = vsel %vm503, %v2447, 0
    %v2675 = vsel %vm503, %v2448, 0
    %v2678 = vsel %vm503, %v2449, 0
    %v2681 = vsel %vm503, %v2450, 0
    %v2684 = vsel %vm503, %v2451, 0
    %v2687 = vsel %vm503, %v2452, 0
    %v2690 = vsel %vm503, %v2453, 0
    %v2693 = vsel %vm503, %v2454, 0
    %v2696 = vsel %vm503, %v2455, 0
    %v2699 = vsel %vm503, %v2456, 0
    %v2702 = vsel %vm503, %v2457, 0
    %v2705 = vsel %vm503, %v2458, 0
    %v2708 = vsel %vm503, %v2459, 0
    %v2711 = vsel %vm503, %v2460, 0
    %v2714 = vsel %vm503, %v2461, 0
    %v2717 = vsel %vm503, %v2462, 0
    %v2720 = vsel %vm503, %v2463, 0
    %v2723 = vsel %vm503, %v2464, 0
    %v2726 = vsel %vm503, %v2465, 0
    %v2729 = vsel %vm503, %v2466, 0
    %v2732 = vsel %vm503, %v2467, 0
    %v2735 = vsel %vm503, %v2468, 0
    %v2738 = vsel %vm503, %v2469, 0
    %v2741 = vsel %vm503, %v2470, 0
    %v2744 = vsel %vm503, %v2471, 0
    %v2747 = vsel %vm503, %v2472, 0
    %v2750 = vsel %vm503, %v2473, 0
    %v2753 = vsel %vm503, %v2474, 0
    %v2756 = vsel %vm503, %v2475, 0
    %v2759 = vsel %vm503, %v2476, 0
    %v2762 = vsel %vm503, %v2477, 0
    %v2765 = vsel %vm503, %v2478, 0
    %v2768 = vsel %vm503, %v2479, 0
    %v2771 = vsel %vm503, %v2480, 0
    %v2774 = vsel %vm503, %v2481, 0
    %v2777 = vsel %vm503, %v2482, 0
    %v2780 = vsel %vm503, %v2483, 0
    %v2783 = vsel %vm503, %v2484, 0
    %v2786 = vsel %vm503, %v2485, 0
    %v2789 = vsel %vm503, %v2486, 0
    %v2792 = vsel %vm503, %v2487, 0
    %v2795 = vsel %vm503, %v2488, 0
    %v2798 = vsel %vm503, %v2489, 0
    %v2801 = vsel %vm503, %v2490, 0
    %v2804 = vsel %vm503, %v2491, 0
    %v2807 = vsel %vm503, %v2492, 0
    %v2810 = vsel %vm503, %v2493, 0
    %v2813 = vsel %vm503, %v2494, 0
    %v2816 = vsel %vm503, %v2495, 0
    %v2819 = vsel %vm503, %v2496, 0
    %v2822 = vsel %vm503, %v2497, 0
    %v2825 = vsel %vm503, %v2498, 0
    %v2828 = vsel %vm503, %v2499, 0
    %v2831 = vsel %vm503, %v2500, 0
    %v2834 = vsel %vm503, %v2501, 0
    %v2837 = vsel %vm503, %v2502, 0
    %v2840 = vsel %vm503, %v2503, 0
    %v2843 = vsel %vm503, %v2504, 0
    %v2846 = vsel %vm503, %v2505, 0
    %2848 = vmatpush.msra.mxu0 0.0
    %2849 = vmatpush.msra.mxu0 0.0
    %2850 = vmatpush.msra.mxu0 0.0
    %2851 = vmatpush.msra.mxu0 0.0
    %2852 = vmatpush.msra.mxu0 0.0
    %2853 = vmatpush.msra.mxu0 0.0
    %2854 = vmatpush.msra.mxu0 0.0
    %2855 = vmatpush.msra.mxu0 0.0
    %2856 = vmatpush.msra.mxu0 0.0
    %2857 = vmatpush.msra.mxu0 0.0
    %2858 = vmatpush.msra.mxu0 0.0
    %2859 = vmatpush.msra.mxu0 0.0
    %2860 = vmatpush.msra.mxu0 0.0
    %2861 = vmatpush.msra.mxu0 0.0
    %2862 = vmatpush.msra.mxu0 %v2507
    %2863 = vmatpush.msra.mxu0 %v2506
    %2864 = vmatmul.f32.gmra.mxu0 %v2513
    %v2865 = vpop.f32.mrf.mxu0
    %v2866 = vadd.f32 %v2510, %v2865
    %2867 = vmatmul.f32.gmra.mxu0 %v2516
    %v2868 = vpop.f32.mrf.mxu0
    %v2869 = vadd.f32 %v2510, %v2868
    %2870 = vmatmul.f32.gmra.mxu0 %v2519
    %v2871 = vpop.f32.mrf.mxu0
    %v2872 = vadd.f32 %v2510, %v2871
    %2873 = vmatmul.f32.gmra.mxu0 %v2522
    %v2874 = vpop.f32.mrf.mxu0
    %v2875 = vadd.f32 %v2510, %v2874
    %2876 = vmatmul.f32.gmra.mxu0 %v2525
    %v2877 = vpop.f32.mrf.mxu0
    %v2878 = vadd.f32 %v2510, %v2877
    %2879 = vmatmul.f32.gmra.mxu0 %v2528
    %v2880 = vpop.f32.mrf.mxu0
    %v2881 = vadd.f32 %v2510, %v2880
    %2882 = vmatmul.f32.gmra.mxu0 %v2531
    %v2883 = vpop.f32.mrf.mxu0
    %v2884 = vadd.f32 %v2510, %v2883
    %2885 = vmatmul.f32.gmra.mxu0 %v2534
    %v2886 = vpop.f32.mrf.mxu0
    %v2887 = vadd.f32 %v2510, %v2886
    %2888 = vmatmul.f32.gmra.mxu0 %v2537
    %v2889 = vpop.f32.mrf.mxu0
    %v2890 = vadd.f32 %v2510, %v2889
    %2891 = vmatmul.f32.gmra.mxu0 %v2540
    %v2892 = vpop.f32.mrf.mxu0
    %v2893 = vadd.f32 %v2510, %v2892
    %2894 = vmatmul.f32.gmra.mxu0 %v2543
    %v2895 = vpop.f32.mrf.mxu0
    %v2896 = vadd.f32 %v2510, %v2895
    %2897 = vmatmul.f32.gmra.mxu0 %v2546
    %v2898 = vpop.f32.mrf.mxu0
    %v2899 = vadd.f32 %v2510, %v2898
    %2900 = vmatmul.f32.gmra.mxu0 %v2549
    %v2901 = vpop.f32.mrf.mxu0
    %v2902 = vadd.f32 %v2510, %v2901
    %2903 = vmatmul.f32.gmra.mxu0 %v2552
    %v2904 = vpop.f32.mrf.mxu0
    %v2905 = vadd.f32 %v2510, %v2904
    %2906 = vmatmul.f32.gmra.mxu0 %v2555
    %v2907 = vpop.f32.mrf.mxu0
    %v2908 = vadd.f32 %v2510, %v2907
    %2909 = vmatmul.f32.gmra.mxu0 %v2558
    %v2910 = vpop.f32.mrf.mxu0
    %v2911 = vadd.f32 %v2510, %v2910
    %2912 = vmatmul.f32.gmra.mxu0 %v2561
    %v2913 = vpop.f32.mrf.mxu0
    %v2914 = vadd.f32 %v2510, %v2913
    %2915 = vmatmul.f32.gmra.mxu0 %v2564
    %v2916 = vpop.f32.mrf.mxu0
    %v2917 = vadd.f32 %v2510, %v2916
    %2918 = vmatmul.f32.gmra.mxu0 %v2567
    %v2919 = vpop.f32.mrf.mxu0
    %v2920 = vadd.f32 %v2510, %v2919
    %2921 = vmatmul.f32.gmra.mxu0 %v2570
    %v2922 = vpop.f32.mrf.mxu0
    %v2923 = vadd.f32 %v2510, %v2922
    %2924 = vmatmul.f32.gmra.mxu0 %v2573
    %v2925 = vpop.f32.mrf.mxu0
    %v2926 = vadd.f32 %v2510, %v2925
    %2927 = vmatmul.f32.gmra.mxu0 %v2576
    %v2928 = vpop.f32.mrf.mxu0
    %v2929 = vadd.f32 %v2510, %v2928
    %2930 = vmatmul.f32.gmra.mxu0 %v2579
    %v2931 = vpop.f32.mrf.mxu0
    %v2932 = vadd.f32 %v2510, %v2931
    %2933 = vmatmul.f32.gmra.mxu0 %v2582
    %v2934 = vpop.f32.mrf.mxu0
    %v2935 = vadd.f32 %v2510, %v2934
    %2936 = vmatmul.f32.gmra.mxu0 %v2585
    %v2937 = vpop.f32.mrf.mxu0
    %v2938 = vadd.f32 %v2510, %v2937
    %2939 = vmatmul.f32.gmra.mxu0 %v2588
    %v2940 = vpop.f32.mrf.mxu0
    %v2941 = vadd.f32 %v2510, %v2940
    %2942 = vmatmul.f32.gmra.mxu0 %v2591
    %v2943 = vpop.f32.mrf.mxu0
    %v2944 = vadd.f32 %v2510, %v2943
    %2945 = vmatmul.f32.gmra.mxu0 %v2594
    %v2946 = vpop.f32.mrf.mxu0
    %v2947 = vadd.f32 %v2510, %v2946
    %2948 = vmatmul.f32.gmra.mxu0 %v2597
    %v2949 = vpop.f32.mrf.mxu0
    %v2950 = vadd.f32 %v2510, %v2949
    %2951 = vmatmul.f32.gmra.mxu0 %v2600
    %v2952 = vpop.f32.mrf.mxu0
    %v2953 = vadd.f32 %v2510, %v2952
    %2954 = vmatmul.f32.gmra.mxu0 %v2603
    %v2955 = vpop.f32.mrf.mxu0
    %v2956 = vadd.f32 %v2510, %v2955
    %2957 = vmatmul.f32.gmra.mxu0 %v2606
    %v2958 = vpop.f32.mrf.mxu0
    %v2959 = vadd.f32 %v2510, %v2958
    %2960 = vmatmul.f32.gmra.mxu0 %v2609
    %v2961 = vpop.f32.mrf.mxu0
    %v2962 = vadd.f32 %v2510, %v2961
    %2963 = vmatmul.f32.gmra.mxu0 %v2612
    %v2964 = vpop.f32.mrf.mxu0
    %v2965 = vadd.f32 %v2510, %v2964
    %2966 = vmatmul.f32.gmra.mxu0 %v2615
    %v2967 = vpop.f32.mrf.mxu0
    %v2968 = vadd.f32 %v2510, %v2967
    %2969 = vmatmul.f32.gmra.mxu0 %v2618
    %v2970 = vpop.f32.mrf.mxu0
    %v2971 = vadd.f32 %v2510, %v2970
    %2972 = vmatmul.f32.gmra.mxu0 %v2621
    %v2973 = vpop.f32.mrf.mxu0
    %v2974 = vadd.f32 %v2510, %v2973
    %2975 = vmatmul.f32.gmra.mxu0 %v2624
    %v2976 = vpop.f32.mrf.mxu0
    %v2977 = vadd.f32 %v2510, %v2976
    %2978 = vmatmul.f32.gmra.mxu0 %v2627
    %v2979 = vpop.f32.mrf.mxu0
    %v2980 = vadd.f32 %v2510, %v2979
    %2981 = vmatmul.f32.gmra.mxu0 %v2630
    %v2982 = vpop.f32.mrf.mxu0
    %v2983 = vadd.f32 %v2510, %v2982
    %2984 = vmatmul.f32.gmra.mxu0 %v2633
    %v2985 = vpop.f32.mrf.mxu0
    %v2986 = vadd.f32 %v2510, %v2985
    %2987 = vmatmul.f32.gmra.mxu0 %v2636
    %v2988 = vpop.f32.mrf.mxu0
    %v2989 = vadd.f32 %v2510, %v2988
    %2990 = vmatmul.f32.gmra.mxu0 %v2639
    %v2991 = vpop.f32.mrf.mxu0
    %v2992 = vadd.f32 %v2510, %v2991
    %2993 = vmatmul.f32.gmra.mxu0 %v2642
    %v2994 = vpop.f32.mrf.mxu0
    %v2995 = vadd.f32 %v2510, %v2994
    %2996 = vmatmul.f32.gmra.mxu0 %v2645
    %v2997 = vpop.f32.mrf.mxu0
    %v2998 = vadd.f32 %v2510, %v2997
    %2999 = vmatmul.f32.gmra.mxu0 %v2648
    %v3000 = vpop.f32.mrf.mxu0
    %v3001 = vadd.f32 %v2510, %v3000
    %3002 = vmatmul.f32.gmra.mxu0 %v2651
    %v3003 = vpop.f32.mrf.mxu0
    %v3004 = vadd.f32 %v2510, %v3003
    %3005 = vmatmul.f32.gmra.mxu0 %v2654
    %v3006 = vpop.f32.mrf.mxu0
    %v3007 = vadd.f32 %v2510, %v3006
    %3008 = vmatmul.f32.gmra.mxu0 %v2657
    %v3009 = vpop.f32.mrf.mxu0
    %v3010 = vadd.f32 %v2510, %v3009
    %3011 = vmatmul.f32.gmra.mxu0 %v2660
    %v3012 = vpop.f32.mrf.mxu0
    %v3013 = vadd.f32 %v2510, %v3012
    %3014 = vmatmul.f32.gmra.mxu0 %v2663
    %v3015 = vpop.f32.mrf.mxu0
    %v3016 = vadd.f32 %v2510, %v3015
    %3017 = vmatmul.f32.gmra.mxu0 %v2666
    %v3018 = vpop.f32.mrf.mxu0
    %v3019 = vadd.f32 %v2510, %v3018
    %3020 = vmatmul.f32.gmra.mxu0 %v2669
    %v3021 = vpop.f32.mrf.mxu0
    %v3022 = vadd.f32 %v2510, %v3021
    %3023 = vmatmul.f32.gmra.mxu0 %v2672
    %v3024 = vpop.f32.mrf.mxu0
    %v3025 = vadd.f32 %v2510, %v3024
    %3026 = vmatmul.f32.gmra.mxu0 %v2675
    %v3027 = vpop.f32.mrf.mxu0
    %v3028 = vadd.f32 %v2510, %v3027
    %3029 = vmatmul.f32.gmra.mxu0 %v2678
    %v3030 = vpop.f32.mrf.mxu0
    %v3031 = vadd.f32 %v2510, %v3030
    %3032 = vmatmul.f32.gmra.mxu0 %v2681
    %v3033 = vpop.f32.mrf.mxu0
    %v3034 = vadd.f32 %v2510, %v3033
    %3035 = vmatmul.f32.gmra.mxu0 %v2684
    %v3036 = vpop.f32.mrf.mxu0
    %v3037 = vadd.f32 %v2510, %v3036
    %3038 = vmatmul.f32.gmra.mxu0 %v2687
    %v3039 = vpop.f32.mrf.mxu0
    %v3040 = vadd.f32 %v2510, %v3039
    %3041 = vmatmul.f32.gmra.mxu0 %v2690
    %v3042 = vpop.f32.mrf.mxu0
    %v3043 = vadd.f32 %v2510, %v3042
    %3044 = vmatmul.f32.gmra.mxu0 %v2693
    %v3045 = vpop.f32.mrf.mxu0
    %v3046 = vadd.f32 %v2510, %v3045
    %3047 = vmatmul.f32.gmra.mxu0 %v2696
    %v3048 = vpop.f32.mrf.mxu0
    %v3049 = vadd.f32 %v2510, %v3048
    %3050 = vmatmul.f32.gmra.mxu0 %v2699
    %v3051 = vpop.f32.mrf.mxu0
    %v3052 = vadd.f32 %v2510, %v3051
    %3053 = vmatmul.f32.gmra.mxu0 %v2702
    %v3054 = vpop.f32.mrf.mxu0
    %v3055 = vadd.f32 %v2510, %v3054
    %3056 = vmatmul.f32.gmra.mxu0 %v2705
    %v3057 = vpop.f32.mrf.mxu0
    %v3058 = vadd.f32 %v2510, %v3057
    %3059 = vmatmul.f32.gmra.mxu0 %v2708
    %v3060 = vpop.f32.mrf.mxu0
    %v3061 = vadd.f32 %v2510, %v3060
    %3062 = vmatmul.f32.gmra.mxu0 %v2711
    %v3063 = vpop.f32.mrf.mxu0
    %v3064 = vadd.f32 %v2510, %v3063
    %3065 = vmatmul.f32.gmra.mxu0 %v2714
    %v3066 = vpop.f32.mrf.mxu0
    %v3067 = vadd.f32 %v2510, %v3066
    %3068 = vmatmul.f32.gmra.mxu0 %v2717
    %v3069 = vpop.f32.mrf.mxu0
    %v3070 = vadd.f32 %v2510, %v3069
    %3071 = vmatmul.f32.gmra.mxu0 %v2720
    %v3072 = vpop.f32.mrf.mxu0
    %v3073 = vadd.f32 %v2510, %v3072
    %3074 = vmatmul.f32.gmra.mxu0 %v2723
    %v3075 = vpop.f32.mrf.mxu0
    %v3076 = vadd.f32 %v2510, %v3075
    %3077 = vmatmul.f32.gmra.mxu0 %v2726
    %v3078 = vpop.f32.mrf.mxu0
    %v3079 = vadd.f32 %v2510, %v3078
    %3080 = vmatmul.f32.gmra.mxu0 %v2729
    %v3081 = vpop.f32.mrf.mxu0
    %v3082 = vadd.f32 %v2510, %v3081
    %3083 = vmatmul.f32.gmra.mxu0 %v2732
    %v3084 = vpop.f32.mrf.mxu0
    %v3085 = vadd.f32 %v2510, %v3084
    %3086 = vmatmul.f32.gmra.mxu0 %v2735
    %v3087 = vpop.f32.mrf.mxu0
    %v3088 = vadd.f32 %v2510, %v3087
    %3089 = vmatmul.f32.gmra.mxu0 %v2738
    %v3090 = vpop.f32.mrf.mxu0
    %v3091 = vadd.f32 %v2510, %v3090
    %3092 = vmatmul.f32.gmra.mxu0 %v2741
    %v3093 = vpop.f32.mrf.mxu0
    %v3094 = vadd.f32 %v2510, %v3093
    %3095 = vmatmul.f32.gmra.mxu0 %v2744
    %v3096 = vpop.f32.mrf.mxu0
    %v3097 = vadd.f32 %v2510, %v3096
    %3098 = vmatmul.f32.gmra.mxu0 %v2747
    %v3099 = vpop.f32.mrf.mxu0
    %v3100 = vadd.f32 %v2510, %v3099
    %3101 = vmatmul.f32.gmra.mxu0 %v2750
    %v3102 = vpop.f32.mrf.mxu0
    %v3103 = vadd.f32 %v2510, %v3102
    %3104 = vmatmul.f32.gmra.mxu0 %v2753
    %v3105 = vpop.f32.mrf.mxu0
    %v3106 = vadd.f32 %v2510, %v3105
    %3107 = vmatmul.f32.gmra.mxu0 %v2756
    %v3108 = vpop.f32.mrf.mxu0
    %v3109 = vadd.f32 %v2510, %v3108
    %3110 = vmatmul.f32.gmra.mxu0 %v2759
    %v3111 = vpop.f32.mrf.mxu0
    %v3112 = vadd.f32 %v2510, %v3111
    %3113 = vmatmul.f32.gmra.mxu0 %v2762
    %v3114 = vpop.f32.mrf.mxu0
    %v3115 = vadd.f32 %v2510, %v3114
    %3116 = vmatmul.f32.gmra.mxu0 %v2765
    %v3117 = vpop.f32.mrf.mxu0
    %v3118 = vadd.f32 %v2510, %v3117
    %3119 = vmatmul.f32.gmra.mxu0 %v2768
    %v3120 = vpop.f32.mrf.mxu0
    %v3121 = vadd.f32 %v2510, %v3120
    %3122 = vmatmul.f32.gmra.mxu0 %v2771
    %v3123 = vpop.f32.mrf.mxu0
    %v3124 = vadd.f32 %v2510, %v3123
    %3125 = vmatmul.f32.gmra.mxu0 %v2774
    %v3126 = vpop.f32.mrf.mxu0
    %v3127 = vadd.f32 %v2510, %v3126
    %3128 = vmatmul.f32.gmra.mxu0 %v2777
    %v3129 = vpop.f32.mrf.mxu0
    %v3130 = vadd.f32 %v2510, %v3129
    %3131 = vmatmul.f32.gmra.mxu0 %v2780
    %v3132 = vpop.f32.mrf.mxu0
    %v3133 = vadd.f32 %v2510, %v3132
    %3134 = vmatmul.f32.gmra.mxu0 %v2783
    %v3135 = vpop.f32.mrf.mxu0
    %v3136 = vadd.f32 %v2510, %v3135
    %3137 = vmatmul.f32.gmra.mxu0 %v2786
    %v3138 = vpop.f32.mrf.mxu0
    %v3139 = vadd.f32 %v2510, %v3138
    %3140 = vmatmul.f32.gmra.mxu0 %v2789
    %v3141 = vpop.f32.mrf.mxu0
    %v3142 = vadd.f32 %v2510, %v3141
    %3143 = vmatmul.f32.gmra.mxu0 %v2792
    %v3144 = vpop.f32.mrf.mxu0
    %v3145 = vadd.f32 %v2510, %v3144
    %3146 = vmatmul.f32.gmra.mxu0 %v2795
    %v3147 = vpop.f32.mrf.mxu0
    %v3148 = vadd.f32 %v2510, %v3147
    %3149 = vmatmul.f32.gmra.mxu0 %v2798
    %v3150 = vpop.f32.mrf.mxu0
    %v3151 = vadd.f32 %v2510, %v3150
    %3152 = vmatmul.f32.gmra.mxu0 %v2801
    %v3153 = vpop.f32.mrf.mxu0
    %v3154 = vadd.f32 %v2510, %v3153
    %3155 = vmatmul.f32.gmra.mxu0 %v2804
    %v3156 = vpop.f32.mrf.mxu0
    %v3157 = vadd.f32 %v2510, %v3156
    %3158 = vmatmul.f32.gmra.mxu0 %v2807
    %v3159 = vpop.f32.mrf.mxu0
    %v3160 = vadd.f32 %v2510, %v3159
    %3161 = vmatmul.f32.gmra.mxu0 %v2810
    %v3162 = vpop.f32.mrf.mxu0
    %v3163 = vadd.f32 %v2510, %v3162
    %3164 = vmatmul.f32.gmra.mxu0 %v2813
    %v3165 = vpop.f32.mrf.mxu0
    %v3166 = vadd.f32 %v2510, %v3165
    %3167 = vmatmul.f32.gmra.mxu0 %v2816
    %v3168 = vpop.f32.mrf.mxu0
    %v3169 = vadd.f32 %v2510, %v3168
    %3170 = vmatmul.f32.gmra.mxu0 %v2819
    %v3171 = vpop.f32.mrf.mxu0
    %v3172 = vadd.f32 %v2510, %v3171
    %3173 = vmatmul.f32.gmra.mxu0 %v2822
    %v3174 = vpop.f32.mrf.mxu0
    %v3175 = vadd.f32 %v2510, %v3174
    %3176 = vmatmul.f32.gmra.mxu0 %v2825
    %v3177 = vpop.f32.mrf.mxu0
    %v3178 = vadd.f32 %v2510, %v3177
    %3179 = vmatmul.f32.gmra.mxu0 %v2828
    %v3180 = vpop.f32.mrf.mxu0
    %v3181 = vadd.f32 %v2510, %v3180
    %3182 = vmatmul.f32.gmra.mxu0 %v2831
    %v3183 = vpop.f32.mrf.mxu0
    %v3184 = vadd.f32 %v2510, %v3183
    %3185 = vmatmul.f32.gmra.mxu0 %v2834
    %v3186 = vpop.f32.mrf.mxu0
    %v3187 = vadd.f32 %v2510, %v3186
    %3188 = vmatmul.f32.gmra.mxu0 %v2837
    %v3189 = vpop.f32.mrf.mxu0
    %v3190 = vadd.f32 %v2510, %v3189
    %3191 = vmatmul.f32.gmra.mxu0 %v2840
    %v3192 = vpop.f32.mrf.mxu0
    %v3193 = vadd.f32 %v2510, %v3192
    %3194 = vmatmul.f32.gmra.mxu0 %v2843
    %v3195 = vpop.f32.mrf.mxu0
    %v3196 = vadd.f32 %v2510, %v3195
    %3197 = vmatmul.f32.gmra.mxu0 %v2846
    %v3198 = vpop.f32.mrf.mxu0
    %v3199 = vadd.f32 %v2510, %v3198
    %3200 = vdwg.mxu0
    %vm3201 = vcmask 97280
    %3202 = vst.msk [vmem:[%s18] sm:$0xff] %vm3201, %v2866
    %3203 = vst.msk [vmem:[%s18 + $0x8] sm:$0xff] %vm3201, %v2869
    %3204 = vst.msk [vmem:[%s18 + $0x10] sm:$0xff] %vm3201, %v2872
    %3205 = vst.msk [vmem:[%s18 + $0x18] sm:$0xff] %vm3201, %v2875
    %3206 = vst.msk [vmem:[%s18 + $0x20] sm:$0xff] %vm3201, %v2878
    %3207 = vst.msk [vmem:[%s18 + $0x28] sm:$0xff] %vm3201, %v2881
    %3208 = vst.msk [vmem:[%s18 + $0x30] sm:$0xff] %vm3201, %v2884
    %3209 = vst.msk [vmem:[%s18 + $0x38] sm:$0xff] %vm3201, %v2887
    %3210 = vst.msk [vmem:[%s18 + $0x40] sm:$0xff] %vm3201, %v2890
    %3211 = vst.msk [vmem:[%s18 + $0x48] sm:$0xff] %vm3201, %v2893
    %3212 = vst.msk [vmem:[%s18 + $0x50] sm:$0xff] %vm3201, %v2896
    %3213 = vst.msk [vmem:[%s18 + $0x58] sm:$0xff] %vm3201, %v2899
    %3214 = vst.msk [vmem:[%s18 + $0x60] sm:$0xff] %vm3201, %v2902
    %3215 = vst.msk [vmem:[%s18 + $0x68] sm:$0xff] %vm3201, %v2905
    %3216 = vst.msk [vmem:[%s18 + $0x70] sm:$0xff] %vm3201, %v2908
    %3217 = vst.msk [vmem:[%s18 + $0x78] sm:$0xff] %vm3201, %v2911
    %3218 = vst.msk [vmem:[%s18 + $0x80] sm:$0xff] %vm3201, %v2914
    %3219 = vst.msk [vmem:[%s18 + $0x88] sm:$0xff] %vm3201, %v2917
    %3220 = vst.msk [vmem:[%s18 + $0x90] sm:$0xff] %vm3201, %v2920
    %3221 = vst.msk [vmem:[%s18 + $0x98] sm:$0xff] %vm3201, %v2923
    %3222 = vst.msk [vmem:[%s18 + $0xa0] sm:$0xff] %vm3201, %v2926
    %3223 = vst.msk [vmem:[%s18 + $0xa8] sm:$0xff] %vm3201, %v2929
    %3224 = vst.msk [vmem:[%s18 + $0xb0] sm:$0xff] %vm3201, %v2932
    %3225 = vst.msk [vmem:[%s18 + $0xb8] sm:$0xff] %vm3201, %v2935
    %3226 = vst.msk [vmem:[%s18 + $0xc0] sm:$0xff] %vm3201, %v2938
    %3227 = vst.msk [vmem:[%s18 + $0xc8] sm:$0xff] %vm3201, %v2941
    %3228 = vst.msk [vmem:[%s18 + $0xd0] sm:$0xff] %vm3201, %v2944
    %3229 = vst.msk [vmem:[%s18 + $0xd8] sm:$0xff] %vm3201, %v2947
    %3230 = vst.msk [vmem:[%s18 + $0xe0] sm:$0xff] %vm3201, %v2950
    %3231 = vst.msk [vmem:[%s18 + $0xe8] sm:$0xff] %vm3201, %v2953
    %3232 = vst.msk [vmem:[%s18 + $0xf0] sm:$0xff] %vm3201, %v2956
    %3233 = vst.msk [vmem:[%s18 + $0xf8] sm:$0xff] %vm3201, %v2959
    %3234 = vst.msk [vmem:[%s18 + $0x100] sm:$0xff] %vm3201, %v2962
    %3235 = vst.msk [vmem:[%s18 + $0x108] sm:$0xff] %vm3201, %v2965
    %3236 = vst.msk [vmem:[%s18 + $0x110] sm:$0xff] %vm3201, %v2968
    %3237 = vst.msk [vmem:[%s18 + $0x118] sm:$0xff] %vm3201, %v2971
    %3238 = vst.msk [vmem:[%s18 + $0x120] sm:$0xff] %vm3201, %v2974
    %3239 = vst.msk [vmem:[%s18 + $0x128] sm:$0xff] %vm3201, %v2977
    %3240 = vst.msk [vmem:[%s18 + $0x130] sm:$0xff] %vm3201, %v2980
    %3241 = vst.msk [vmem:[%s18 + $0x138] sm:$0xff] %vm3201, %v2983
    %3242 = vst.msk [vmem:[%s18 + $0x140] sm:$0xff] %vm3201, %v2986
    %3243 = vst.msk [vmem:[%s18 + $0x148] sm:$0xff] %vm3201, %v2989
    %3244 = vst.msk [vmem:[%s18 + $0x150] sm:$0xff] %vm3201, %v2992
    %3245 = vst.msk [vmem:[%s18 + $0x158] sm:$0xff] %vm3201, %v2995
    %3246 = vst.msk [vmem:[%s18 + $0x160] sm:$0xff] %vm3201, %v2998
    %3247 = vst.msk [vmem:[%s18 + $0x168] sm:$0xff] %vm3201, %v3001
    %3248 = vst.msk [vmem:[%s18 + $0x170] sm:$0xff] %vm3201, %v3004
    %3249 = vst.msk [vmem:[%s18 + $0x178] sm:$0xff] %vm3201, %v3007
    %3250 = vst.msk [vmem:[%s18 + $0x180] sm:$0xff] %vm3201, %v3010
    %3251 = vst.msk [vmem:[%s18 + $0x188] sm:$0xff] %vm3201, %v3013
    %3252 = vst.msk [vmem:[%s18 + $0x190] sm:$0xff] %vm3201, %v3016
    %3253 = vst.msk [vmem:[%s18 + $0x198] sm:$0xff] %vm3201, %v3019
    %3254 = vst.msk [vmem:[%s18 + $0x1a0] sm:$0xff] %vm3201, %v3022
    %3255 = vst.msk [vmem:[%s18 + $0x1a8] sm:$0xff] %vm3201, %v3025
    %3256 = vst.msk [vmem:[%s18 + $0x1b0] sm:$0xff] %vm3201, %v3028
    %3257 = vst.msk [vmem:[%s18 + $0x1b8] sm:$0xff] %vm3201, %v3031
    %3258 = vst.msk [vmem:[%s18 + $0x1c0] sm:$0xff] %vm3201, %v3034
    %3259 = vst.msk [vmem:[%s18 + $0x1c8] sm:$0xff] %vm3201, %v3037
    %3260 = vst.msk [vmem:[%s18 + $0x1d0] sm:$0xff] %vm3201, %v3040
    %3261 = vst.msk [vmem:[%s18 + $0x1d8] sm:$0xff] %vm3201, %v3043
    %3262 = vst.msk [vmem:[%s18 + $0x1e0] sm:$0xff] %vm3201, %v3046
    %3263 = vst.msk [vmem:[%s18 + $0x1e8] sm:$0xff] %vm3201, %v3049
    %3264 = vst.msk [vmem:[%s18 + $0x1f0] sm:$0xff] %vm3201, %v3052
    %3265 = vst.msk [vmem:[%s18 + $0x1f8] sm:$0xff] %vm3201, %v3055
    %3266 = vst.msk [vmem:[%s18 + $0x200] sm:$0xff] %vm3201, %v3058
    %3267 = vst.msk [vmem:[%s18 + $0x208] sm:$0xff] %vm3201, %v3061
    %3268 = vst.msk [vmem:[%s18 + $0x210] sm:$0xff] %vm3201, %v3064
    %3269 = vst.msk [vmem:[%s18 + $0x218] sm:$0xff] %vm3201, %v3067
    %3270 = vst.msk [vmem:[%s18 + $0x220] sm:$0xff] %vm3201, %v3070
    %3271 = vst.msk [vmem:[%s18 + $0x228] sm:$0xff] %vm3201, %v3073
    %3272 = vst.msk [vmem:[%s18 + $0x230] sm:$0xff] %vm3201, %v3076
    %3273 = vst.msk [vmem:[%s18 + $0x238] sm:$0xff] %vm3201, %v3079
    %3274 = vst.msk [vmem:[%s18 + $0x240] sm:$0xff] %vm3201, %v3082
    %3275 = vst.msk [vmem:[%s18 + $0x248] sm:$0xff] %vm3201, %v3085
    %3276 = vst.msk [vmem:[%s18 + $0x250] sm:$0xff] %vm3201, %v3088
    %3277 = vst.msk [vmem:[%s18 + $0x258] sm:$0xff] %vm3201, %v3091
    %3278 = vst.msk [vmem:[%s18 + $0x260] sm:$0xff] %vm3201, %v3094
    %3279 = vst.msk [vmem:[%s18 + $0x268] sm:$0xff] %vm3201, %v3097
    %3280 = vst.msk [vmem:[%s18 + $0x270] sm:$0xff] %vm3201, %v3100
    %3281 = vst.msk [vmem:[%s18 + $0x278] sm:$0xff] %vm3201, %v3103
    %3282 = vst.msk [vmem:[%s18 + $0x280] sm:$0xff] %vm3201, %v3106
    %3283 = vst.msk [vmem:[%s18 + $0x288] sm:$0xff] %vm3201, %v3109
    %3284 = vst.msk [vmem:[%s18 + $0x290] sm:$0xff] %vm3201, %v3112
    %3285 = vst.msk [vmem:[%s18 + $0x298] sm:$0xff] %vm3201, %v3115
    %3286 = vst.msk [vmem:[%s18 + $0x2a0] sm:$0xff] %vm3201, %v3118
    %3287 = vst.msk [vmem:[%s18 + $0x2a8] sm:$0xff] %vm3201, %v3121
    %3288 = vst.msk [vmem:[%s18 + $0x2b0] sm:$0xff] %vm3201, %v3124
    %3289 = vst.msk [vmem:[%s18 + $0x2b8] sm:$0xff] %vm3201, %v3127
    %3290 = vst.msk [vmem:[%s18 + $0x2c0] sm:$0xff] %vm3201, %v3130
    %3291 = vst.msk [vmem:[%s18 + $0x2c8] sm:$0xff] %vm3201, %v3133
    %3292 = vst.msk [vmem:[%s18 + $0x2d0] sm:$0xff] %vm3201, %v3136
    %3293 = vst.msk [vmem:[%s18 + $0x2d8] sm:$0xff] %vm3201, %v3139
    %3294 = vst.msk [vmem:[%s18 + $0x2e0] sm:$0xff] %vm3201, %v3142
    %3295 = vst.msk [vmem:[%s18 + $0x2e8] sm:$0xff] %vm3201, %v3145
    %3296 = vst.msk [vmem:[%s18 + $0x2f0] sm:$0xff] %vm3201, %v3148
    %3297 = vst.msk [vmem:[%s18 + $0x2f8] sm:$0xff] %vm3201, %v3151
    %3298 = vst.msk [vmem:[%s18 + $0x300] sm:$0xff] %vm3201, %v3154
    %3299 = vst.msk [vmem:[%s18 + $0x308] sm:$0xff] %vm3201, %v3157
    %3300 = vst.msk [vmem:[%s18 + $0x310] sm:$0xff] %vm3201, %v3160
    %3301 = vst.msk [vmem:[%s18 + $0x318] sm:$0xff] %vm3201, %v3163
    %3302 = vst.msk [vmem:[%s18 + $0x320] sm:$0xff] %vm3201, %v3166
    %3303 = vst.msk [vmem:[%s18 + $0x328] sm:$0xff] %vm3201, %v3169
    %3304 = vst.msk [vmem:[%s18 + $0x330] sm:$0xff] %vm3201, %v3172
    %3305 = vst.msk [vmem:[%s18 + $0x338] sm:$0xff] %vm3201, %v3175
    %3306 = vst.msk [vmem:[%s18 + $0x340] sm:$0xff] %vm3201, %v3178
    %3307 = vst.msk [vmem:[%s18 + $0x348] sm:$0xff] %vm3201, %v3181
    %3308 = vst.msk [vmem:[%s18 + $0x350] sm:$0xff] %vm3201, %v3184
    %3309 = vst.msk [vmem:[%s18 + $0x358] sm:$0xff] %vm3201, %v3187
    %3310 = vst.msk [vmem:[%s18 + $0x360] sm:$0xff] %vm3201, %v3190
    %3311 = vst.msk [vmem:[%s18 + $0x368] sm:$0xff] %vm3201, %v3193
    %3312 = vst.msk [vmem:[%s18 + $0x370] sm:$0xff] %vm3201, %v3196
    %3313 = vst.msk [vmem:[%s18 + $0x378] sm:$0xff] %vm3201, %v3199
    // Predicated region
    $region130: #{_lambda_.1} parent=1 // pred_check
      _
    $region131: #{_lambda_.1} parent=1 // pred_check_branch
      %3315 = sbr.rel (0) target = $region133
    $region132: #{_lambda_.1} parent=1 // pred_region
      _
    $region133: #{_lambda_.1} parent=1 // pred_fallthru
      _
    // Predicated region
    $region134: #{_lambda_.1} parent=1 // pred_check
      _
    $region135: #{_lambda_.1} parent=1 // pred_check_branch
      %3317 = sbr.rel (0) target = $region137
    $region136: #{_lambda_.1} parent=1 // pred_region
      _
    $region137: #{_lambda_.1} parent=1 // pred_fallthru
      _
    %3318 = vsyncpa [#allocation8], 1
    %3319 = vsyncpa [#allocation10], 1
    %3320 = vsyncpa [#allocation13], 1
    %3321 = vsyncpa [#allocation16], 1
    %3322 = vsyncpa [#allocation19], 1
    %3323 = vsyncpa [#allocation22], 1
    %3324 = vsyncpa [#allocation25], 1
    %3325 = vsyncpa [#allocation28], 1

</llo_original>
